<compile_context>
chip_gen: v5e
topology: v5e:2x2
jax: 0.10.0
libtpu: 0.0.40
codegen_flags: <defaults>
</compile_context>

<pallas_src>
import jax
import jax.numpy as jnp
from jax.experimental import pallas as pl
from jax.experimental.pallas import tpu as pltpu


def _layernorm(h, gamma, beta, eps=1e-5):
    # Fused statistics: var = E[h^2] - mu^2 (single elementwise pass over h).
    mu = jnp.mean(h, axis=-1, keepdims=True)
    ms = jnp.mean(h * h, axis=-1, keepdims=True)
    var = jnp.maximum(ms - mu * mu, 0.0)
    return (h - mu) * jax.lax.rsqrt(var + eps) * gamma + beta


def _moe_router_kernel(x_ref, g_ref,
                       w1_ref, ln1_ref,
                       w2_ref, ln2_ref,
                       w3_ref, b3_ref,
                       out_ref):
    x = x_ref[...]
    ln1 = ln1_ref[...]   # (3, H):  rows = [bias1, gamma1, beta1]
    ln2 = ln2_ref[...]   # (3, H2): rows = [bias2, gamma2, beta2]

    # --- Linear 1 (bf16 MXU inputs, f32 accumulate) + LayerNorm + ReLU ---
    h = jnp.dot(x.astype(jnp.bfloat16), w1_ref[...],
                preferred_element_type=jnp.float32) + ln1[0:1]
    h = jnp.maximum(_layernorm(h, ln1[1:2], ln1[2:3]), 0.0)
    # TODO(synk): Dropout is identity here (inference semantics); training-mode
    # stochastic dropout would need pltpu.prng_seed / prng_random_bits.

    # --- Linear 2 + LayerNorm + ReLU ---
    h2 = jnp.dot(h.astype(jnp.bfloat16), w2_ref[...],
                 preferred_element_type=jnp.float32) + ln2[0:1]
    h2 = jnp.maximum(_layernorm(h2, ln2[1:2], ln2[2:3]), 0.0)

    # --- Linear 3 -> expert logits at real width E (no padding needed) ---
    logits = jnp.dot(h2.astype(jnp.bfloat16), w3_ref[...],
                     preferred_element_type=jnp.float32) + b3_ref[...]

    # --- Hard gumbel routing ---
    # one_hot(argmax(softmax((logits+g)/tau))) == one_hot(argmax(logits+g)),
    # so softmax and the 1/tau scale are dropped entirely (argmax-invariant).
    y = logits + g_ref[...]                      # (tm, E), unpadded gumbel
    tm, e = y.shape
    e_pad = out_ref.shape[-1]

    lane_e = jax.lax.broadcasted_iota(jnp.int32, (tm, e), 1)
    m = jnp.max(y, axis=-1, keepdims=True)
    # First-max tie-break (matches jnp/torch argmax ordering).
    idx = jnp.min(jnp.where(y == m, lane_e, e), axis=-1, keepdims=True)

    # Lane-dense (tm, E_pad) bf16 one-hot; 0.0/1.0 are exact in bf16.
    lane = jax.lax.broadcasted_iota(jnp.int32, (tm, e_pad), 1)
    onehot = (lane == idx).astype(jnp.bfloat16)
    # Stash the winning index (exact in bf16 for idx < 256) in padded lane
    # E_pad-1 so the wrapper reads it directly instead of re-running argmax.
    out_ref[...] = jnp.where(lane == e_pad - 1, idx.astype(jnp.bfloat16), onehot)


def _is_v7x():
    try:
        dk = jax.devices()[0].device_kind.lower()
        return ("v7" in dk) or ("7x" in dk)
    except Exception:  # pragma: no cover
        return False


def _choose_tm(B, *, even_grid=False, cap=2048):
    """Largest legal row tile.

    tm must divide B and (for the bf16 (16,128) output tile) be a multiple of
    16 unless it equals B.  Cap at 2048 rows: per-tile VMEM footprint stays
    small, so per-step overhead / DMA size dominate and bigger tiles win.
    On v7x (`even_grid`) prefer an even grid count so both TensorCores get
    balanced work under CORE_PARALLEL.
    """
    if B <= cap:
        tm = B
    else:
        assert B % 16 == 0, "B must be a multiple of 16 when B > tile cap"
        tm = cap
        while B % tm or tm % 16:
            tm -= 16
    if even_grid and (B // tm) % 2 == 1 and tm % 32 == 0:
        tm //= 2
    return tm


def prepare_router_params(params, num_experts):
    """One-time weight prep (bf16 casts, LN-param packing) hoisted out of the
    per-call hot path."""
    w1, b1, g1, be1, w2, b2, g2, be2, w3, b3 = params
    D_in, H = w1.shape
    H2 = w2.shape[1]
    E = num_experts
    # Output lane-padding; always keep >= 1 padded lane to stash the index.
    E_pad = ((E + 1 + 127) // 128) * 128
    bf16 = jnp.bfloat16
    prep = dict(
        w1=w1.astype(bf16),
        ln1=jnp.stack([b1, g1, be1]).astype(jnp.float32),    # (3, H)
        w2=w2.astype(bf16),
        ln2=jnp.stack([b2, g2, be2]).astype(jnp.float32),    # (3, H2)
        w3=w3.astype(bf16),                                  # (H2, E) unpadded
        b3=b3.reshape(1, E).astype(jnp.float32),             # (1, E)
        D_in=D_in, H=H, H2=H2, E=E, E_pad=E_pad,
    )
    # Materialize once so the casts/stacks never re-run per forward call.
    for k in ("w1", "ln1", "w2", "ln2", "w3", "b3"):
        prep[k] = jax.block_until_ready(prep[k])
    return prep


def moe_router_forward(x, gumbel_noise, prep, *, tau=0.07, tm=None):
    """x: [B, D_in] f32, gumbel_noise: [B, E] f32 (pre-sampled Gumbel(0,1)),
    prep: output of prepare_router_params."""
    del tau  # hard-routing forward output is invariant to tau (argmax only)
    B, D_in = x.shape
    H, H2, E, E_pad = prep["H"], prep["H2"], prep["E"], prep["E_pad"]
    assert D_in == prep["D_in"] and gumbel_noise.shape == (B, E)

    is_v7 = _is_v7x()
    if tm is None:
        tm = _choose_tm(B, even_grid=is_v7)
    assert B % tm == 0

    const = lambda shape: pl.BlockSpec(shape, lambda i: (0, 0))

    flops = 2 * B * (D_in * H + H * H2 + H2 * E)
    bytes_accessed = int(
        x.size * 4 + gumbel_noise.size * 4 + B * E_pad * 2
        + (prep["w1"].size + prep["w2"].size + prep["w3"].size) * 2
        + (prep["ln1"].size + prep["ln2"].size + prep["b3"].size) * 4)

    out = pl.pallas_call(
        _moe_router_kernel,
        out_shape=jax.ShapeDtypeStruct((B, E_pad), jnp.bfloat16),
        grid_spec=pltpu.PrefetchScalarGridSpec(
            num_scalar_prefetch=0,
            grid=(B // tm,),
            in_specs=[
                pl.BlockSpec((tm, D_in), lambda i: (i, 0)),   # x tile
                pl.BlockSpec((tm, E), lambda i: (i, 0)),      # gumbel tile (UNPADDED)
                const((D_in, H)),                             # W1 (bf16)
                const((3, H)),                                # [b1; gamma1; beta1]
                const((H, H2)),                               # W2 (bf16)
                const((3, H2)),                               # [b2; gamma2; beta2]
                const((H2, E)),                               # W3 (bf16, unpadded)
                const((1, E)),                                # b3
            ],
            out_specs=pl.BlockSpec((tm, E_pad), lambda i: (i, 0)),
        ),
        compiler_params=pltpu.CompilerParams(
            dimension_semantics=(pltpu.CORE_PARALLEL,) if is_v7 else ("parallel",),
            vmem_limit_bytes=(32 if is_v7 else 64) * 1024 * 1024),
        cost_estimate=pl.CostEstimate(
            flops=flops, transcendentals=2 * B, bytes_accessed=bytes_accessed),
    )(x, gumbel_noise, prep["w1"], prep["ln1"], prep["w2"], prep["ln2"],
      prep["w3"], prep["b3"])

    expert_index = out[:, E_pad - 1].astype(jnp.int32)      # index from padded lane
    routing_weights = out[:, :E].astype(jnp.float32)        # exact 0/1
    return routing_weights, expert_index


def _reference_forward(x, gumbel_noise, params):
    """Pure-JAX mirror of the kernel math (same bf16/f32 recipe) for checking."""
    w1, b1, g1, be1, w2, b2, g2, be2, w3, b3 = params
    bf16 = jnp.bfloat16

    def ln(h, g, b, eps=1e-5):
        mu = jnp.mean(h, -1, keepdims=True)
        ms = jnp.mean(h * h, -1, keepdims=True)
        var = jnp.maximum(ms - mu * mu, 0.0)
        return (h - mu) * jax.lax.rsqrt(var + eps) * g + b

    h = jnp.dot(x.astype(bf16), w1.astype(bf16),
                preferred_element_type=jnp.float32) + b1
    h = jnp.maximum(ln(h, g1, be1), 0.0)
    h2 = jnp.dot(h.astype(bf16), w2.astype(bf16),
                 preferred_element_type=jnp.float32) + b2
    h2 = jnp.maximum(ln(h2, g2, be2), 0.0)
    logits = jnp.dot(h2.astype(bf16), w3.astype(bf16),
                     preferred_element_type=jnp.float32) + b3
    idx = jnp.argmax(logits + gumbel_noise, axis=-1).astype(jnp.int32)
    rw = jax.nn.one_hot(idx, logits.shape[-1], dtype=jnp.float32)
    return rw, idx


def init_params(key, input_dim, hidden_dim, num_experts):
    h2 = hidden_dim // 2
    ks = jax.random.split(key, 3)

    def linear(k, fan_in, fan_out):
        kw, kb = jax.random.split(k)
        bound = 1.0 / jnp.sqrt(fan_in)
        w = jax.random.uniform(kw, (fan_in, fan_out), jnp.float32, -bound, bound)
        b = jax.random.uniform(kb, (fan_out,), jnp.float32, -bound, bound)
        return w, b

    w1, b1 = linear(ks[0], input_dim, hidden_dim)
    w2, b2 = linear(ks[1], hidden_dim, h2)
    w3, b3 = linear(ks[2], h2, num_experts)
    g1 = jnp.ones((hidden_dim,), jnp.float32)
    be1 = jnp.zeros((hidden_dim,), jnp.float32)
    g2 = jnp.ones((h2,), jnp.float32)
    be2 = jnp.zeros((h2,), jnp.float32)
    return (w1, b1, g1, be1, w2, b2, g2, be2, w3, b3)


if __name__ == "__main__":
    # Scaled-down dims consistent with the module (input_dim=768 -> 64 etc.).
    B, D_IN, HIDDEN, NUM_EXPERTS = 256, 64, 32, 5
    TAU = 0.07

    key = jax.random.PRNGKey(0)
    k_params, k_x, k_gumbel = jax.random.split(key, 3)

    params = init_params(k_params, D_IN, HIDDEN, NUM_EXPERTS)
    prep = prepare_router_params(params, NUM_EXPERTS)   # one-time weight prep
    x = jax.random.normal(k_x, (B, D_IN), jnp.float32)
    gumbel_noise = jax.random.gumbel(k_gumbel, (B, NUM_EXPERTS), jnp.float32)

    routing_weights, expert_index = moe_router_forward(
        x, gumbel_noise, prep, tau=TAU)
    jax.block_until_ready((routing_weights, expert_index))

    # Structural checks: hard routing weights are one-hot, index consistent.
    assert routing_weights.shape == (B, NUM_EXPERTS)
    assert expert_index.shape == (B,)
    assert bool(jnp.all(jnp.sum(routing_weights, axis=-1) == 1.0))
    assert bool(jnp.all(jnp.argmax(routing_weights, axis=-1) == expert_index))
    assert bool(jnp.all((expert_index >= 0) & (expert_index < NUM_EXPERTS)))

    # Reference check (pure JAX, identical precision recipe).
    ref_rw, ref_idx = _reference_forward(x, gumbel_noise, params)
    assert bool(jnp.all(expert_index == ref_idx))
    assert bool(jnp.all(routing_weights == ref_rw))

    print("KERNEL_OK")
</pallas_src>

<mosaic_0001>
module attributes {stable_mosaic.version = 11 : i64} {
  func.func @_moe_router_kernel(%arg0: i32, %arg1: memref<256x64xf32, #tpu.memory_space<vmem>>, %arg2: memref<256x5xf32, #tpu.memory_space<vmem>>, %arg3: memref<64x32xbf16, #tpu.memory_space<vmem>>, %arg4: memref<3x32xf32, #tpu.memory_space<vmem>>, %arg5: memref<32x16xbf16, #tpu.memory_space<vmem>>, %arg6: memref<3x16xf32, #tpu.memory_space<vmem>>, %arg7: memref<16x5xbf16, #tpu.memory_space<vmem>>, %arg8: memref<1x5xf32, #tpu.memory_space<vmem>>, %arg9: memref<256x128xbf16, #tpu.memory_space<vmem>>) attributes {dimension_semantics = [#tpu.dimension_semantics<parallel>], iteration_bounds = array<i64: 1>, scalar_prefetch = 0 : i64, scratch_operands = 0 : i64, tpu.core_type = #tpu.core_type<tc>, window_params = [{transform_indices = @transform_0, window_bounds = array<i64: 256, 64>}, {transform_indices = @transform_1, window_bounds = array<i64: 256, 5>}, {pipeline_mode = #tpu.pipeline_mode<synchronous>, transform_indices = @transform_2, window_bounds = array<i64: 64, 32>}, {pipeline_mode = #tpu.pipeline_mode<synchronous>, transform_indices = @transform_3, window_bounds = array<i64: 3, 32>}, {pipeline_mode = #tpu.pipeline_mode<synchronous>, transform_indices = @transform_4, window_bounds = array<i64: 32, 16>}, {pipeline_mode = #tpu.pipeline_mode<synchronous>, transform_indices = @transform_5, window_bounds = array<i64: 3, 16>}, {pipeline_mode = #tpu.pipeline_mode<synchronous>, transform_indices = @transform_6, window_bounds = array<i64: 16, 5>}, {pipeline_mode = #tpu.pipeline_mode<synchronous>, transform_indices = @transform_7, window_bounds = array<i64: 1, 5>}, {transform_indices = @transform_8, window_bounds = array<i64: 256, 128>}]} {
    %c0 = arith.constant 0 : index
    %c0_0 = arith.constant 0 : index
    %0 = vector.load %arg1[%c0, %c0_0] : memref<256x64xf32, #tpu.memory_space<vmem>>, vector<256x64xf32>
    %c0_1 = arith.constant 0 : index
    %c0_2 = arith.constant 0 : index
    %1 = vector.load %arg4[%c0_1, %c0_2] : memref<3x32xf32, #tpu.memory_space<vmem>>, vector<3x32xf32>
    %c0_3 = arith.constant 0 : index
    %c0_4 = arith.constant 0 : index
    %2 = vector.load %arg6[%c0_3, %c0_4] : memref<3x16xf32, #tpu.memory_space<vmem>>, vector<3x16xf32>
    %3 = arith.truncf %0 : vector<256x64xf32> to vector<256x64xbf16>
    %c0_5 = arith.constant 0 : index
    %c0_6 = arith.constant 0 : index
    %4 = vector.load %arg3[%c0_5, %c0_6] : memref<64x32xbf16, #tpu.memory_space<vmem>>, vector<64x32xbf16>
    %cst = arith.constant dense<0.000000e+00> : vector<256x32xf32>
    %5 = tpu.matmul %3, %4, %cst {dimension_numbers = #tpu.dot_dimension_numbers<[1], [0], [0], [1], [0, 0, 1, 1], [], []>} : vector<256x64xbf16>, vector<64x32xbf16>, vector<256x32xf32> -> vector<256x32xf32>
    %6 = vector.extract_strided_slice %1 {offsets = [0, 0], sizes = [1, 32], strides = [1, 1]} : vector<3x32xf32> to vector<1x32xf32>
    %7 = vector.broadcast %6 : vector<1x32xf32> to vector<256x32xf32>
    %8 = arith.addf %5, %7 : vector<256x32xf32>
    %9 = vector.extract_strided_slice %1 {offsets = [1, 0], sizes = [1, 32], strides = [1, 1]} : vector<3x32xf32> to vector<1x32xf32>
    %10 = vector.extract_strided_slice %1 {offsets = [2, 0], sizes = [1, 32], strides = [1, 1]} : vector<3x32xf32> to vector<1x32xf32>
    %cst_7 = arith.constant dense<0.000000e+00> : vector<256xf32>
    %11 = vector.multi_reduction <add>, %8, %cst_7 [1] : vector<256x32xf32> to vector<256xf32>
    %12 = vector.shape_cast %11 : vector<256xf32> to vector<256x1xf32>
    %cst_8 = arith.constant 3.200000e+01 : f32
    %13 = vector.broadcast %cst_8 : f32 to vector<256x1xf32>
    %14 = arith.divf %12, %13 : vector<256x1xf32>
    %15 = arith.mulf %8, %8 : vector<256x32xf32>
    %cst_9 = arith.constant dense<0.000000e+00> : vector<256xf32>
    %16 = vector.multi_reduction <add>, %15, %cst_9 [1] : vector<256x32xf32> to vector<256xf32>
    %17 = vector.shape_cast %16 : vector<256xf32> to vector<256x1xf32>
    %cst_10 = arith.constant 3.200000e+01 : f32
    %18 = vector.broadcast %cst_10 : f32 to vector<256x1xf32>
    %19 = arith.divf %17, %18 : vector<256x1xf32>
    %20 = arith.mulf %14, %14 : vector<256x1xf32>
    %21 = arith.subf %19, %20 : vector<256x1xf32>
    %cst_11 = arith.constant 0.000000e+00 : f32
    %22 = vector.broadcast %cst_11 : f32 to vector<256x1xf32>
    %23 = arith.maximumf %21, %22 : vector<256x1xf32>
    %24 = vector.broadcast %14 : vector<256x1xf32> to vector<256x32xf32>
    %25 = arith.subf %8, %24 : vector<256x32xf32>
    %cst_12 = arith.constant 9.99999974E-6 : f32
    %26 = vector.broadcast %cst_12 : f32 to vector<256x1xf32>
    %27 = arith.addf %23, %26 : vector<256x1xf32>
    %28 = math.rsqrt %27 : vector<256x1xf32>
    %29 = vector.broadcast %28 : vector<256x1xf32> to vector<256x32xf32>
    %30 = arith.mulf %25, %29 : vector<256x32xf32>
    %31 = vector.broadcast %9 : vector<1x32xf32> to vector<256x32xf32>
    %32 = arith.mulf %30, %31 : vector<256x32xf32>
    %33 = vector.broadcast %10 : vector<1x32xf32> to vector<256x32xf32>
    %34 = arith.addf %32, %33 : vector<256x32xf32>
    %cst_13 = arith.constant 0.000000e+00 : f32
    %35 = vector.broadcast %cst_13 : f32 to vector<256x32xf32>
    %36 = arith.maximumf %34, %35 : vector<256x32xf32>
    %37 = arith.truncf %36 : vector<256x32xf32> to vector<256x32xbf16>
    %c0_14 = arith.constant 0 : index
    %c0_15 = arith.constant 0 : index
    %38 = vector.load %arg5[%c0_14, %c0_15] : memref<32x16xbf16, #tpu.memory_space<vmem>>, vector<32x16xbf16>
    %cst_16 = arith.constant dense<0.000000e+00> : vector<256x16xf32>
    %39 = tpu.matmul %37, %38, %cst_16 {dimension_numbers = #tpu.dot_dimension_numbers<[1], [0], [0], [1], [0, 0, 1, 1], [], []>} : vector<256x32xbf16>, vector<32x16xbf16>, vector<256x16xf32> -> vector<256x16xf32>
    %40 = vector.extract_strided_slice %2 {offsets = [0, 0], sizes = [1, 16], strides = [1, 1]} : vector<3x16xf32> to vector<1x16xf32>
    %41 = vector.broadcast %40 : vector<1x16xf32> to vector<256x16xf32>
    %42 = arith.addf %39, %41 : vector<256x16xf32>
    %43 = vector.extract_strided_slice %2 {offsets = [1, 0], sizes = [1, 16], strides = [1, 1]} : vector<3x16xf32> to vector<1x16xf32>
    %44 = vector.extract_strided_slice %2 {offsets = [2, 0], sizes = [1, 16], strides = [1, 1]} : vector<3x16xf32> to vector<1x16xf32>
    %cst_17 = arith.constant dense<0.000000e+00> : vector<256xf32>
    %45 = vector.multi_reduction <add>, %42, %cst_17 [1] : vector<256x16xf32> to vector<256xf32>
    %46 = vector.shape_cast %45 : vector<256xf32> to vector<256x1xf32>
    %cst_18 = arith.constant 1.600000e+01 : f32
    %47 = vector.broadcast %cst_18 : f32 to vector<256x1xf32>
    %48 = arith.divf %46, %47 : vector<256x1xf32>
    %49 = arith.mulf %42, %42 : vector<256x16xf32>
    %cst_19 = arith.constant dense<0.000000e+00> : vector<256xf32>
    %50 = vector.multi_reduction <add>, %49, %cst_19 [1] : vector<256x16xf32> to vector<256xf32>
    %51 = vector.shape_cast %50 : vector<256xf32> to vector<256x1xf32>
    %cst_20 = arith.constant 1.600000e+01 : f32
    %52 = vector.broadcast %cst_20 : f32 to vector<256x1xf32>
    %53 = arith.divf %51, %52 : vector<256x1xf32>
    %54 = arith.mulf %48, %48 : vector<256x1xf32>
    %55 = arith.subf %53, %54 : vector<256x1xf32>
    %cst_21 = arith.constant 0.000000e+00 : f32
    %56 = vector.broadcast %cst_21 : f32 to vector<256x1xf32>
    %57 = arith.maximumf %55, %56 : vector<256x1xf32>
    %58 = vector.broadcast %48 : vector<256x1xf32> to vector<256x16xf32>
    %59 = arith.subf %42, %58 : vector<256x16xf32>
    %cst_22 = arith.constant 9.99999974E-6 : f32
    %60 = vector.broadcast %cst_22 : f32 to vector<256x1xf32>
    %61 = arith.addf %57, %60 : vector<256x1xf32>
    %62 = math.rsqrt %61 : vector<256x1xf32>
    %63 = vector.broadcast %62 : vector<256x1xf32> to vector<256x16xf32>
    %64 = arith.mulf %59, %63 : vector<256x16xf32>
    %65 = vector.broadcast %43 : vector<1x16xf32> to vector<256x16xf32>
    %66 = arith.mulf %64, %65 : vector<256x16xf32>
    %67 = vector.broadcast %44 : vector<1x16xf32> to vector<256x16xf32>
    %68 = arith.addf %66, %67 : vector<256x16xf32>
    %cst_23 = arith.constant 0.000000e+00 : f32
    %69 = vector.broadcast %cst_23 : f32 to vector<256x16xf32>
    %70 = arith.maximumf %68, %69 : vector<256x16xf32>
    %71 = arith.truncf %70 : vector<256x16xf32> to vector<256x16xbf16>
    %c0_24 = arith.constant 0 : index
    %c0_25 = arith.constant 0 : index
    %72 = vector.load %arg7[%c0_24, %c0_25] : memref<16x5xbf16, #tpu.memory_space<vmem>>, vector<16x5xbf16>
    %cst_26 = arith.constant dense<0.000000e+00> : vector<256x5xf32>
    %73 = tpu.matmul %71, %72, %cst_26 {dimension_numbers = #tpu.dot_dimension_numbers<[1], [0], [0], [1], [0, 0, 1, 1], [], []>} : vector<256x16xbf16>, vector<16x5xbf16>, vector<256x5xf32> -> vector<256x5xf32>
    %c0_27 = arith.constant 0 : index
    %c0_28 = arith.constant 0 : index
    %74 = vector.load %arg8[%c0_27, %c0_28] : memref<1x5xf32, #tpu.memory_space<vmem>>, vector<1x5xf32>
    %75 = vector.broadcast %74 : vector<1x5xf32> to vector<256x5xf32>
    %76 = arith.addf %73, %75 : vector<256x5xf32>
    %c0_29 = arith.constant 0 : index
    %c0_30 = arith.constant 0 : index
    %77 = vector.load %arg2[%c0_29, %c0_30] : memref<256x5xf32, #tpu.memory_space<vmem>>, vector<256x5xf32>
    %78 = arith.addf %76, %77 : vector<256x5xf32>
    %79 = tpu.iota {dimensions = array<i32: 1>} : vector<256x5xi32>
    %cst_31 = arith.constant dense<0xFF800000> : vector<256xf32>
    %80 = vector.multi_reduction <maximumf>, %78, %cst_31 [1] : vector<256x5xf32> to vector<256xf32>
    %81 = vector.shape_cast %80 : vector<256xf32> to vector<256x1xf32>
    %82 = vector.broadcast %81 : vector<256x1xf32> to vector<256x5xf32>
    %83 = arith.cmpf oeq, %78, %82 : vector<256x5xf32>
    %c5_i32 = arith.constant 5 : i32
    %84 = vector.broadcast %c5_i32 : i32 to vector<256x5xi32>
    %85 = arith.select %83, %79, %84 : vector<256x5xi1>, vector<256x5xi32>
    %cst_32 = arith.constant dense<2147483647> : vector<256xi32>
    %86 = vector.multi_reduction <minsi>, %85, %cst_32 [1] : vector<256x5xi32> to vector<256xi32>
    %87 = vector.shape_cast %86 : vector<256xi32> to vector<256x1xi32>
    %88 = tpu.iota {dimensions = array<i32: 1>} : vector<256x128xi32>
    %89 = vector.broadcast %87 : vector<256x1xi32> to vector<256x128xi32>
    %90 = arith.cmpi eq, %88, %89 : vector<256x128xi32>
    %91 = arith.extui %90 : vector<256x128xi1> to vector<256x128xi32>
    %92 = arith.sitofp %91 : vector<256x128xi32> to vector<256x128xf32>
    %93 = arith.truncf %92 : vector<256x128xf32> to vector<256x128xbf16>
    %c127_i32 = arith.constant 127 : i32
    %94 = vector.broadcast %c127_i32 : i32 to vector<256x128xi32>
    %95 = arith.cmpi eq, %88, %94 : vector<256x128xi32>
    %96 = arith.sitofp %87 : vector<256x1xi32> to vector<256x1xbf16>
    %97 = vector.shape_cast %96 : vector<256x1xbf16> to vector<256x1xbf16>
    %98 = vector.broadcast %97 : vector<256x1xbf16> to vector<256x128xbf16>
    %99 = arith.select %95, %98, %93 : vector<256x128xi1>, vector<256x128xbf16>
    %c0_33 = arith.constant 0 : index
    %c0_34 = arith.constant 0 : index
    %100 = vector.load %arg9[%c0_33, %c0_34] : memref<256x128xbf16, #tpu.memory_space<vmem>>, vector<256x128xbf16>
    tpu.vector_store %arg9[%c0_33, %c0_34], %99 {strides = array<i32>} : memref<256x128xbf16, #tpu.memory_space<vmem>>, vector<256x128xbf16>,
    return
  }
  func.func @transform_0(%arg0: i32) -> (i32, i32) {
    %c0_i32 = arith.constant 0 : i32
    %c0_i32_0 = arith.constant 0 : i32
    return %arg0, %c0_i32 : i32, i32
  }
  func.func @transform_1(%arg0: i32) -> (i32, i32) {
    %c0_i32 = arith.constant 0 : i32
    %c0_i32_0 = arith.constant 0 : i32
    return %arg0, %c0_i32 : i32, i32
  }
  func.func @transform_2(%arg0: i32) -> (i32, i32) {
    %c0_i32 = arith.constant 0 : i32
    %c0_i32_0 = arith.constant 0 : i32
    %c0_i32_1 = arith.constant 0 : i32
    return %c0_i32, %c0_i32_0 : i32, i32
  }
  func.func @transform_3(%arg0: i32) -> (i32, i32) {
    %c0_i32 = arith.constant 0 : i32
    %c0_i32_0 = arith.constant 0 : i32
    %c0_i32_1 = arith.constant 0 : i32
    return %c0_i32, %c0_i32_0 : i32, i32
  }
  func.func @transform_4(%arg0: i32) -> (i32, i32) {
    %c0_i32 = arith.constant 0 : i32
    %c0_i32_0 = arith.constant 0 : i32
    %c0_i32_1 = arith.constant 0 : i32
    return %c0_i32, %c0_i32_0 : i32, i32
  }
  func.func @transform_5(%arg0: i32) -> (i32, i32) {
    %c0_i32 = arith.constant 0 : i32
    %c0_i32_0 = arith.constant 0 : i32
    %c0_i32_1 = arith.constant 0 : i32
    return %c0_i32, %c0_i32_0 : i32, i32
  }
  func.func @transform_6(%arg0: i32) -> (i32, i32) {
    %c0_i32 = arith.constant 0 : i32
    %c0_i32_0 = arith.constant 0 : i32
    %c0_i32_1 = arith.constant 0 : i32
    return %c0_i32, %c0_i32_0 : i32, i32
  }
  func.func @transform_7(%arg0: i32) -> (i32, i32) {
    %c0_i32 = arith.constant 0 : i32
    %c0_i32_0 = arith.constant 0 : i32
    %c0_i32_1 = arith.constant 0 : i32
    return %c0_i32, %c0_i32_0 : i32, i32
  }
  func.func @transform_8(%arg0: i32) -> (i32, i32) {
    %c0_i32 = arith.constant 0 : i32
    %c0_i32_0 = arith.constant 0 : i32
    return %arg0, %c0_i32 : i32, i32
  }
}

</mosaic_0001>

<llo_original>
// kernel: tpu_custom_call.1
$region0: #{tpu_custom_call.1}
  #allocation0 [shape = 'u32[]', space=smem, size = 0x4, offset = 0x4, fixed_abs, tag = 'smem constant byte address 0x4 - core index']
  #allocation1 [shape = 'u32[72,128]{1,0:T(1,128)}', space=vmem, size = 0x9000, scoped, tag = 'internal scratch']
  %s0 = inlined_call_operand.vmem [shape: f32[256,64], index: 0, kind: input, shape index: {}]
  %s1 = inlined_call_operand.vmem [shape: f32[256,5], index: 1, kind: input, shape index: {}]
  %s2 = inlined_call_operand.vmem [shape: bf16[64,32], index: 2, kind: input, shape index: {}]
  %s3 = inlined_call_operand.vmem [shape: f32[3,32], index: 3, kind: input, shape index: {}]
  %s4 = inlined_call_operand.vmem [shape: bf16[32,16], index: 4, kind: input, shape index: {}]
  %s5 = inlined_call_operand.vmem [shape: f32[3,16], index: 5, kind: input, shape index: {}]
  %s6 = inlined_call_operand.vmem [shape: bf16[16,5], index: 6, kind: input, shape index: {}]
  %s7 = inlined_call_operand.vmem [shape: f32[1,5], index: 7, kind: input, shape index: {}]
  %s8 = inlined_call_operand.hbm [shape: bf16[256,128], index: 8, kind: output, shape index: {}]
  %s9 = sld [smem:[#allocation0]]
  $region42: #{tpu_custom_call.1} parent=0
    _
  %s11 = ssub.s32 1, %s9
  %s12 = scalar_select 0, %s11, %s9
  $region1: #{tpu_custom_call.1} parent=0
    #allocation2 [shape = 'u8[65536]{0}', space=vmem, size = 0x10000, scoped, tag = 'output window, operand 0, single buffered']
    #allocation3 [shape = 's32[1]{0}', space=sflag, size = 0x4, scoped, tag = 'scoped memory for tpu_custom_call.1']
    %13 = vsyncpa [#allocation3], 0
    // Predicated region
    $region2: #{tpu_custom_call.1} parent=1 // pred_check
      _
    $region3: #{tpu_custom_call.1} parent=1 // pred_check_branch
      %15 = sbr.rel (0) target = $region5
    $region4: #{tpu_custom_call.1} parent=1 // pred_region
      _
    $region5: #{tpu_custom_call.1} parent=1 // pred_fallthru
      _
    // Predicated region
    $region6: #{tpu_custom_call.1} parent=1 // pred_check
      _
    $region7: #{tpu_custom_call.1} parent=1 // pred_check_branch
      %17 = sbr.rel (0) target = $region9
    $region8: #{tpu_custom_call.1} parent=1 // pred_region
      _
    $region9: #{tpu_custom_call.1} parent=1 // pred_fallthru
      _
    // Predicated region
    $region10: #{tpu_custom_call.1} parent=1 // pred_check
      _
    $region11: #{tpu_custom_call.1} parent=1 // pred_check_branch
      %19 = sbr.rel (0) target = $region13
    $region12: #{tpu_custom_call.1} parent=1 // pred_region
      _
    $region13: #{tpu_custom_call.1} parent=1 // pred_fallthru
      _
    // Predicated region
    $region14: #{tpu_custom_call.1} parent=1 // pred_check
      _
    $region15: #{tpu_custom_call.1} parent=1 // pred_check_branch
      %21 = sbr.rel (0) target = $region17
    $region16: #{tpu_custom_call.1} parent=1 // pred_region
      _
    $region17: #{tpu_custom_call.1} parent=1 // pred_fallthru
      _
    // Predicated region
    $region18: #{tpu_custom_call.1} parent=1 // pred_check
      _
    $region19: #{tpu_custom_call.1} parent=1 // pred_check_branch
      %23 = sbr.rel (0) target = $region21
    $region20: #{tpu_custom_call.1} parent=1 // pred_region
      _
    $region21: #{tpu_custom_call.1} parent=1 // pred_fallthru
      _
    // Predicated region
    $region22: #{tpu_custom_call.1} parent=1 // pred_check
      _
    $region23: #{tpu_custom_call.1} parent=1 // pred_check_branch
      %25 = sbr.rel (0) target = $region25
    $region24: #{tpu_custom_call.1} parent=1 // pred_region
      _
    $region25: #{tpu_custom_call.1} parent=1 // pred_fallthru
      _
    // Predicated region
    $region26: #{tpu_custom_call.1} parent=1 // pred_check
      _
    $region27: #{tpu_custom_call.1} parent=1 // pred_check_branch
      %27 = sbr.rel (0) target = $region29
    $region28: #{tpu_custom_call.1} parent=1 // pred_region
      _
    $region29: #{tpu_custom_call.1} parent=1 // pred_fallthru
      _
    // Predicated region
    $region30: #{tpu_custom_call.1} parent=1 // pred_check
      _
    $region31: #{tpu_custom_call.1} parent=1 // pred_check_branch
      %29 = sbr.rel (0) target = $region33
    $region32: #{tpu_custom_call.1} parent=1 // pred_region
      _
    $region33: #{tpu_custom_call.1} parent=1 // pred_fallthru
      _
    %v31 = vld [vmem:[%s0] sm:$0xff]
    %v32 = vld [vmem:[%s0 + $0x8] sm:$0xff]
    %v33 = vld [vmem:[%s0 + $0x10] sm:$0xff]
    %v34 = vld [vmem:[%s0 + $0x18] sm:$0xff]
    %v35 = vld [vmem:[%s0 + $0x20] sm:$0xff]
    %v36 = vld [vmem:[%s0 + $0x28] sm:$0xff]
    %v37 = vld [vmem:[%s0 + $0x30] sm:$0xff]
    %v38 = vld [vmem:[%s0 + $0x38] sm:$0xff]
    %v39 = vld [vmem:[%s0 + $0x40] sm:$0xff]
    %v40 = vld [vmem:[%s0 + $0x48] sm:$0xff]
    %v41 = vld [vmem:[%s0 + $0x50] sm:$0xff]
    %v42 = vld [vmem:[%s0 + $0x58] sm:$0xff]
    %v43 = vld [vmem:[%s0 + $0x60] sm:$0xff]
    %v44 = vld [vmem:[%s0 + $0x68] sm:$0xff]
    %v45 = vld [vmem:[%s0 + $0x70] sm:$0xff]
    %v46 = vld [vmem:[%s0 + $0x78] sm:$0xff]
    %v47 = vld [vmem:[%s0 + $0x80] sm:$0xff]
    %v48 = vld [vmem:[%s0 + $0x88] sm:$0xff]
    %v49 = vld [vmem:[%s0 + $0x90] sm:$0xff]
    %v50 = vld [vmem:[%s0 + $0x98] sm:$0xff]
    %v51 = vld [vmem:[%s0 + $0xa0] sm:$0xff]
    %v52 = vld [vmem:[%s0 + $0xa8] sm:$0xff]
    %v53 = vld [vmem:[%s0 + $0xb0] sm:$0xff]
    %v54 = vld [vmem:[%s0 + $0xb8] sm:$0xff]
    %v55 = vld [vmem:[%s0 + $0xc0] sm:$0xff]
    %v56 = vld [vmem:[%s0 + $0xc8] sm:$0xff]
    %v57 = vld [vmem:[%s0 + $0xd0] sm:$0xff]
    %v58 = vld [vmem:[%s0 + $0xd8] sm:$0xff]
    %v59 = vld [vmem:[%s0 + $0xe0] sm:$0xff]
    %v60 = vld [vmem:[%s0 + $0xe8] sm:$0xff]
    %v61 = vld [vmem:[%s0 + $0xf0] sm:$0xff]
    %v62 = vld [vmem:[%s0 + $0xf8] sm:$0xff]
    %v63 = vld [vmem:[%s3] sm:$0x7]
    %v64 = vld [vmem:[%s5] sm:$0x7]
    %v65 = vpack.c.bf16 %v32, %v31
    %v66 = vpack.c.bf16 %v34, %v33
    %v67 = vpack.c.bf16 %v36, %v35
    %v68 = vpack.c.bf16 %v38, %v37
    %v69 = vpack.c.bf16 %v40, %v39
    %v70 = vpack.c.bf16 %v42, %v41
    %v71 = vpack.c.bf16 %v44, %v43
    %v72 = vpack.c.bf16 %v46, %v45
    %v73 = vpack.c.bf16 %v48, %v47
    %v74 = vpack.c.bf16 %v50, %v49
    %v75 = vpack.c.bf16 %v52, %v51
    %v76 = vpack.c.bf16 %v54, %v53
    %v77 = vpack.c.bf16 %v56, %v55
    %v78 = vpack.c.bf16 %v58, %v57
    %v79 = vpack.c.bf16 %v60, %v59
    %v80 = vpack.c.bf16 %v62, %v61
    %v81 = vld [vmem:[%s2] sm:$0xf]
    %v82 = vld [vmem:[%s2 + $0x4] sm:$0xf]
    %v83 = vld [vmem:[%s2 + $0x8] sm:$0xf]
    %v84 = vld [vmem:[%s2 + $0xc] sm:$0xf]
    %v85 = vld [vmem:[%s2 + $0x10] sm:$0xf]
    %v86 = vld [vmem:[%s2 + $0x14] sm:$0xf]
    %v87 = vld [vmem:[%s2 + $0x18] sm:$0xf]
    %v88 = vld [vmem:[%s2 + $0x1c] sm:$0xf]
    %v89 = vperm.slane %v63, 0
    %v98 = vunpack.c.l.b16 %v81
    %v99 = vunpack.c.l.b16 %v82
    %v100 = vunpack.c.l.b16 %v83
    %v101 = vunpack.c.l.b16 %v84
    %v102 = vunpack.c.l.b16 %v85
    %v103 = vunpack.c.l.b16 %v86
    %v104 = vunpack.c.l.b16 %v87
    %v105 = vunpack.c.l.b16 %v88
    %v106 = vpack.c.b16 %v99, %v98
    %v107 = vpack.c.b16 %v101, %v100
    %v108 = vpack.c.b16 %v103, %v102
    %v109 = vpack.c.b16 %v105, %v104
    %vm114 = vcmask 523264
    %v116 = vsel %vm114, %v65, 0
    %v119 = vsel %vm114, %v66, 0
    %v122 = vsel %vm114, %v67, 0
    %v125 = vsel %vm114, %v68, 0
    %v128 = vsel %vm114, %v69, 0
    %v131 = vsel %vm114, %v70, 0
    %v134 = vsel %vm114, %v71, 0
    %v137 = vsel %vm114, %v72, 0
    %v140 = vsel %vm114, %v73, 0
    %v143 = vsel %vm114, %v74, 0
    %v146 = vsel %vm114, %v75, 0
    %v149 = vsel %vm114, %v76, 0
    %v152 = vsel %vm114, %v77, 0
    %v155 = vsel %vm114, %v78, 0
    %v158 = vsel %vm114, %v79, 0
    %v161 = vsel %vm114, %v80, 0
    %163 = vmatpush.bf16.msra.mxu0 0
    %164 = vmatpush.bf16.msra.mxu0 0
    %165 = vmatpush.bf16.msra.mxu0 0
    %166 = vmatpush.bf16.msra.mxu0 0
    %167 = vmatpush.bf16.msra.mxu0 %v109
    %168 = vmatpush.bf16.msra.mxu0 %v108
    %169 = vmatpush.bf16.msra.mxu0 %v107
    %170 = vmatpush.bf16.msra.mxu0 %v106
    %171 = vmatmul.bf16.gmra.mxu0 %v116
    %v172 = vpop.f32.mrf.mxu0
    %v173 = vadd.f32 %v89, %v172
    %v174 = vpop.f32.mrf.mxu0
    %v175 = vadd.f32 %v89, %v174
    %176 = vmatmul.bf16.gmra.mxu0 %v119
    %v177 = vpop.f32.mrf.mxu0
    %v178 = vadd.f32 %v89, %v177
    %v179 = vpop.f32.mrf.mxu0
    %v180 = vadd.f32 %v89, %v179
    %181 = vmatmul.bf16.gmra.mxu0 %v122
    %v182 = vpop.f32.mrf.mxu0
    %v183 = vadd.f32 %v89, %v182
    %v184 = vpop.f32.mrf.mxu0
    %v185 = vadd.f32 %v89, %v184
    %186 = vmatmul.bf16.gmra.mxu0 %v125
    %v187 = vpop.f32.mrf.mxu0
    %v188 = vadd.f32 %v89, %v187
    %v189 = vpop.f32.mrf.mxu0
    %v190 = vadd.f32 %v89, %v189
    %191 = vmatmul.bf16.gmra.mxu0 %v128
    %v192 = vpop.f32.mrf.mxu0
    %v193 = vadd.f32 %v89, %v192
    %v194 = vpop.f32.mrf.mxu0
    %v195 = vadd.f32 %v89, %v194
    %196 = vmatmul.bf16.gmra.mxu0 %v131
    %v197 = vpop.f32.mrf.mxu0
    %v198 = vadd.f32 %v89, %v197
    %v199 = vpop.f32.mrf.mxu0
    %v200 = vadd.f32 %v89, %v199
    %201 = vmatmul.bf16.gmra.mxu0 %v134
    %v202 = vpop.f32.mrf.mxu0
    %v203 = vadd.f32 %v89, %v202
    %v204 = vpop.f32.mrf.mxu0
    %v205 = vadd.f32 %v89, %v204
    %206 = vmatmul.bf16.gmra.mxu0 %v137
    %v207 = vpop.f32.mrf.mxu0
    %v208 = vadd.f32 %v89, %v207
    %v209 = vpop.f32.mrf.mxu0
    %v210 = vadd.f32 %v89, %v209
    %211 = vmatmul.bf16.gmra.mxu0 %v140
    %v212 = vpop.f32.mrf.mxu0
    %v213 = vadd.f32 %v89, %v212
    %v214 = vpop.f32.mrf.mxu0
    %v215 = vadd.f32 %v89, %v214
    %216 = vmatmul.bf16.gmra.mxu0 %v143
    %v217 = vpop.f32.mrf.mxu0
    %v218 = vadd.f32 %v89, %v217
    %v219 = vpop.f32.mrf.mxu0
    %v220 = vadd.f32 %v89, %v219
    %221 = vmatmul.bf16.gmra.mxu0 %v146
    %v222 = vpop.f32.mrf.mxu0
    %v223 = vadd.f32 %v89, %v222
    %v224 = vpop.f32.mrf.mxu0
    %v225 = vadd.f32 %v89, %v224
    %226 = vmatmul.bf16.gmra.mxu0 %v149
    %v227 = vpop.f32.mrf.mxu0
    %v228 = vadd.f32 %v89, %v227
    %v229 = vpop.f32.mrf.mxu0
    %v230 = vadd.f32 %v89, %v229
    %231 = vmatmul.bf16.gmra.mxu0 %v152
    %v232 = vpop.f32.mrf.mxu0
    %v233 = vadd.f32 %v89, %v232
    %v234 = vpop.f32.mrf.mxu0
    %v235 = vadd.f32 %v89, %v234
    %236 = vmatmul.bf16.gmra.mxu0 %v155
    %v237 = vpop.f32.mrf.mxu0
    %v238 = vadd.f32 %v89, %v237
    %v239 = vpop.f32.mrf.mxu0
    %v240 = vadd.f32 %v89, %v239
    %241 = vmatmul.bf16.gmra.mxu0 %v158
    %v242 = vpop.f32.mrf.mxu0
    %v243 = vadd.f32 %v89, %v242
    %v244 = vpop.f32.mrf.mxu0
    %v245 = vadd.f32 %v89, %v244
    %246 = vmatmul.bf16.gmra.mxu0 %v161
    %v247 = vpop.f32.mrf.mxu0
    %v248 = vadd.f32 %v89, %v247
    %v249 = vpop.f32.mrf.mxu0
    %v250 = vadd.f32 %v89, %v249
    %251 = vdwg.mxu0
    %vm252 = vcmask 261120
    %v253 = vsel %vm252, %v173, 0.0
    %254 = vadd.xlane.f32.xlu0 %v253
    %v255 = vpop.xlane.xlu0 %254
    %v256 = vsel %vm252, %v175, 0.0
    %257 = vadd.xlane.f32.xlu0 %v256
    %v258 = vpop.xlane.xlu0 %257
    %v259 = vsel %vm252, %v178, 0.0
    %260 = vadd.xlane.f32.xlu0 %v259
    %v261 = vpop.xlane.xlu0 %260
    %v262 = vsel %vm252, %v180, 0.0
    %263 = vadd.xlane.f32.xlu0 %v262
    %v264 = vpop.xlane.xlu0 %263
    %v265 = vsel %vm252, %v183, 0.0
    %266 = vadd.xlane.f32.xlu0 %v265
    %v267 = vpop.xlane.xlu0 %266
    %v268 = vsel %vm252, %v185, 0.0
    %269 = vadd.xlane.f32.xlu0 %v268
    %v270 = vpop.xlane.xlu0 %269
    %v271 = vsel %vm252, %v188, 0.0
    %272 = vadd.xlane.f32.xlu0 %v271
    %v273 = vpop.xlane.xlu0 %272
    %v274 = vsel %vm252, %v190, 0.0
    %275 = vadd.xlane.f32.xlu0 %v274
    %v276 = vpop.xlane.xlu0 %275
    %v277 = vsel %vm252, %v193, 0.0
    %278 = vadd.xlane.f32.xlu0 %v277
    %v279 = vpop.xlane.xlu0 %278
    %v280 = vsel %vm252, %v195, 0.0
    %281 = vadd.xlane.f32.xlu0 %v280
    %v282 = vpop.xlane.xlu0 %281
    %v283 = vsel %vm252, %v198, 0.0
    %284 = vadd.xlane.f32.xlu0 %v283
    %v285 = vpop.xlane.xlu0 %284
    %v286 = vsel %vm252, %v200, 0.0
    %287 = vadd.xlane.f32.xlu0 %v286
    %v288 = vpop.xlane.xlu0 %287
    %v289 = vsel %vm252, %v203, 0.0
    %290 = vadd.xlane.f32.xlu0 %v289
    %v291 = vpop.xlane.xlu0 %290
    %v292 = vsel %vm252, %v205, 0.0
    %293 = vadd.xlane.f32.xlu0 %v292
    %v294 = vpop.xlane.xlu0 %293
    %v295 = vsel %vm252, %v208, 0.0
    %296 = vadd.xlane.f32.xlu0 %v295
    %v297 = vpop.xlane.xlu0 %296
    %v298 = vsel %vm252, %v210, 0.0
    %299 = vadd.xlane.f32.xlu0 %v298
    %v300 = vpop.xlane.xlu0 %299
    %v301 = vsel %vm252, %v213, 0.0
    %302 = vadd.xlane.f32.xlu0 %v301
    %v303 = vpop.xlane.xlu0 %302
    %v304 = vsel %vm252, %v215, 0.0
    %305 = vadd.xlane.f32.xlu0 %v304
    %v306 = vpop.xlane.xlu0 %305
    %v307 = vsel %vm252, %v218, 0.0
    %308 = vadd.xlane.f32.xlu0 %v307
    %v309 = vpop.xlane.xlu0 %308
    %v310 = vsel %vm252, %v220, 0.0
    %311 = vadd.xlane.f32.xlu0 %v310
    %v312 = vpop.xlane.xlu0 %311
    %v313 = vsel %vm252, %v223, 0.0
    %314 = vadd.xlane.f32.xlu0 %v313
    %v315 = vpop.xlane.xlu0 %314
    %v316 = vsel %vm252, %v225, 0.0
    %317 = vadd.xlane.f32.xlu0 %v316
    %v318 = vpop.xlane.xlu0 %317
    %v319 = vsel %vm252, %v228, 0.0
    %320 = vadd.xlane.f32.xlu0 %v319
    %v321 = vpop.xlane.xlu0 %320
    %v322 = vsel %vm252, %v230, 0.0
    %323 = vadd.xlane.f32.xlu0 %v322
    %v324 = vpop.xlane.xlu0 %323
    %v325 = vsel %vm252, %v233, 0.0
    %326 = vadd.xlane.f32.xlu0 %v325
    %v327 = vpop.xlane.xlu0 %326
    %v328 = vsel %vm252, %v235, 0.0
    %329 = vadd.xlane.f32.xlu0 %v328
    %v330 = vpop.xlane.xlu0 %329
    %v331 = vsel %vm252, %v238, 0.0
    %332 = vadd.xlane.f32.xlu0 %v331
    %v333 = vpop.xlane.xlu0 %332
    %v334 = vsel %vm252, %v240, 0.0
    %335 = vadd.xlane.f32.xlu0 %v334
    %v336 = vpop.xlane.xlu0 %335
    %v337 = vsel %vm252, %v243, 0.0
    %338 = vadd.xlane.f32.xlu0 %v337
    %v339 = vpop.xlane.xlu0 %338
    %v340 = vsel %vm252, %v245, 0.0
    %341 = vadd.xlane.f32.xlu0 %v340
    %v342 = vpop.xlane.xlu0 %341
    %v343 = vsel %vm252, %v248, 0.0
    %344 = vadd.xlane.f32.xlu0 %v343
    %v345 = vpop.xlane.xlu0 %344
    %v346 = vsel %vm252, %v250, 0.0
    %347 = vadd.xlane.f32.xlu0 %v346
    %v348 = vpop.xlane.xlu0 %347
    %v349 = vrcp.pop 32.0
    %v350 = vmul.f32 32.0, %v349
    %v351 = vsub.f32 1.0, %v350
    %v352 = vmul.f32 %v349, %v351
    %v353 = vadd.f32 %v349, %v352
    %vm354 = vweird.f32 %v349
    %v355 = vsel %vm354, %v349, %v353
    %v356 = vmul.f32 %v255, %v355
    %v357 = vmul.f32 %v258, %v355
    %v358 = vmul.f32 %v261, %v355
    %v359 = vmul.f32 %v264, %v355
    %v360 = vmul.f32 %v267, %v355
    %v361 = vmul.f32 %v270, %v355
    %v362 = vmul.f32 %v273, %v355
    %v363 = vmul.f32 %v276, %v355
    %v364 = vmul.f32 %v279, %v355
    %v365 = vmul.f32 %v282, %v355
    %v366 = vmul.f32 %v285, %v355
    %v367 = vmul.f32 %v288, %v355
    %v368 = vmul.f32 %v291, %v355
    %v369 = vmul.f32 %v294, %v355
    %v370 = vmul.f32 %v297, %v355
    %v371 = vmul.f32 %v300, %v355
    %v372 = vmul.f32 %v303, %v355
    %v373 = vmul.f32 %v306, %v355
    %v374 = vmul.f32 %v309, %v355
    %v375 = vmul.f32 %v312, %v355
    %v376 = vmul.f32 %v315, %v355
    %v377 = vmul.f32 %v318, %v355
    %v378 = vmul.f32 %v321, %v355
    %v379 = vmul.f32 %v324, %v355
    %v380 = vmul.f32 %v327, %v355
    %v381 = vmul.f32 %v330, %v355
    %v382 = vmul.f32 %v333, %v355
    %v383 = vmul.f32 %v336, %v355
    %v384 = vmul.f32 %v339, %v355
    %v385 = vmul.f32 %v342, %v355
    %v386 = vmul.f32 %v345, %v355
    %v387 = vmul.f32 %v348, %v355
    %v388 = vmul.f32 %v173, %v173
    %v389 = vmul.f32 %v175, %v175
    %v390 = vmul.f32 %v178, %v178
    %v391 = vmul.f32 %v180, %v180
    %v392 = vmul.f32 %v183, %v183
    %v393 = vmul.f32 %v185, %v185
    %v394 = vmul.f32 %v188, %v188
    %v395 = vmul.f32 %v190, %v190
    %v396 = vmul.f32 %v193, %v193
    %v397 = vmul.f32 %v195, %v195
    %v398 = vmul.f32 %v198, %v198
    %v399 = vmul.f32 %v200, %v200
    %v400 = vmul.f32 %v203, %v203
    %v401 = vmul.f32 %v205, %v205
    %v402 = vmul.f32 %v208, %v208
    %v403 = vmul.f32 %v210, %v210
    %v404 = vmul.f32 %v213, %v213
    %v405 = vmul.f32 %v215, %v215
    %v406 = vmul.f32 %v218, %v218
    %v407 = vmul.f32 %v220, %v220
    %v408 = vmul.f32 %v223, %v223
    %v409 = vmul.f32 %v225, %v225
    %v410 = vmul.f32 %v228, %v228
    %v411 = vmul.f32 %v230, %v230
    %v412 = vmul.f32 %v233, %v233
    %v413 = vmul.f32 %v235, %v235
    %v414 = vmul.f32 %v238, %v238
    %v415 = vmul.f32 %v240, %v240
    %v416 = vmul.f32 %v243, %v243
    %v417 = vmul.f32 %v245, %v245
    %v418 = vmul.f32 %v248, %v248
    %v419 = vmul.f32 %v250, %v250
    %v420 = vsel %vm252, %v388, 0.0
    %421 = vadd.xlane.f32.xlu0 %v420
    %v422 = vpop.xlane.xlu0 %421
    %v423 = vsel %vm252, %v389, 0.0
    %424 = vadd.xlane.f32.xlu0 %v423
    %v425 = vpop.xlane.xlu0 %424
    %v426 = vsel %vm252, %v390, 0.0
    %427 = vadd.xlane.f32.xlu0 %v426
    %v428 = vpop.xlane.xlu0 %427
    %v429 = vsel %vm252, %v391, 0.0
    %430 = vadd.xlane.f32.xlu0 %v429
    %v431 = vpop.xlane.xlu0 %430
    %v432 = vsel %vm252, %v392, 0.0
    %433 = vadd.xlane.f32.xlu0 %v432
    %v434 = vpop.xlane.xlu0 %433
    %v435 = vsel %vm252, %v393, 0.0
    %436 = vadd.xlane.f32.xlu0 %v435
    %v437 = vpop.xlane.xlu0 %436
    %v438 = vsel %vm252, %v394, 0.0
    %439 = vadd.xlane.f32.xlu0 %v438
    %v440 = vpop.xlane.xlu0 %439
    %v441 = vsel %vm252, %v395, 0.0
    %442 = vadd.xlane.f32.xlu0 %v441
    %v443 = vpop.xlane.xlu0 %442
    %v444 = vsel %vm252, %v396, 0.0
    %445 = vadd.xlane.f32.xlu0 %v444
    %v446 = vpop.xlane.xlu0 %445
    %v447 = vsel %vm252, %v397, 0.0
    %448 = vadd.xlane.f32.xlu0 %v447
    %v449 = vpop.xlane.xlu0 %448
    %v450 = vsel %vm252, %v398, 0.0
    %451 = vadd.xlane.f32.xlu0 %v450
    %v452 = vpop.xlane.xlu0 %451
    %v453 = vsel %vm252, %v399, 0.0
    %454 = vadd.xlane.f32.xlu0 %v453
    %v455 = vpop.xlane.xlu0 %454
    %v456 = vsel %vm252, %v400, 0.0
    %457 = vadd.xlane.f32.xlu0 %v456
    %v458 = vpop.xlane.xlu0 %457
    %v459 = vsel %vm252, %v401, 0.0
    %460 = vadd.xlane.f32.xlu0 %v459
    %v461 = vpop.xlane.xlu0 %460
    %v462 = vsel %vm252, %v402, 0.0
    %463 = vadd.xlane.f32.xlu0 %v462
    %v464 = vpop.xlane.xlu0 %463
    %v465 = vsel %vm252, %v403, 0.0
    %466 = vadd.xlane.f32.xlu0 %v465
    %v467 = vpop.xlane.xlu0 %466
    %v468 = vsel %vm252, %v404, 0.0
    %469 = vadd.xlane.f32.xlu0 %v468
    %v470 = vpop.xlane.xlu0 %469
    %v471 = vsel %vm252, %v405, 0.0
    %472 = vadd.xlane.f32.xlu0 %v471
    %v473 = vpop.xlane.xlu0 %472
    %v474 = vsel %vm252, %v406, 0.0
    %475 = vadd.xlane.f32.xlu0 %v474
    %v476 = vpop.xlane.xlu0 %475
    %v477 = vsel %vm252, %v407, 0.0
    %478 = vadd.xlane.f32.xlu0 %v477
    %v479 = vpop.xlane.xlu0 %478
    %v480 = vsel %vm252, %v408, 0.0
    %481 = vadd.xlane.f32.xlu0 %v480
    %v482 = vpop.xlane.xlu0 %481
    %v483 = vsel %vm252, %v409, 0.0
    %484 = vadd.xlane.f32.xlu0 %v483
    %v485 = vpop.xlane.xlu0 %484
    %v486 = vsel %vm252, %v410, 0.0
    %487 = vadd.xlane.f32.xlu0 %v486
    %v488 = vpop.xlane.xlu0 %487
    %v489 = vsel %vm252, %v411, 0.0
    %490 = vadd.xlane.f32.xlu0 %v489
    %v491 = vpop.xlane.xlu0 %490
    %v492 = vsel %vm252, %v412, 0.0
    %493 = vadd.xlane.f32.xlu0 %v492
    %v494 = vpop.xlane.xlu0 %493
    %v495 = vsel %vm252, %v413, 0.0
    %496 = vadd.xlane.f32.xlu0 %v495
    %v497 = vpop.xlane.xlu0 %496
    %v498 = vsel %vm252, %v414, 0.0
    %499 = vadd.xlane.f32.xlu0 %v498
    %v500 = vpop.xlane.xlu0 %499
    %v501 = vsel %vm252, %v415, 0.0
    %502 = vadd.xlane.f32.xlu0 %v501
    %v503 = vpop.xlane.xlu0 %502
    %v504 = vsel %vm252, %v416, 0.0
    %505 = vadd.xlane.f32.xlu0 %v504
    %v506 = vpop.xlane.xlu0 %505
    %v507 = vsel %vm252, %v417, 0.0
    %508 = vadd.xlane.f32.xlu0 %v507
    %v509 = vpop.xlane.xlu0 %508
    %v510 = vsel %vm252, %v418, 0.0
    %511 = vadd.xlane.f32.xlu0 %v510
    %v512 = vpop.xlane.xlu0 %511
    %v513 = vsel %vm252, %v419, 0.0
    %514 = vadd.xlane.f32.xlu0 %v513
    %v515 = vpop.xlane.xlu0 %514
    %v516 = vmul.f32 %v422, %v355
    %v517 = vmul.f32 %v425, %v355
    %v518 = vmul.f32 %v428, %v355
    %v519 = vmul.f32 %v431, %v355
    %v520 = vmul.f32 %v434, %v355
    %v521 = vmul.f32 %v437, %v355
    %v522 = vmul.f32 %v440, %v355
    %v523 = vmul.f32 %v443, %v355
    %v524 = vmul.f32 %v446, %v355
    %v525 = vmul.f32 %v449, %v355
    %v526 = vmul.f32 %v452, %v355
    %v527 = vmul.f32 %v455, %v355
    %v528 = vmul.f32 %v458, %v355
    %v529 = vmul.f32 %v461, %v355
    %v530 = vmul.f32 %v464, %v355
    %v531 = vmul.f32 %v467, %v355
    %v532 = vmul.f32 %v470, %v355
    %v533 = vmul.f32 %v473, %v355
    %v534 = vmul.f32 %v476, %v355
    %v535 = vmul.f32 %v479, %v355
    %v536 = vmul.f32 %v482, %v355
    %v537 = vmul.f32 %v485, %v355
    %v538 = vmul.f32 %v488, %v355
    %v539 = vmul.f32 %v491, %v355
    %v540 = vmul.f32 %v494, %v355
    %v541 = vmul.f32 %v497, %v355
    %v542 = vmul.f32 %v500, %v355
    %v543 = vmul.f32 %v503, %v355
    %v544 = vmul.f32 %v506, %v355
    %v545 = vmul.f32 %v509, %v355
    %v546 = vmul.f32 %v512, %v355
    %v547 = vmul.f32 %v515, %v355
    %v548 = vmul.f32 %v356, %v356
    %v549 = vmul.f32 %v357, %v357
    %v550 = vmul.f32 %v358, %v358
    %v551 = vmul.f32 %v359, %v359
    %v552 = vmul.f32 %v360, %v360
    %v553 = vmul.f32 %v361, %v361
    %v554 = vmul.f32 %v362, %v362
    %v555 = vmul.f32 %v363, %v363
    %v556 = vmul.f32 %v364, %v364
    %v557 = vmul.f32 %v365, %v365
    %v558 = vmul.f32 %v366, %v366
    %v559 = vmul.f32 %v367, %v367
    %v560 = vmul.f32 %v368, %v368
    %v561 = vmul.f32 %v369, %v369
    %v562 = vmul.f32 %v370, %v370
    %v563 = vmul.f32 %v371, %v371
    %v564 = vmul.f32 %v372, %v372
    %v565 = vmul.f32 %v373, %v373
    %v566 = vmul.f32 %v374, %v374
    %v567 = vmul.f32 %v375, %v375
    %v568 = vmul.f32 %v376, %v376
    %v569 = vmul.f32 %v377, %v377
    %v570 = vmul.f32 %v378, %v378
    %v571 = vmul.f32 %v379, %v379
    %v572 = vmul.f32 %v380, %v380
    %v573 = vmul.f32 %v381, %v381
    %v574 = vmul.f32 %v382, %v382
    %v575 = vmul.f32 %v383, %v383
    %v576 = vmul.f32 %v384, %v384
    %v577 = vmul.f32 %v385, %v385
    %v578 = vmul.f32 %v386, %v386
    %v579 = vmul.f32 %v387, %v387
    %v580 = vsub.f32 %v516, %v548
    %v581 = vsub.f32 %v517, %v549
    %v582 = vsub.f32 %v518, %v550
    %v583 = vsub.f32 %v519, %v551
    %v584 = vsub.f32 %v520, %v552
    %v585 = vsub.f32 %v521, %v553
    %v586 = vsub.f32 %v522, %v554
    %v587 = vsub.f32 %v523, %v555
    %v588 = vsub.f32 %v524, %v556
    %v589 = vsub.f32 %v525, %v557
    %v590 = vsub.f32 %v526, %v558
    %v591 = vsub.f32 %v527, %v559
    %v592 = vsub.f32 %v528, %v560
    %v593 = vsub.f32 %v529, %v561
    %v594 = vsub.f32 %v530, %v562
    %v595 = vsub.f32 %v531, %v563
    %v596 = vsub.f32 %v532, %v564
    %v597 = vsub.f32 %v533, %v565
    %v598 = vsub.f32 %v534, %v566
    %v599 = vsub.f32 %v535, %v567
    %v600 = vsub.f32 %v536, %v568
    %v601 = vsub.f32 %v537, %v569
    %v602 = vsub.f32 %v538, %v570
    %v603 = vsub.f32 %v539, %v571
    %v604 = vsub.f32 %v540, %v572
    %v605 = vsub.f32 %v541, %v573
    %v606 = vsub.f32 %v542, %v574
    %v607 = vsub.f32 %v543, %v575
    %v608 = vsub.f32 %v544, %v576
    %v609 = vsub.f32 %v545, %v577
    %v610 = vsub.f32 %v546, %v578
    %v611 = vsub.f32 %v547, %v579
    %v612 = vmax.f32 %v580, 0.0
    %v613 = vmax.f32 %v581, 0.0
    %v614 = vmax.f32 %v582, 0.0
    %v615 = vmax.f32 %v583, 0.0
    %v616 = vmax.f32 %v584, 0.0
    %v617 = vmax.f32 %v585, 0.0
    %v618 = vmax.f32 %v586, 0.0
    %v619 = vmax.f32 %v587, 0.0
    %v620 = vmax.f32 %v588, 0.0
    %v621 = vmax.f32 %v589, 0.0
    %v622 = vmax.f32 %v590, 0.0
    %v623 = vmax.f32 %v591, 0.0
    %v624 = vmax.f32 %v592, 0.0
    %v625 = vmax.f32 %v593, 0.0
    %v626 = vmax.f32 %v594, 0.0
    %v627 = vmax.f32 %v595, 0.0
    %v628 = vmax.f32 %v596, 0.0
    %v629 = vmax.f32 %v597, 0.0
    %v630 = vmax.f32 %v598, 0.0
    %v631 = vmax.f32 %v599, 0.0
    %v632 = vmax.f32 %v600, 0.0
    %v633 = vmax.f32 %v601, 0.0
    %v634 = vmax.f32 %v602, 0.0
    %v635 = vmax.f32 %v603, 0.0
    %v636 = vmax.f32 %v604, 0.0
    %v637 = vmax.f32 %v605, 0.0
    %v638 = vmax.f32 %v606, 0.0
    %v639 = vmax.f32 %v607, 0.0
    %v640 = vmax.f32 %v608, 0.0
    %v641 = vmax.f32 %v609, 0.0
    %v642 = vmax.f32 %v610, 0.0
    %v643 = vmax.f32 %v611, 0.0
    %v644 = vsub.f32 %v173, %v356
    %v645 = vsub.f32 %v175, %v357
    %v646 = vsub.f32 %v178, %v358
    %v647 = vsub.f32 %v180, %v359
    %v648 = vsub.f32 %v183, %v360
    %v649 = vsub.f32 %v185, %v361
    %v650 = vsub.f32 %v188, %v362
    %v651 = vsub.f32 %v190, %v363
    %v652 = vsub.f32 %v193, %v364
    %v653 = vsub.f32 %v195, %v365
    %v654 = vsub.f32 %v198, %v366
    %v655 = vsub.f32 %v200, %v367
    %v656 = vsub.f32 %v203, %v368
    %v657 = vsub.f32 %v205, %v369
    %v658 = vsub.f32 %v208, %v370
    %v659 = vsub.f32 %v210, %v371
    %v660 = vsub.f32 %v213, %v372
    %v661 = vsub.f32 %v215, %v373
    %v662 = vsub.f32 %v218, %v374
    %v663 = vsub.f32 %v220, %v375
    %v664 = vsub.f32 %v223, %v376
    %v665 = vsub.f32 %v225, %v377
    %v666 = vsub.f32 %v228, %v378
    %v667 = vsub.f32 %v230, %v379
    %v668 = vsub.f32 %v233, %v380
    %v669 = vsub.f32 %v235, %v381
    %v670 = vsub.f32 %v238, %v382
    %v671 = vsub.f32 %v240, %v383
    %v672 = vsub.f32 %v243, %v384
    %v673 = vsub.f32 %v245, %v385
    %v674 = vsub.f32 %v248, %v386
    %v675 = vsub.f32 %v250, %v387
    %v676 = vadd.f32 %v612, 1e-05
    %v677 = vadd.f32 %v613, 1e-05
    %v678 = vadd.f32 %v614, 1e-05
    %v679 = vadd.f32 %v615, 1e-05
    %v680 = vadd.f32 %v616, 1e-05
    %v681 = vadd.f32 %v617, 1e-05
    %v682 = vadd.f32 %v618, 1e-05
    %v683 = vadd.f32 %v619, 1e-05
    %v684 = vadd.f32 %v620, 1e-05
    %v685 = vadd.f32 %v621, 1e-05
    %v686 = vadd.f32 %v622, 1e-05
    %v687 = vadd.f32 %v623, 1e-05
    %v688 = vadd.f32 %v624, 1e-05
    %v689 = vadd.f32 %v625, 1e-05
    %v690 = vadd.f32 %v626, 1e-05
    %v691 = vadd.f32 %v627, 1e-05
    %v692 = vadd.f32 %v628, 1e-05
    %v693 = vadd.f32 %v629, 1e-05
    %v694 = vadd.f32 %v630, 1e-05
    %v695 = vadd.f32 %v631, 1e-05
    %v696 = vadd.f32 %v632, 1e-05
    %v697 = vadd.f32 %v633, 1e-05
    %v698 = vadd.f32 %v634, 1e-05
    %v699 = vadd.f32 %v635, 1e-05
    %v700 = vadd.f32 %v636, 1e-05
    %v701 = vadd.f32 %v637, 1e-05
    %v702 = vadd.f32 %v638, 1e-05
    %v703 = vadd.f32 %v639, 1e-05
    %v704 = vadd.f32 %v640, 1e-05
    %v705 = vadd.f32 %v641, 1e-05
    %v706 = vadd.f32 %v642, 1e-05
    %v707 = vadd.f32 %v643, 1e-05
    %v708 = vrsqrt.pop %v676
    %v709 = vmul.f32 %v708, %v676
    %v710 = vmul.f32 %v709, %v708
    %v711 = vmul.f32 0.5, %v710
    %v712 = vsub.f32 1.5, %v711
    %v713 = vmul.f32 %v708, %v712
    %vm714 = vweird.f32 %v676
    %vm715 = vweird.f32 %v708
    %vm716 = vmor %vm714, %vm715
    %v717 = vsel %vm716, %v708, %v713
    %v718 = vrsqrt.pop %v677
    %v719 = vmul.f32 %v718, %v677
    %v720 = vmul.f32 %v719, %v718
    %v721 = vmul.f32 0.5, %v720
    %v722 = vsub.f32 1.5, %v721
    %v723 = vmul.f32 %v718, %v722
    %vm724 = vweird.f32 %v677
    %vm725 = vweird.f32 %v718
    %vm726 = vmor %vm724, %vm725
    %v727 = vsel %vm726, %v718, %v723
    %v728 = vrsqrt.pop %v678
    %v729 = vmul.f32 %v728, %v678
    %v730 = vmul.f32 %v729, %v728
    %v731 = vmul.f32 0.5, %v730
    %v732 = vsub.f32 1.5, %v731
    %v733 = vmul.f32 %v728, %v732
    %vm734 = vweird.f32 %v678
    %vm735 = vweird.f32 %v728
    %vm736 = vmor %vm734, %vm735
    %v737 = vsel %vm736, %v728, %v733
    %v738 = vrsqrt.pop %v679
    %v739 = vmul.f32 %v738, %v679
    %v740 = vmul.f32 %v739, %v738
    %v741 = vmul.f32 0.5, %v740
    %v742 = vsub.f32 1.5, %v741
    %v743 = vmul.f32 %v738, %v742
    %vm744 = vweird.f32 %v679
    %vm745 = vweird.f32 %v738
    %vm746 = vmor %vm744, %vm745
    %v747 = vsel %vm746, %v738, %v743
    %v748 = vrsqrt.pop %v680
    %v749 = vmul.f32 %v748, %v680
    %v750 = vmul.f32 %v749, %v748
    %v751 = vmul.f32 0.5, %v750
    %v752 = vsub.f32 1.5, %v751
    %v753 = vmul.f32 %v748, %v752
    %vm754 = vweird.f32 %v680
    %vm755 = vweird.f32 %v748
    %vm756 = vmor %vm754, %vm755
    %v757 = vsel %vm756, %v748, %v753
    %v758 = vrsqrt.pop %v681
    %v759 = vmul.f32 %v758, %v681
    %v760 = vmul.f32 %v759, %v758
    %v761 = vmul.f32 0.5, %v760
    %v762 = vsub.f32 1.5, %v761
    %v763 = vmul.f32 %v758, %v762
    %vm764 = vweird.f32 %v681
    %vm765 = vweird.f32 %v758
    %vm766 = vmor %vm764, %vm765
    %v767 = vsel %vm766, %v758, %v763
    %v768 = vrsqrt.pop %v682
    %v769 = vmul.f32 %v768, %v682
    %v770 = vmul.f32 %v769, %v768
    %v771 = vmul.f32 0.5, %v770
    %v772 = vsub.f32 1.5, %v771
    %v773 = vmul.f32 %v768, %v772
    %vm774 = vweird.f32 %v682
    %vm775 = vweird.f32 %v768
    %vm776 = vmor %vm774, %vm775
    %v777 = vsel %vm776, %v768, %v773
    %v778 = vrsqrt.pop %v683
    %v779 = vmul.f32 %v778, %v683
    %v780 = vmul.f32 %v779, %v778
    %v781 = vmul.f32 0.5, %v780
    %v782 = vsub.f32 1.5, %v781
    %v783 = vmul.f32 %v778, %v782
    %vm784 = vweird.f32 %v683
    %vm785 = vweird.f32 %v778
    %vm786 = vmor %vm784, %vm785
    %v787 = vsel %vm786, %v778, %v783
    %v788 = vrsqrt.pop %v684
    %v789 = vmul.f32 %v788, %v684
    %v790 = vmul.f32 %v789, %v788
    %v791 = vmul.f32 0.5, %v790
    %v792 = vsub.f32 1.5, %v791
    %v793 = vmul.f32 %v788, %v792
    %vm794 = vweird.f32 %v684
    %vm795 = vweird.f32 %v788
    %vm796 = vmor %vm794, %vm795
    %v797 = vsel %vm796, %v788, %v793
    %v798 = vrsqrt.pop %v685
    %v799 = vmul.f32 %v798, %v685
    %v800 = vmul.f32 %v799, %v798
    %v801 = vmul.f32 0.5, %v800
    %v802 = vsub.f32 1.5, %v801
    %v803 = vmul.f32 %v798, %v802
    %vm804 = vweird.f32 %v685
    %vm805 = vweird.f32 %v798
    %vm806 = vmor %vm804, %vm805
    %v807 = vsel %vm806, %v798, %v803
    %v808 = vrsqrt.pop %v686
    %v809 = vmul.f32 %v808, %v686
    %v810 = vmul.f32 %v809, %v808
    %v811 = vmul.f32 0.5, %v810
    %v812 = vsub.f32 1.5, %v811
    %v813 = vmul.f32 %v808, %v812
    %vm814 = vweird.f32 %v686
    %vm815 = vweird.f32 %v808
    %vm816 = vmor %vm814, %vm815
    %v817 = vsel %vm816, %v808, %v813
    %v818 = vrsqrt.pop %v687
    %v819 = vmul.f32 %v818, %v687
    %v820 = vmul.f32 %v819, %v818
    %v821 = vmul.f32 0.5, %v820
    %v822 = vsub.f32 1.5, %v821
    %v823 = vmul.f32 %v818, %v822
    %vm824 = vweird.f32 %v687
    %vm825 = vweird.f32 %v818
    %vm826 = vmor %vm824, %vm825
    %v827 = vsel %vm826, %v818, %v823
    %v828 = vrsqrt.pop %v688
    %v829 = vmul.f32 %v828, %v688
    %v830 = vmul.f32 %v829, %v828
    %v831 = vmul.f32 0.5, %v830
    %v832 = vsub.f32 1.5, %v831
    %v833 = vmul.f32 %v828, %v832
    %vm834 = vweird.f32 %v688
    %vm835 = vweird.f32 %v828
    %vm836 = vmor %vm834, %vm835
    %v837 = vsel %vm836, %v828, %v833
    %v838 = vrsqrt.pop %v689
    %v839 = vmul.f32 %v838, %v689
    %v840 = vmul.f32 %v839, %v838
    %v841 = vmul.f32 0.5, %v840
    %v842 = vsub.f32 1.5, %v841
    %v843 = vmul.f32 %v838, %v842
    %vm844 = vweird.f32 %v689
    %vm845 = vweird.f32 %v838
    %vm846 = vmor %vm844, %vm845
    %v847 = vsel %vm846, %v838, %v843
    %v848 = vrsqrt.pop %v690
    %v849 = vmul.f32 %v848, %v690
    %v850 = vmul.f32 %v849, %v848
    %v851 = vmul.f32 0.5, %v850
    %v852 = vsub.f32 1.5, %v851
    %v853 = vmul.f32 %v848, %v852
    %vm854 = vweird.f32 %v690
    %vm855 = vweird.f32 %v848
    %vm856 = vmor %vm854, %vm855
    %v857 = vsel %vm856, %v848, %v853
    %v858 = vrsqrt.pop %v691
    %v859 = vmul.f32 %v858, %v691
    %v860 = vmul.f32 %v859, %v858
    %v861 = vmul.f32 0.5, %v860
    %v862 = vsub.f32 1.5, %v861
    %v863 = vmul.f32 %v858, %v862
    %vm864 = vweird.f32 %v691
    %vm865 = vweird.f32 %v858
    %vm866 = vmor %vm864, %vm865
    %v867 = vsel %vm866, %v858, %v863
    %v868 = vrsqrt.pop %v692
    %v869 = vmul.f32 %v868, %v692
    %v870 = vmul.f32 %v869, %v868
    %v871 = vmul.f32 0.5, %v870
    %v872 = vsub.f32 1.5, %v871
    %v873 = vmul.f32 %v868, %v872
    %vm874 = vweird.f32 %v692
    %vm875 = vweird.f32 %v868
    %vm876 = vmor %vm874, %vm875
    %v877 = vsel %vm876, %v868, %v873
    %v878 = vrsqrt.pop %v693
    %v879 = vmul.f32 %v878, %v693
    %v880 = vmul.f32 %v879, %v878
    %v881 = vmul.f32 0.5, %v880
    %v882 = vsub.f32 1.5, %v881
    %v883 = vmul.f32 %v878, %v882
    %vm884 = vweird.f32 %v693
    %vm885 = vweird.f32 %v878
    %vm886 = vmor %vm884, %vm885
    %v887 = vsel %vm886, %v878, %v883
    %v888 = vrsqrt.pop %v694
    %v889 = vmul.f32 %v888, %v694
    %v890 = vmul.f32 %v889, %v888
    %v891 = vmul.f32 0.5, %v890
    %v892 = vsub.f32 1.5, %v891
    %v893 = vmul.f32 %v888, %v892
    %vm894 = vweird.f32 %v694
    %vm895 = vweird.f32 %v888
    %vm896 = vmor %vm894, %vm895
    %v897 = vsel %vm896, %v888, %v893
    %v898 = vrsqrt.pop %v695
    %v899 = vmul.f32 %v898, %v695
    %v900 = vmul.f32 %v899, %v898
    %v901 = vmul.f32 0.5, %v900
    %v902 = vsub.f32 1.5, %v901
    %v903 = vmul.f32 %v898, %v902
    %vm904 = vweird.f32 %v695
    %vm905 = vweird.f32 %v898
    %vm906 = vmor %vm904, %vm905
    %v907 = vsel %vm906, %v898, %v903
    %v908 = vrsqrt.pop %v696
    %v909 = vmul.f32 %v908, %v696
    %v910 = vmul.f32 %v909, %v908
    %v911 = vmul.f32 0.5, %v910
    %v912 = vsub.f32 1.5, %v911
    %v913 = vmul.f32 %v908, %v912
    %vm914 = vweird.f32 %v696
    %vm915 = vweird.f32 %v908
    %vm916 = vmor %vm914, %vm915
    %v917 = vsel %vm916, %v908, %v913
    %v918 = vrsqrt.pop %v697
    %v919 = vmul.f32 %v918, %v697
    %v920 = vmul.f32 %v919, %v918
    %v921 = vmul.f32 0.5, %v920
    %v922 = vsub.f32 1.5, %v921
    %v923 = vmul.f32 %v918, %v922
    %vm924 = vweird.f32 %v697
    %vm925 = vweird.f32 %v918
    %vm926 = vmor %vm924, %vm925
    %v927 = vsel %vm926, %v918, %v923
    %v928 = vrsqrt.pop %v698
    %v929 = vmul.f32 %v928, %v698
    %v930 = vmul.f32 %v929, %v928
    %v931 = vmul.f32 0.5, %v930
    %v932 = vsub.f32 1.5, %v931
    %v933 = vmul.f32 %v928, %v932
    %vm934 = vweird.f32 %v698
    %vm935 = vweird.f32 %v928
    %vm936 = vmor %vm934, %vm935
    %v937 = vsel %vm936, %v928, %v933
    %v938 = vrsqrt.pop %v699
    %v939 = vmul.f32 %v938, %v699
    %v940 = vmul.f32 %v939, %v938
    %v941 = vmul.f32 0.5, %v940
    %v942 = vsub.f32 1.5, %v941
    %v943 = vmul.f32 %v938, %v942
    %vm944 = vweird.f32 %v699
    %vm945 = vweird.f32 %v938
    %vm946 = vmor %vm944, %vm945
    %v947 = vsel %vm946, %v938, %v943
    %v948 = vrsqrt.pop %v700
    %v949 = vmul.f32 %v948, %v700
    %v950 = vmul.f32 %v949, %v948
    %v951 = vmul.f32 0.5, %v950
    %v952 = vsub.f32 1.5, %v951
    %v953 = vmul.f32 %v948, %v952
    %vm954 = vweird.f32 %v700
    %vm955 = vweird.f32 %v948
    %vm956 = vmor %vm954, %vm955
    %v957 = vsel %vm956, %v948, %v953
    %v958 = vrsqrt.pop %v701
    %v959 = vmul.f32 %v958, %v701
    %v960 = vmul.f32 %v959, %v958
    %v961 = vmul.f32 0.5, %v960
    %v962 = vsub.f32 1.5, %v961
    %v963 = vmul.f32 %v958, %v962
    %vm964 = vweird.f32 %v701
    %vm965 = vweird.f32 %v958
    %vm966 = vmor %vm964, %vm965
    %v967 = vsel %vm966, %v958, %v963
    %v968 = vrsqrt.pop %v702
    %v969 = vmul.f32 %v968, %v702
    %v970 = vmul.f32 %v969, %v968
    %v971 = vmul.f32 0.5, %v970
    %v972 = vsub.f32 1.5, %v971
    %v973 = vmul.f32 %v968, %v972
    %vm974 = vweird.f32 %v702
    %vm975 = vweird.f32 %v968
    %vm976 = vmor %vm974, %vm975
    %v977 = vsel %vm976, %v968, %v973
    %v978 = vrsqrt.pop %v703
    %v979 = vmul.f32 %v978, %v703
    %v980 = vmul.f32 %v979, %v978
    %v981 = vmul.f32 0.5, %v980
    %v982 = vsub.f32 1.5, %v981
    %v983 = vmul.f32 %v978, %v982
    %vm984 = vweird.f32 %v703
    %vm985 = vweird.f32 %v978
    %vm986 = vmor %vm984, %vm985
    %v987 = vsel %vm986, %v978, %v983
    %v988 = vrsqrt.pop %v704
    %v989 = vmul.f32 %v988, %v704
    %v990 = vmul.f32 %v989, %v988
    %v991 = vmul.f32 0.5, %v990
    %v992 = vsub.f32 1.5, %v991
    %v993 = vmul.f32 %v988, %v992
    %vm994 = vweird.f32 %v704
    %vm995 = vweird.f32 %v988
    %vm996 = vmor %vm994, %vm995
    %v997 = vsel %vm996, %v988, %v993
    %v998 = vrsqrt.pop %v705
    %v999 = vmul.f32 %v998, %v705
    %v1000 = vmul.f32 %v999, %v998
    %v1001 = vmul.f32 0.5, %v1000
    %v1002 = vsub.f32 1.5, %v1001
    %v1003 = vmul.f32 %v998, %v1002
    %vm1004 = vweird.f32 %v705
    %vm1005 = vweird.f32 %v998
    %vm1006 = vmor %vm1004, %vm1005
    %v1007 = vsel %vm1006, %v998, %v1003
    %v1008 = vrsqrt.pop %v706
    %v1009 = vmul.f32 %v1008, %v706
    %v1010 = vmul.f32 %v1009, %v1008
    %v1011 = vmul.f32 0.5, %v1010
    %v1012 = vsub.f32 1.5, %v1011
    %v1013 = vmul.f32 %v1008, %v1012
    %vm1014 = vweird.f32 %v706
    %vm1015 = vweird.f32 %v1008
    %vm1016 = vmor %vm1014, %vm1015
    %v1017 = vsel %vm1016, %v1008, %v1013
    %v1018 = vrsqrt.pop %v707
    %v1019 = vmul.f32 %v1018, %v707
    %v1020 = vmul.f32 %v1019, %v1018
    %v1021 = vmul.f32 0.5, %v1020
    %v1022 = vsub.f32 1.5, %v1021
    %v1023 = vmul.f32 %v1018, %v1022
    %vm1024 = vweird.f32 %v707
    %vm1025 = vweird.f32 %v1018
    %vm1026 = vmor %vm1024, %vm1025
    %v1027 = vsel %vm1026, %v1018, %v1023
    %v1028 = vmul.f32 %v644, %v717
    %v1029 = vmul.f32 %v645, %v727
    %v1030 = vmul.f32 %v646, %v737
    %v1031 = vmul.f32 %v647, %v747
    %v1032 = vmul.f32 %v648, %v757
    %v1033 = vmul.f32 %v649, %v767
    %v1034 = vmul.f32 %v650, %v777
    %v1035 = vmul.f32 %v651, %v787
    %v1036 = vmul.f32 %v652, %v797
    %v1037 = vmul.f32 %v653, %v807
    %v1038 = vmul.f32 %v654, %v817
    %v1039 = vmul.f32 %v655, %v827
    %v1040 = vmul.f32 %v656, %v837
    %v1041 = vmul.f32 %v657, %v847
    %v1042 = vmul.f32 %v658, %v857
    %v1043 = vmul.f32 %v659, %v867
    %v1044 = vmul.f32 %v660, %v877
    %v1045 = vmul.f32 %v661, %v887
    %v1046 = vmul.f32 %v662, %v897
    %v1047 = vmul.f32 %v663, %v907
    %v1048 = vmul.f32 %v664, %v917
    %v1049 = vmul.f32 %v665, %v927
    %v1050 = vmul.f32 %v666, %v937
    %v1051 = vmul.f32 %v667, %v947
    %v1052 = vmul.f32 %v668, %v957
    %v1053 = vmul.f32 %v669, %v967
    %v1054 = vmul.f32 %v670, %v977
    %v1055 = vmul.f32 %v671, %v987
    %v1056 = vmul.f32 %v672, %v997
    %v1057 = vmul.f32 %v673, %v1007
    %v1058 = vmul.f32 %v674, %v1017
    %v1059 = vmul.f32 %v675, %v1027
    %v1060 = vperm.slane %v63, 1
    %v1061 = vmul.f32 %v1028, %v1060
    %v1062 = vmul.f32 %v1029, %v1060
    %v1063 = vmul.f32 %v1030, %v1060
    %v1064 = vmul.f32 %v1031, %v1060
    %v1065 = vmul.f32 %v1032, %v1060
    %v1066 = vmul.f32 %v1033, %v1060
    %v1067 = vmul.f32 %v1034, %v1060
    %v1068 = vmul.f32 %v1035, %v1060
    %v1069 = vmul.f32 %v1036, %v1060
    %v1070 = vmul.f32 %v1037, %v1060
    %v1071 = vmul.f32 %v1038, %v1060
    %v1072 = vmul.f32 %v1039, %v1060
    %v1073 = vmul.f32 %v1040, %v1060
    %v1074 = vmul.f32 %v1041, %v1060
    %v1075 = vmul.f32 %v1042, %v1060
    %v1076 = vmul.f32 %v1043, %v1060
    %v1077 = vmul.f32 %v1044, %v1060
    %v1078 = vmul.f32 %v1045, %v1060
    %v1079 = vmul.f32 %v1046, %v1060
    %v1080 = vmul.f32 %v1047, %v1060
    %v1081 = vmul.f32 %v1048, %v1060
    %v1082 = vmul.f32 %v1049, %v1060
    %v1083 = vmul.f32 %v1050, %v1060
    %v1084 = vmul.f32 %v1051, %v1060
    %v1085 = vmul.f32 %v1052, %v1060
    %v1086 = vmul.f32 %v1053, %v1060
    %v1087 = vmul.f32 %v1054, %v1060
    %v1088 = vmul.f32 %v1055, %v1060
    %v1089 = vmul.f32 %v1056, %v1060
    %v1090 = vmul.f32 %v1057, %v1060
    %v1091 = vmul.f32 %v1058, %v1060
    %v1092 = vmul.f32 %v1059, %v1060
    %v1093 = vperm.slane %v63, 2
    %v1094 = vadd.f32 %v1061, %v1093
    %v1095 = vadd.f32 %v1062, %v1093
    %v1096 = vadd.f32 %v1063, %v1093
    %v1097 = vadd.f32 %v1064, %v1093
    %v1098 = vadd.f32 %v1065, %v1093
    %v1099 = vadd.f32 %v1066, %v1093
    %v1100 = vadd.f32 %v1067, %v1093
    %v1101 = vadd.f32 %v1068, %v1093
    %v1102 = vadd.f32 %v1069, %v1093
    %v1103 = vadd.f32 %v1070, %v1093
    %v1104 = vadd.f32 %v1071, %v1093
    %v1105 = vadd.f32 %v1072, %v1093
    %v1106 = vadd.f32 %v1073, %v1093
    %v1107 = vadd.f32 %v1074, %v1093
    %v1108 = vadd.f32 %v1075, %v1093
    %v1109 = vadd.f32 %v1076, %v1093
    %v1110 = vadd.f32 %v1077, %v1093
    %v1111 = vadd.f32 %v1078, %v1093
    %v1112 = vadd.f32 %v1079, %v1093
    %v1113 = vadd.f32 %v1080, %v1093
    %v1114 = vadd.f32 %v1081, %v1093
    %v1115 = vadd.f32 %v1082, %v1093
    %v1116 = vadd.f32 %v1083, %v1093
    %v1117 = vadd.f32 %v1084, %v1093
    %v1118 = vadd.f32 %v1085, %v1093
    %v1119 = vadd.f32 %v1086, %v1093
    %v1120 = vadd.f32 %v1087, %v1093
    %v1121 = vadd.f32 %v1088, %v1093
    %v1122 = vadd.f32 %v1089, %v1093
    %v1123 = vadd.f32 %v1090, %v1093
    %v1124 = vadd.f32 %v1091, %v1093
    %v1125 = vadd.f32 %v1092, %v1093
    %v1126 = vmax.f32 %v1094, 0.0
    %v1127 = vmax.f32 %v1095, 0.0
    %v1128 = vmax.f32 %v1096, 0.0
    %v1129 = vmax.f32 %v1097, 0.0
    %v1130 = vmax.f32 %v1098, 0.0
    %v1131 = vmax.f32 %v1099, 0.0
    %v1132 = vmax.f32 %v1100, 0.0
    %v1133 = vmax.f32 %v1101, 0.0
    %v1134 = vmax.f32 %v1102, 0.0
    %v1135 = vmax.f32 %v1103, 0.0
    %v1136 = vmax.f32 %v1104, 0.0
    %v1137 = vmax.f32 %v1105, 0.0
    %v1138 = vmax.f32 %v1106, 0.0
    %v1139 = vmax.f32 %v1107, 0.0
    %v1140 = vmax.f32 %v1108, 0.0
    %v1141 = vmax.f32 %v1109, 0.0
    %v1142 = vmax.f32 %v1110, 0.0
    %v1143 = vmax.f32 %v1111, 0.0
    %v1144 = vmax.f32 %v1112, 0.0
    %v1145 = vmax.f32 %v1113, 0.0
    %v1146 = vmax.f32 %v1114, 0.0
    %v1147 = vmax.f32 %v1115, 0.0
    %v1148 = vmax.f32 %v1116, 0.0
    %v1149 = vmax.f32 %v1117, 0.0
    %v1150 = vmax.f32 %v1118, 0.0
    %v1151 = vmax.f32 %v1119, 0.0
    %v1152 = vmax.f32 %v1120, 0.0
    %v1153 = vmax.f32 %v1121, 0.0
    %v1154 = vmax.f32 %v1122, 0.0
    %v1155 = vmax.f32 %v1123, 0.0
    %v1156 = vmax.f32 %v1124, 0.0
    %v1157 = vmax.f32 %v1125, 0.0
    %v1158 = vpack.c.bf16 %v1127, %v1126
    %v1159 = vpack.c.bf16 %v1129, %v1128
    %v1160 = vpack.c.bf16 %v1131, %v1130
    %v1161 = vpack.c.bf16 %v1133, %v1132
    %v1162 = vpack.c.bf16 %v1135, %v1134
    %v1163 = vpack.c.bf16 %v1137, %v1136
    %v1164 = vpack.c.bf16 %v1139, %v1138
    %v1165 = vpack.c.bf16 %v1141, %v1140
    %v1166 = vpack.c.bf16 %v1143, %v1142
    %v1167 = vpack.c.bf16 %v1145, %v1144
    %v1168 = vpack.c.bf16 %v1147, %v1146
    %v1169 = vpack.c.bf16 %v1149, %v1148
    %v1170 = vpack.c.bf16 %v1151, %v1150
    %v1171 = vpack.c.bf16 %v1153, %v1152
    %v1172 = vpack.c.bf16 %v1155, %v1154
    %v1173 = vpack.c.bf16 %v1157, %v1156
    %v1174 = vld [vmem:[%s4] sm:$0xf]
    %v1175 = vld [vmem:[%s4 + $0x4] sm:$0xf]
    %v1176 = vld [vmem:[%s4 + $0x8] sm:$0xf]
    %v1177 = vld [vmem:[%s4 + $0xc] sm:$0xf]
    %v1178 = vperm.slane %v64, 0
    %v1183 = vunpack.c.l.b16 %v1174
    %v1184 = vunpack.c.l.b16 %v1175
    %v1185 = vunpack.c.l.b16 %v1176
    %v1186 = vunpack.c.l.b16 %v1177
    %v1187 = vpack.c.b16 %v1184, %v1183
    %v1188 = vpack.c.b16 %v1186, %v1185
    %v1192 = vsel %vm252, %v1158, 0
    %v1195 = vsel %vm252, %v1159, 0
    %v1198 = vsel %vm252, %v1160, 0
    %v1201 = vsel %vm252, %v1161, 0
    %v1204 = vsel %vm252, %v1162, 0
    %v1207 = vsel %vm252, %v1163, 0
    %v1210 = vsel %vm252, %v1164, 0
    %v1213 = vsel %vm252, %v1165, 0
    %v1216 = vsel %vm252, %v1166, 0
    %v1219 = vsel %vm252, %v1167, 0
    %v1222 = vsel %vm252, %v1168, 0
    %v1225 = vsel %vm252, %v1169, 0
    %v1228 = vsel %vm252, %v1170, 0
    %v1231 = vsel %vm252, %v1171, 0
    %v1234 = vsel %vm252, %v1172, 0
    %v1237 = vsel %vm252, %v1173, 0
    %1239 = vmatpush.bf16.msra.mxu0 0
    %1240 = vmatpush.bf16.msra.mxu0 0
    %1241 = vmatpush.bf16.msra.mxu0 0
    %1242 = vmatpush.bf16.msra.mxu0 0
    %1243 = vmatpush.bf16.msra.mxu0 0
    %1244 = vmatpush.bf16.msra.mxu0 0
    %1245 = vmatpush.bf16.msra.mxu0 %v1188
    %1246 = vmatpush.bf16.msra.mxu0 %v1187
    %1247 = vmatmul.bf16.gmra.mxu0 %v1192
    %v1248 = vpop.f32.mrf.mxu0
    %v1249 = vadd.f32 %v1178, %v1248
    %v1250 = vpop.f32.mrf.mxu0
    %v1251 = vadd.f32 %v1178, %v1250
    %1252 = vmatmul.bf16.gmra.mxu0 %v1195
    %v1253 = vpop.f32.mrf.mxu0
    %v1254 = vadd.f32 %v1178, %v1253
    %v1255 = vpop.f32.mrf.mxu0
    %v1256 = vadd.f32 %v1178, %v1255
    %1257 = vmatmul.bf16.gmra.mxu0 %v1198
    %v1258 = vpop.f32.mrf.mxu0
    %v1259 = vadd.f32 %v1178, %v1258
    %v1260 = vpop.f32.mrf.mxu0
    %v1261 = vadd.f32 %v1178, %v1260
    %1262 = vmatmul.bf16.gmra.mxu0 %v1201
    %v1263 = vpop.f32.mrf.mxu0
    %v1264 = vadd.f32 %v1178, %v1263
    %v1265 = vpop.f32.mrf.mxu0
    %v1266 = vadd.f32 %v1178, %v1265
    %1267 = vmatmul.bf16.gmra.mxu0 %v1204
    %v1268 = vpop.f32.mrf.mxu0
    %v1269 = vadd.f32 %v1178, %v1268
    %v1270 = vpop.f32.mrf.mxu0
    %v1271 = vadd.f32 %v1178, %v1270
    %1272 = vmatmul.bf16.gmra.mxu0 %v1207
    %v1273 = vpop.f32.mrf.mxu0
    %v1274 = vadd.f32 %v1178, %v1273
    %v1275 = vpop.f32.mrf.mxu0
    %v1276 = vadd.f32 %v1178, %v1275
    %1277 = vmatmul.bf16.gmra.mxu0 %v1210
    %v1278 = vpop.f32.mrf.mxu0
    %v1279 = vadd.f32 %v1178, %v1278
    %v1280 = vpop.f32.mrf.mxu0
    %v1281 = vadd.f32 %v1178, %v1280
    %1282 = vmatmul.bf16.gmra.mxu0 %v1213
    %v1283 = vpop.f32.mrf.mxu0
    %v1284 = vadd.f32 %v1178, %v1283
    %v1285 = vpop.f32.mrf.mxu0
    %v1286 = vadd.f32 %v1178, %v1285
    %1287 = vmatmul.bf16.gmra.mxu0 %v1216
    %v1288 = vpop.f32.mrf.mxu0
    %v1289 = vadd.f32 %v1178, %v1288
    %v1290 = vpop.f32.mrf.mxu0
    %v1291 = vadd.f32 %v1178, %v1290
    %1292 = vmatmul.bf16.gmra.mxu0 %v1219
    %v1293 = vpop.f32.mrf.mxu0
    %v1294 = vadd.f32 %v1178, %v1293
    %v1295 = vpop.f32.mrf.mxu0
    %v1296 = vadd.f32 %v1178, %v1295
    %1297 = vmatmul.bf16.gmra.mxu0 %v1222
    %v1298 = vpop.f32.mrf.mxu0
    %v1299 = vadd.f32 %v1178, %v1298
    %v1300 = vpop.f32.mrf.mxu0
    %v1301 = vadd.f32 %v1178, %v1300
    %1302 = vmatmul.bf16.gmra.mxu0 %v1225
    %v1303 = vpop.f32.mrf.mxu0
    %v1304 = vadd.f32 %v1178, %v1303
    %v1305 = vpop.f32.mrf.mxu0
    %v1306 = vadd.f32 %v1178, %v1305
    %1307 = vmatmul.bf16.gmra.mxu0 %v1228
    %v1308 = vpop.f32.mrf.mxu0
    %v1309 = vadd.f32 %v1178, %v1308
    %v1310 = vpop.f32.mrf.mxu0
    %v1311 = vadd.f32 %v1178, %v1310
    %1312 = vmatmul.bf16.gmra.mxu0 %v1231
    %v1313 = vpop.f32.mrf.mxu0
    %v1314 = vadd.f32 %v1178, %v1313
    %v1315 = vpop.f32.mrf.mxu0
    %v1316 = vadd.f32 %v1178, %v1315
    %1317 = vmatmul.bf16.gmra.mxu0 %v1234
    %v1318 = vpop.f32.mrf.mxu0
    %v1319 = vadd.f32 %v1178, %v1318
    %v1320 = vpop.f32.mrf.mxu0
    %v1321 = vadd.f32 %v1178, %v1320
    %1322 = vmatmul.bf16.gmra.mxu0 %v1237
    %v1323 = vpop.f32.mrf.mxu0
    %v1324 = vadd.f32 %v1178, %v1323
    %v1325 = vpop.f32.mrf.mxu0
    %v1326 = vadd.f32 %v1178, %v1325
    %1327 = vdwg.mxu0
    %vm1328 = vcmask 130048
    %v1329 = vsel %vm1328, %v1249, 0.0
    %1330 = vadd.xlane.f32.xlu0 %v1329
    %v1331 = vpop.xlane.xlu0 %1330
    %v1332 = vsel %vm1328, %v1251, 0.0
    %1333 = vadd.xlane.f32.xlu0 %v1332
    %v1334 = vpop.xlane.xlu0 %1333
    %v1335 = vsel %vm1328, %v1254, 0.0
    %1336 = vadd.xlane.f32.xlu0 %v1335
    %v1337 = vpop.xlane.xlu0 %1336
    %v1338 = vsel %vm1328, %v1256, 0.0
    %1339 = vadd.xlane.f32.xlu0 %v1338
    %v1340 = vpop.xlane.xlu0 %1339
    %v1341 = vsel %vm1328, %v1259, 0.0
    %1342 = vadd.xlane.f32.xlu0 %v1341
    %v1343 = vpop.xlane.xlu0 %1342
    %v1344 = vsel %vm1328, %v1261, 0.0
    %1345 = vadd.xlane.f32.xlu0 %v1344
    %v1346 = vpop.xlane.xlu0 %1345
    %v1347 = vsel %vm1328, %v1264, 0.0
    %1348 = vadd.xlane.f32.xlu0 %v1347
    %v1349 = vpop.xlane.xlu0 %1348
    %v1350 = vsel %vm1328, %v1266, 0.0
    %1351 = vadd.xlane.f32.xlu0 %v1350
    %v1352 = vpop.xlane.xlu0 %1351
    %v1353 = vsel %vm1328, %v1269, 0.0
    %1354 = vadd.xlane.f32.xlu0 %v1353
    %v1355 = vpop.xlane.xlu0 %1354
    %v1356 = vsel %vm1328, %v1271, 0.0
    %1357 = vadd.xlane.f32.xlu0 %v1356
    %v1358 = vpop.xlane.xlu0 %1357
    %v1359 = vsel %vm1328, %v1274, 0.0
    %1360 = vadd.xlane.f32.xlu0 %v1359
    %v1361 = vpop.xlane.xlu0 %1360
    %v1362 = vsel %vm1328, %v1276, 0.0
    %1363 = vadd.xlane.f32.xlu0 %v1362
    %v1364 = vpop.xlane.xlu0 %1363
    %v1365 = vsel %vm1328, %v1279, 0.0
    %1366 = vadd.xlane.f32.xlu0 %v1365
    %v1367 = vpop.xlane.xlu0 %1366
    %v1368 = vsel %vm1328, %v1281, 0.0
    %1369 = vadd.xlane.f32.xlu0 %v1368
    %v1370 = vpop.xlane.xlu0 %1369
    %v1371 = vsel %vm1328, %v1284, 0.0
    %1372 = vadd.xlane.f32.xlu0 %v1371
    %v1373 = vpop.xlane.xlu0 %1372
    %v1374 = vsel %vm1328, %v1286, 0.0
    %1375 = vadd.xlane.f32.xlu0 %v1374
    %v1376 = vpop.xlane.xlu0 %1375
    %v1377 = vsel %vm1328, %v1289, 0.0
    %1378 = vadd.xlane.f32.xlu0 %v1377
    %v1379 = vpop.xlane.xlu0 %1378
    %v1380 = vsel %vm1328, %v1291, 0.0
    %1381 = vadd.xlane.f32.xlu0 %v1380
    %v1382 = vpop.xlane.xlu0 %1381
    %v1383 = vsel %vm1328, %v1294, 0.0
    %1384 = vadd.xlane.f32.xlu0 %v1383
    %v1385 = vpop.xlane.xlu0 %1384
    %v1386 = vsel %vm1328, %v1296, 0.0
    %1387 = vadd.xlane.f32.xlu0 %v1386
    %v1388 = vpop.xlane.xlu0 %1387
    %v1389 = vsel %vm1328, %v1299, 0.0
    %1390 = vadd.xlane.f32.xlu0 %v1389
    %v1391 = vpop.xlane.xlu0 %1390
    %v1392 = vsel %vm1328, %v1301, 0.0
    %1393 = vadd.xlane.f32.xlu0 %v1392
    %v1394 = vpop.xlane.xlu0 %1393
    %v1395 = vsel %vm1328, %v1304, 0.0
    %1396 = vadd.xlane.f32.xlu0 %v1395
    %v1397 = vpop.xlane.xlu0 %1396
    %v1398 = vsel %vm1328, %v1306, 0.0
    %1399 = vadd.xlane.f32.xlu0 %v1398
    %v1400 = vpop.xlane.xlu0 %1399
    %v1401 = vsel %vm1328, %v1309, 0.0
    %1402 = vadd.xlane.f32.xlu0 %v1401
    %v1403 = vpop.xlane.xlu0 %1402
    %v1404 = vsel %vm1328, %v1311, 0.0
    %1405 = vadd.xlane.f32.xlu0 %v1404
    %v1406 = vpop.xlane.xlu0 %1405
    %v1407 = vsel %vm1328, %v1314, 0.0
    %1408 = vadd.xlane.f32.xlu0 %v1407
    %v1409 = vpop.xlane.xlu0 %1408
    %v1410 = vsel %vm1328, %v1316, 0.0
    %1411 = vadd.xlane.f32.xlu0 %v1410
    %v1412 = vpop.xlane.xlu0 %1411
    %v1413 = vsel %vm1328, %v1319, 0.0
    %1414 = vadd.xlane.f32.xlu0 %v1413
    %v1415 = vpop.xlane.xlu0 %1414
    %v1416 = vsel %vm1328, %v1321, 0.0
    %1417 = vadd.xlane.f32.xlu0 %v1416
    %v1418 = vpop.xlane.xlu0 %1417
    %v1419 = vsel %vm1328, %v1324, 0.0
    %1420 = vadd.xlane.f32.xlu0 %v1419
    %v1421 = vpop.xlane.xlu0 %1420
    %v1422 = vsel %vm1328, %v1326, 0.0
    %1423 = vadd.xlane.f32.xlu0 %v1422
    %v1424 = vpop.xlane.xlu0 %1423
    %v1425 = vrcp.pop 16.0
    %v1426 = vmul.f32 16.0, %v1425
    %v1427 = vsub.f32 1.0, %v1426
    %v1428 = vmul.f32 %v1425, %v1427
    %v1429 = vadd.f32 %v1425, %v1428
    %vm1430 = vweird.f32 %v1425
    %v1431 = vsel %vm1430, %v1425, %v1429
    %v1432 = vmul.f32 %v1331, %v1431
    %v1433 = vmul.f32 %v1334, %v1431
    %v1434 = vmul.f32 %v1337, %v1431
    %v1435 = vmul.f32 %v1340, %v1431
    %v1436 = vmul.f32 %v1343, %v1431
    %v1437 = vmul.f32 %v1346, %v1431
    %v1438 = vmul.f32 %v1349, %v1431
    %v1439 = vmul.f32 %v1352, %v1431
    %v1440 = vmul.f32 %v1355, %v1431
    %v1441 = vmul.f32 %v1358, %v1431
    %v1442 = vmul.f32 %v1361, %v1431
    %v1443 = vmul.f32 %v1364, %v1431
    %v1444 = vmul.f32 %v1367, %v1431
    %v1445 = vmul.f32 %v1370, %v1431
    %v1446 = vmul.f32 %v1373, %v1431
    %v1447 = vmul.f32 %v1376, %v1431
    %v1448 = vmul.f32 %v1379, %v1431
    %v1449 = vmul.f32 %v1382, %v1431
    %v1450 = vmul.f32 %v1385, %v1431
    %v1451 = vmul.f32 %v1388, %v1431
    %v1452 = vmul.f32 %v1391, %v1431
    %v1453 = vmul.f32 %v1394, %v1431
    %v1454 = vmul.f32 %v1397, %v1431
    %v1455 = vmul.f32 %v1400, %v1431
    %v1456 = vmul.f32 %v1403, %v1431
    %v1457 = vmul.f32 %v1406, %v1431
    %v1458 = vmul.f32 %v1409, %v1431
    %v1459 = vmul.f32 %v1412, %v1431
    %v1460 = vmul.f32 %v1415, %v1431
    %v1461 = vmul.f32 %v1418, %v1431
    %v1462 = vmul.f32 %v1421, %v1431
    %v1463 = vmul.f32 %v1424, %v1431
    %v1464 = vmul.f32 %v1249, %v1249
    %v1465 = vmul.f32 %v1251, %v1251
    %v1466 = vmul.f32 %v1254, %v1254
    %v1467 = vmul.f32 %v1256, %v1256
    %v1468 = vmul.f32 %v1259, %v1259
    %v1469 = vmul.f32 %v1261, %v1261
    %v1470 = vmul.f32 %v1264, %v1264
    %v1471 = vmul.f32 %v1266, %v1266
    %v1472 = vmul.f32 %v1269, %v1269
    %v1473 = vmul.f32 %v1271, %v1271
    %v1474 = vmul.f32 %v1274, %v1274
    %v1475 = vmul.f32 %v1276, %v1276
    %v1476 = vmul.f32 %v1279, %v1279
    %v1477 = vmul.f32 %v1281, %v1281
    %v1478 = vmul.f32 %v1284, %v1284
    %v1479 = vmul.f32 %v1286, %v1286
    %v1480 = vmul.f32 %v1289, %v1289
    %v1481 = vmul.f32 %v1291, %v1291
    %v1482 = vmul.f32 %v1294, %v1294
    %v1483 = vmul.f32 %v1296, %v1296
    %v1484 = vmul.f32 %v1299, %v1299
    %v1485 = vmul.f32 %v1301, %v1301
    %v1486 = vmul.f32 %v1304, %v1304
    %v1487 = vmul.f32 %v1306, %v1306
    %v1488 = vmul.f32 %v1309, %v1309
    %v1489 = vmul.f32 %v1311, %v1311
    %v1490 = vmul.f32 %v1314, %v1314
    %v1491 = vmul.f32 %v1316, %v1316
    %v1492 = vmul.f32 %v1319, %v1319
    %v1493 = vmul.f32 %v1321, %v1321
    %v1494 = vmul.f32 %v1324, %v1324
    %v1495 = vmul.f32 %v1326, %v1326
    %v1496 = vsel %vm1328, %v1464, 0.0
    %1497 = vadd.xlane.f32.xlu0 %v1496
    %v1498 = vpop.xlane.xlu0 %1497
    %v1499 = vsel %vm1328, %v1465, 0.0
    %1500 = vadd.xlane.f32.xlu0 %v1499
    %v1501 = vpop.xlane.xlu0 %1500
    %v1502 = vsel %vm1328, %v1466, 0.0
    %1503 = vadd.xlane.f32.xlu0 %v1502
    %v1504 = vpop.xlane.xlu0 %1503
    %v1505 = vsel %vm1328, %v1467, 0.0
    %1506 = vadd.xlane.f32.xlu0 %v1505
    %v1507 = vpop.xlane.xlu0 %1506
    %v1508 = vsel %vm1328, %v1468, 0.0
    %1509 = vadd.xlane.f32.xlu0 %v1508
    %v1510 = vpop.xlane.xlu0 %1509
    %v1511 = vsel %vm1328, %v1469, 0.0
    %1512 = vadd.xlane.f32.xlu0 %v1511
    %v1513 = vpop.xlane.xlu0 %1512
    %v1514 = vsel %vm1328, %v1470, 0.0
    %1515 = vadd.xlane.f32.xlu0 %v1514
    %v1516 = vpop.xlane.xlu0 %1515
    %v1517 = vsel %vm1328, %v1471, 0.0
    %1518 = vadd.xlane.f32.xlu0 %v1517
    %v1519 = vpop.xlane.xlu0 %1518
    %v1520 = vsel %vm1328, %v1472, 0.0
    %1521 = vadd.xlane.f32.xlu0 %v1520
    %v1522 = vpop.xlane.xlu0 %1521
    %v1523 = vsel %vm1328, %v1473, 0.0
    %1524 = vadd.xlane.f32.xlu0 %v1523
    %v1525 = vpop.xlane.xlu0 %1524
    %v1526 = vsel %vm1328, %v1474, 0.0
    %1527 = vadd.xlane.f32.xlu0 %v1526
    %v1528 = vpop.xlane.xlu0 %1527
    %v1529 = vsel %vm1328, %v1475, 0.0
    %1530 = vadd.xlane.f32.xlu0 %v1529
    %v1531 = vpop.xlane.xlu0 %1530
    %v1532 = vsel %vm1328, %v1476, 0.0
    %1533 = vadd.xlane.f32.xlu0 %v1532
    %v1534 = vpop.xlane.xlu0 %1533
    %v1535 = vsel %vm1328, %v1477, 0.0
    %1536 = vadd.xlane.f32.xlu0 %v1535
    %v1537 = vpop.xlane.xlu0 %1536
    %v1538 = vsel %vm1328, %v1478, 0.0
    %1539 = vadd.xlane.f32.xlu0 %v1538
    %v1540 = vpop.xlane.xlu0 %1539
    %v1541 = vsel %vm1328, %v1479, 0.0
    %1542 = vadd.xlane.f32.xlu0 %v1541
    %v1543 = vpop.xlane.xlu0 %1542
    %v1544 = vsel %vm1328, %v1480, 0.0
    %1545 = vadd.xlane.f32.xlu0 %v1544
    %v1546 = vpop.xlane.xlu0 %1545
    %v1547 = vsel %vm1328, %v1481, 0.0
    %1548 = vadd.xlane.f32.xlu0 %v1547
    %v1549 = vpop.xlane.xlu0 %1548
    %v1550 = vsel %vm1328, %v1482, 0.0
    %1551 = vadd.xlane.f32.xlu0 %v1550
    %v1552 = vpop.xlane.xlu0 %1551
    %v1553 = vsel %vm1328, %v1483, 0.0
    %1554 = vadd.xlane.f32.xlu0 %v1553
    %v1555 = vpop.xlane.xlu0 %1554
    %v1556 = vsel %vm1328, %v1484, 0.0
    %1557 = vadd.xlane.f32.xlu0 %v1556
    %v1558 = vpop.xlane.xlu0 %1557
    %v1559 = vsel %vm1328, %v1485, 0.0
    %1560 = vadd.xlane.f32.xlu0 %v1559
    %v1561 = vpop.xlane.xlu0 %1560
    %v1562 = vsel %vm1328, %v1486, 0.0
    %1563 = vadd.xlane.f32.xlu0 %v1562
    %v1564 = vpop.xlane.xlu0 %1563
    %v1565 = vsel %vm1328, %v1487, 0.0
    %1566 = vadd.xlane.f32.xlu0 %v1565
    %v1567 = vpop.xlane.xlu0 %1566
    %v1568 = vsel %vm1328, %v1488, 0.0
    %1569 = vadd.xlane.f32.xlu0 %v1568
    %v1570 = vpop.xlane.xlu0 %1569
    %v1571 = vsel %vm1328, %v1489, 0.0
    %1572 = vadd.xlane.f32.xlu0 %v1571
    %v1573 = vpop.xlane.xlu0 %1572
    %v1574 = vsel %vm1328, %v1490, 0.0
    %1575 = vadd.xlane.f32.xlu0 %v1574
    %v1576 = vpop.xlane.xlu0 %1575
    %v1577 = vsel %vm1328, %v1491, 0.0
    %1578 = vadd.xlane.f32.xlu0 %v1577
    %v1579 = vpop.xlane.xlu0 %1578
    %v1580 = vsel %vm1328, %v1492, 0.0
    %1581 = vadd.xlane.f32.xlu0 %v1580
    %v1582 = vpop.xlane.xlu0 %1581
    %v1583 = vsel %vm1328, %v1493, 0.0
    %1584 = vadd.xlane.f32.xlu0 %v1583
    %v1585 = vpop.xlane.xlu0 %1584
    %v1586 = vsel %vm1328, %v1494, 0.0
    %1587 = vadd.xlane.f32.xlu0 %v1586
    %v1588 = vpop.xlane.xlu0 %1587
    %v1589 = vsel %vm1328, %v1495, 0.0
    %1590 = vadd.xlane.f32.xlu0 %v1589
    %v1591 = vpop.xlane.xlu0 %1590
    %v1592 = vmul.f32 %v1498, %v1431
    %v1593 = vmul.f32 %v1501, %v1431
    %v1594 = vmul.f32 %v1504, %v1431
    %v1595 = vmul.f32 %v1507, %v1431
    %v1596 = vmul.f32 %v1510, %v1431
    %v1597 = vmul.f32 %v1513, %v1431
    %v1598 = vmul.f32 %v1516, %v1431
    %v1599 = vmul.f32 %v1519, %v1431
    %v1600 = vmul.f32 %v1522, %v1431
    %v1601 = vmul.f32 %v1525, %v1431
    %v1602 = vmul.f32 %v1528, %v1431
    %v1603 = vmul.f32 %v1531, %v1431
    %v1604 = vmul.f32 %v1534, %v1431
    %v1605 = vmul.f32 %v1537, %v1431
    %v1606 = vmul.f32 %v1540, %v1431
    %v1607 = vmul.f32 %v1543, %v1431
    %v1608 = vmul.f32 %v1546, %v1431
    %v1609 = vmul.f32 %v1549, %v1431
    %v1610 = vmul.f32 %v1552, %v1431
    %v1611 = vmul.f32 %v1555, %v1431
    %v1612 = vmul.f32 %v1558, %v1431
    %v1613 = vmul.f32 %v1561, %v1431
    %v1614 = vmul.f32 %v1564, %v1431
    %v1615 = vmul.f32 %v1567, %v1431
    %v1616 = vmul.f32 %v1570, %v1431
    %v1617 = vmul.f32 %v1573, %v1431
    %v1618 = vmul.f32 %v1576, %v1431
    %v1619 = vmul.f32 %v1579, %v1431
    %v1620 = vmul.f32 %v1582, %v1431
    %v1621 = vmul.f32 %v1585, %v1431
    %v1622 = vmul.f32 %v1588, %v1431
    %v1623 = vmul.f32 %v1591, %v1431
    %v1624 = vmul.f32 %v1432, %v1432
    %v1625 = vmul.f32 %v1433, %v1433
    %v1626 = vmul.f32 %v1434, %v1434
    %v1627 = vmul.f32 %v1435, %v1435
    %v1628 = vmul.f32 %v1436, %v1436
    %v1629 = vmul.f32 %v1437, %v1437
    %v1630 = vmul.f32 %v1438, %v1438
    %v1631 = vmul.f32 %v1439, %v1439
    %v1632 = vmul.f32 %v1440, %v1440
    %v1633 = vmul.f32 %v1441, %v1441
    %v1634 = vmul.f32 %v1442, %v1442
    %v1635 = vmul.f32 %v1443, %v1443
    %v1636 = vmul.f32 %v1444, %v1444
    %v1637 = vmul.f32 %v1445, %v1445
    %v1638 = vmul.f32 %v1446, %v1446
    %v1639 = vmul.f32 %v1447, %v1447
    %v1640 = vmul.f32 %v1448, %v1448
    %v1641 = vmul.f32 %v1449, %v1449
    %v1642 = vmul.f32 %v1450, %v1450
    %v1643 = vmul.f32 %v1451, %v1451
    %v1644 = vmul.f32 %v1452, %v1452
    %v1645 = vmul.f32 %v1453, %v1453
    %v1646 = vmul.f32 %v1454, %v1454
    %v1647 = vmul.f32 %v1455, %v1455
    %v1648 = vmul.f32 %v1456, %v1456
    %v1649 = vmul.f32 %v1457, %v1457
    %v1650 = vmul.f32 %v1458, %v1458
    %v1651 = vmul.f32 %v1459, %v1459
    %v1652 = vmul.f32 %v1460, %v1460
    %v1653 = vmul.f32 %v1461, %v1461
    %v1654 = vmul.f32 %v1462, %v1462
    %v1655 = vmul.f32 %v1463, %v1463
    %v1656 = vsub.f32 %v1592, %v1624
    %v1657 = vsub.f32 %v1593, %v1625
    %v1658 = vsub.f32 %v1594, %v1626
    %v1659 = vsub.f32 %v1595, %v1627
    %v1660 = vsub.f32 %v1596, %v1628
    %v1661 = vsub.f32 %v1597, %v1629
    %v1662 = vsub.f32 %v1598, %v1630
    %v1663 = vsub.f32 %v1599, %v1631
    %v1664 = vsub.f32 %v1600, %v1632
    %v1665 = vsub.f32 %v1601, %v1633
    %v1666 = vsub.f32 %v1602, %v1634
    %v1667 = vsub.f32 %v1603, %v1635
    %v1668 = vsub.f32 %v1604, %v1636
    %v1669 = vsub.f32 %v1605, %v1637
    %v1670 = vsub.f32 %v1606, %v1638
    %v1671 = vsub.f32 %v1607, %v1639
    %v1672 = vsub.f32 %v1608, %v1640
    %v1673 = vsub.f32 %v1609, %v1641
    %v1674 = vsub.f32 %v1610, %v1642
    %v1675 = vsub.f32 %v1611, %v1643
    %v1676 = vsub.f32 %v1612, %v1644
    %v1677 = vsub.f32 %v1613, %v1645
    %v1678 = vsub.f32 %v1614, %v1646
    %v1679 = vsub.f32 %v1615, %v1647
    %v1680 = vsub.f32 %v1616, %v1648
    %v1681 = vsub.f32 %v1617, %v1649
    %v1682 = vsub.f32 %v1618, %v1650
    %v1683 = vsub.f32 %v1619, %v1651
    %v1684 = vsub.f32 %v1620, %v1652
    %v1685 = vsub.f32 %v1621, %v1653
    %v1686 = vsub.f32 %v1622, %v1654
    %v1687 = vsub.f32 %v1623, %v1655
    %v1688 = vmax.f32 %v1656, 0.0
    %v1689 = vmax.f32 %v1657, 0.0
    %v1690 = vmax.f32 %v1658, 0.0
    %v1691 = vmax.f32 %v1659, 0.0
    %v1692 = vmax.f32 %v1660, 0.0
    %v1693 = vmax.f32 %v1661, 0.0
    %v1694 = vmax.f32 %v1662, 0.0
    %v1695 = vmax.f32 %v1663, 0.0
    %v1696 = vmax.f32 %v1664, 0.0
    %v1697 = vmax.f32 %v1665, 0.0
    %v1698 = vmax.f32 %v1666, 0.0
    %v1699 = vmax.f32 %v1667, 0.0
    %v1700 = vmax.f32 %v1668, 0.0
    %v1701 = vmax.f32 %v1669, 0.0
    %v1702 = vmax.f32 %v1670, 0.0
    %v1703 = vmax.f32 %v1671, 0.0
    %v1704 = vmax.f32 %v1672, 0.0
    %v1705 = vmax.f32 %v1673, 0.0
    %v1706 = vmax.f32 %v1674, 0.0
    %v1707 = vmax.f32 %v1675, 0.0
    %v1708 = vmax.f32 %v1676, 0.0
    %v1709 = vmax.f32 %v1677, 0.0
    %v1710 = vmax.f32 %v1678, 0.0
    %v1711 = vmax.f32 %v1679, 0.0
    %v1712 = vmax.f32 %v1680, 0.0
    %v1713 = vmax.f32 %v1681, 0.0
    %v1714 = vmax.f32 %v1682, 0.0
    %v1715 = vmax.f32 %v1683, 0.0
    %v1716 = vmax.f32 %v1684, 0.0
    %v1717 = vmax.f32 %v1685, 0.0
    %v1718 = vmax.f32 %v1686, 0.0
    %v1719 = vmax.f32 %v1687, 0.0
    %v1720 = vsub.f32 %v1249, %v1432
    %v1721 = vsub.f32 %v1251, %v1433
    %v1722 = vsub.f32 %v1254, %v1434
    %v1723 = vsub.f32 %v1256, %v1435
    %v1724 = vsub.f32 %v1259, %v1436
    %v1725 = vsub.f32 %v1261, %v1437
    %v1726 = vsub.f32 %v1264, %v1438
    %v1727 = vsub.f32 %v1266, %v1439
    %v1728 = vsub.f32 %v1269, %v1440
    %v1729 = vsub.f32 %v1271, %v1441
    %v1730 = vsub.f32 %v1274, %v1442
    %v1731 = vsub.f32 %v1276, %v1443
    %v1732 = vsub.f32 %v1279, %v1444
    %v1733 = vsub.f32 %v1281, %v1445
    %v1734 = vsub.f32 %v1284, %v1446
    %v1735 = vsub.f32 %v1286, %v1447
    %v1736 = vsub.f32 %v1289, %v1448
    %v1737 = vsub.f32 %v1291, %v1449
    %v1738 = vsub.f32 %v1294, %v1450
    %v1739 = vsub.f32 %v1296, %v1451
    %v1740 = vsub.f32 %v1299, %v1452
    %v1741 = vsub.f32 %v1301, %v1453
    %v1742 = vsub.f32 %v1304, %v1454
    %v1743 = vsub.f32 %v1306, %v1455
    %v1744 = vsub.f32 %v1309, %v1456
    %v1745 = vsub.f32 %v1311, %v1457
    %v1746 = vsub.f32 %v1314, %v1458
    %v1747 = vsub.f32 %v1316, %v1459
    %v1748 = vsub.f32 %v1319, %v1460
    %v1749 = vsub.f32 %v1321, %v1461
    %v1750 = vsub.f32 %v1324, %v1462
    %v1751 = vsub.f32 %v1326, %v1463
    %v1752 = vadd.f32 %v1688, 1e-05
    %v1753 = vadd.f32 %v1689, 1e-05
    %v1754 = vadd.f32 %v1690, 1e-05
    %v1755 = vadd.f32 %v1691, 1e-05
    %v1756 = vadd.f32 %v1692, 1e-05
    %v1757 = vadd.f32 %v1693, 1e-05
    %v1758 = vadd.f32 %v1694, 1e-05
    %v1759 = vadd.f32 %v1695, 1e-05
    %v1760 = vadd.f32 %v1696, 1e-05
    %v1761 = vadd.f32 %v1697, 1e-05
    %v1762 = vadd.f32 %v1698, 1e-05
    %v1763 = vadd.f32 %v1699, 1e-05
    %v1764 = vadd.f32 %v1700, 1e-05
    %v1765 = vadd.f32 %v1701, 1e-05
    %v1766 = vadd.f32 %v1702, 1e-05
    %v1767 = vadd.f32 %v1703, 1e-05
    %v1768 = vadd.f32 %v1704, 1e-05
    %v1769 = vadd.f32 %v1705, 1e-05
    %v1770 = vadd.f32 %v1706, 1e-05
    %v1771 = vadd.f32 %v1707, 1e-05
    %v1772 = vadd.f32 %v1708, 1e-05
    %v1773 = vadd.f32 %v1709, 1e-05
    %v1774 = vadd.f32 %v1710, 1e-05
    %v1775 = vadd.f32 %v1711, 1e-05
    %v1776 = vadd.f32 %v1712, 1e-05
    %v1777 = vadd.f32 %v1713, 1e-05
    %v1778 = vadd.f32 %v1714, 1e-05
    %v1779 = vadd.f32 %v1715, 1e-05
    %v1780 = vadd.f32 %v1716, 1e-05
    %v1781 = vadd.f32 %v1717, 1e-05
    %v1782 = vadd.f32 %v1718, 1e-05
    %v1783 = vadd.f32 %v1719, 1e-05
    %v1784 = vrsqrt.pop %v1752
    %v1785 = vmul.f32 %v1784, %v1752
    %v1786 = vmul.f32 %v1785, %v1784
    %v1787 = vmul.f32 0.5, %v1786
    %v1788 = vsub.f32 1.5, %v1787
    %v1789 = vmul.f32 %v1784, %v1788
    %vm1790 = vweird.f32 %v1752
    %vm1791 = vweird.f32 %v1784
    %vm1792 = vmor %vm1790, %vm1791
    %v1793 = vsel %vm1792, %v1784, %v1789
    %v1794 = vrsqrt.pop %v1753
    %v1795 = vmul.f32 %v1794, %v1753
    %v1796 = vmul.f32 %v1795, %v1794
    %v1797 = vmul.f32 0.5, %v1796
    %v1798 = vsub.f32 1.5, %v1797
    %v1799 = vmul.f32 %v1794, %v1798
    %vm1800 = vweird.f32 %v1753
    %vm1801 = vweird.f32 %v1794
    %vm1802 = vmor %vm1800, %vm1801
    %v1803 = vsel %vm1802, %v1794, %v1799
    %v1804 = vrsqrt.pop %v1754
    %v1805 = vmul.f32 %v1804, %v1754
    %v1806 = vmul.f32 %v1805, %v1804
    %v1807 = vmul.f32 0.5, %v1806
    %v1808 = vsub.f32 1.5, %v1807
    %v1809 = vmul.f32 %v1804, %v1808
    %vm1810 = vweird.f32 %v1754
    %vm1811 = vweird.f32 %v1804
    %vm1812 = vmor %vm1810, %vm1811
    %v1813 = vsel %vm1812, %v1804, %v1809
    %v1814 = vrsqrt.pop %v1755
    %v1815 = vmul.f32 %v1814, %v1755
    %v1816 = vmul.f32 %v1815, %v1814
    %v1817 = vmul.f32 0.5, %v1816
    %v1818 = vsub.f32 1.5, %v1817
    %v1819 = vmul.f32 %v1814, %v1818
    %vm1820 = vweird.f32 %v1755
    %vm1821 = vweird.f32 %v1814
    %vm1822 = vmor %vm1820, %vm1821
    %v1823 = vsel %vm1822, %v1814, %v1819
    %v1824 = vrsqrt.pop %v1756
    %v1825 = vmul.f32 %v1824, %v1756
    %v1826 = vmul.f32 %v1825, %v1824
    %v1827 = vmul.f32 0.5, %v1826
    %v1828 = vsub.f32 1.5, %v1827
    %v1829 = vmul.f32 %v1824, %v1828
    %vm1830 = vweird.f32 %v1756
    %vm1831 = vweird.f32 %v1824
    %vm1832 = vmor %vm1830, %vm1831
    %v1833 = vsel %vm1832, %v1824, %v1829
    %v1834 = vrsqrt.pop %v1757
    %v1835 = vmul.f32 %v1834, %v1757
    %v1836 = vmul.f32 %v1835, %v1834
    %v1837 = vmul.f32 0.5, %v1836
    %v1838 = vsub.f32 1.5, %v1837
    %v1839 = vmul.f32 %v1834, %v1838
    %vm1840 = vweird.f32 %v1757
    %vm1841 = vweird.f32 %v1834
    %vm1842 = vmor %vm1840, %vm1841
    %v1843 = vsel %vm1842, %v1834, %v1839
    %v1844 = vrsqrt.pop %v1758
    %v1845 = vmul.f32 %v1844, %v1758
    %v1846 = vmul.f32 %v1845, %v1844
    %v1847 = vmul.f32 0.5, %v1846
    %v1848 = vsub.f32 1.5, %v1847
    %v1849 = vmul.f32 %v1844, %v1848
    %vm1850 = vweird.f32 %v1758
    %vm1851 = vweird.f32 %v1844
    %vm1852 = vmor %vm1850, %vm1851
    %v1853 = vsel %vm1852, %v1844, %v1849
    %v1854 = vrsqrt.pop %v1759
    %v1855 = vmul.f32 %v1854, %v1759
    %v1856 = vmul.f32 %v1855, %v1854
    %v1857 = vmul.f32 0.5, %v1856
    %v1858 = vsub.f32 1.5, %v1857
    %v1859 = vmul.f32 %v1854, %v1858
    %vm1860 = vweird.f32 %v1759
    %vm1861 = vweird.f32 %v1854
    %vm1862 = vmor %vm1860, %vm1861
    %v1863 = vsel %vm1862, %v1854, %v1859
    %v1864 = vrsqrt.pop %v1760
    %v1865 = vmul.f32 %v1864, %v1760
    %v1866 = vmul.f32 %v1865, %v1864
    %v1867 = vmul.f32 0.5, %v1866
    %v1868 = vsub.f32 1.5, %v1867
    %v1869 = vmul.f32 %v1864, %v1868
    %vm1870 = vweird.f32 %v1760
    %vm1871 = vweird.f32 %v1864
    %vm1872 = vmor %vm1870, %vm1871
    %v1873 = vsel %vm1872, %v1864, %v1869
    %v1874 = vrsqrt.pop %v1761
    %v1875 = vmul.f32 %v1874, %v1761
    %v1876 = vmul.f32 %v1875, %v1874
    %v1877 = vmul.f32 0.5, %v1876
    %v1878 = vsub.f32 1.5, %v1877
    %v1879 = vmul.f32 %v1874, %v1878
    %vm1880 = vweird.f32 %v1761
    %vm1881 = vweird.f32 %v1874
    %vm1882 = vmor %vm1880, %vm1881
    %v1883 = vsel %vm1882, %v1874, %v1879
    %v1884 = vrsqrt.pop %v1762
    %v1885 = vmul.f32 %v1884, %v1762
    %v1886 = vmul.f32 %v1885, %v1884
    %v1887 = vmul.f32 0.5, %v1886
    %v1888 = vsub.f32 1.5, %v1887
    %v1889 = vmul.f32 %v1884, %v1888
    %vm1890 = vweird.f32 %v1762
    %vm1891 = vweird.f32 %v1884
    %vm1892 = vmor %vm1890, %vm1891
    %v1893 = vsel %vm1892, %v1884, %v1889
    %v1894 = vrsqrt.pop %v1763
    %v1895 = vmul.f32 %v1894, %v1763
    %v1896 = vmul.f32 %v1895, %v1894
    %v1897 = vmul.f32 0.5, %v1896
    %v1898 = vsub.f32 1.5, %v1897
    %v1899 = vmul.f32 %v1894, %v1898
    %vm1900 = vweird.f32 %v1763
    %vm1901 = vweird.f32 %v1894
    %vm1902 = vmor %vm1900, %vm1901
    %v1903 = vsel %vm1902, %v1894, %v1899
    %v1904 = vrsqrt.pop %v1764
    %v1905 = vmul.f32 %v1904, %v1764
    %v1906 = vmul.f32 %v1905, %v1904
    %v1907 = vmul.f32 0.5, %v1906
    %v1908 = vsub.f32 1.5, %v1907
    %v1909 = vmul.f32 %v1904, %v1908
    %vm1910 = vweird.f32 %v1764
    %vm1911 = vweird.f32 %v1904
    %vm1912 = vmor %vm1910, %vm1911
    %v1913 = vsel %vm1912, %v1904, %v1909
    %v1914 = vrsqrt.pop %v1765
    %v1915 = vmul.f32 %v1914, %v1765
    %v1916 = vmul.f32 %v1915, %v1914
    %v1917 = vmul.f32 0.5, %v1916
    %v1918 = vsub.f32 1.5, %v1917
    %v1919 = vmul.f32 %v1914, %v1918
    %vm1920 = vweird.f32 %v1765
    %vm1921 = vweird.f32 %v1914
    %vm1922 = vmor %vm1920, %vm1921
    %v1923 = vsel %vm1922, %v1914, %v1919
    %v1924 = vrsqrt.pop %v1766
    %v1925 = vmul.f32 %v1924, %v1766
    %v1926 = vmul.f32 %v1925, %v1924
    %v1927 = vmul.f32 0.5, %v1926
    %v1928 = vsub.f32 1.5, %v1927
    %v1929 = vmul.f32 %v1924, %v1928
    %vm1930 = vweird.f32 %v1766
    %vm1931 = vweird.f32 %v1924
    %vm1932 = vmor %vm1930, %vm1931
    %v1933 = vsel %vm1932, %v1924, %v1929
    %v1934 = vrsqrt.pop %v1767
    %v1935 = vmul.f32 %v1934, %v1767
    %v1936 = vmul.f32 %v1935, %v1934
    %v1937 = vmul.f32 0.5, %v1936
    %v1938 = vsub.f32 1.5, %v1937
    %v1939 = vmul.f32 %v1934, %v1938
    %vm1940 = vweird.f32 %v1767
    %vm1941 = vweird.f32 %v1934
    %vm1942 = vmor %vm1940, %vm1941
    %v1943 = vsel %vm1942, %v1934, %v1939
    %v1944 = vrsqrt.pop %v1768
    %v1945 = vmul.f32 %v1944, %v1768
    %v1946 = vmul.f32 %v1945, %v1944
    %v1947 = vmul.f32 0.5, %v1946
    %v1948 = vsub.f32 1.5, %v1947
    %v1949 = vmul.f32 %v1944, %v1948
    %vm1950 = vweird.f32 %v1768
    %vm1951 = vweird.f32 %v1944
    %vm1952 = vmor %vm1950, %vm1951
    %v1953 = vsel %vm1952, %v1944, %v1949
    %v1954 = vrsqrt.pop %v1769
    %v1955 = vmul.f32 %v1954, %v1769
    %v1956 = vmul.f32 %v1955, %v1954
    %v1957 = vmul.f32 0.5, %v1956
    %v1958 = vsub.f32 1.5, %v1957
    %v1959 = vmul.f32 %v1954, %v1958
    %vm1960 = vweird.f32 %v1769
    %vm1961 = vweird.f32 %v1954
    %vm1962 = vmor %vm1960, %vm1961
    %v1963 = vsel %vm1962, %v1954, %v1959
    %v1964 = vrsqrt.pop %v1770
    %v1965 = vmul.f32 %v1964, %v1770
    %v1966 = vmul.f32 %v1965, %v1964
    %v1967 = vmul.f32 0.5, %v1966
    %v1968 = vsub.f32 1.5, %v1967
    %v1969 = vmul.f32 %v1964, %v1968
    %vm1970 = vweird.f32 %v1770
    %vm1971 = vweird.f32 %v1964
    %vm1972 = vmor %vm1970, %vm1971
    %v1973 = vsel %vm1972, %v1964, %v1969
    %v1974 = vrsqrt.pop %v1771
    %v1975 = vmul.f32 %v1974, %v1771
    %v1976 = vmul.f32 %v1975, %v1974
    %v1977 = vmul.f32 0.5, %v1976
    %v1978 = vsub.f32 1.5, %v1977
    %v1979 = vmul.f32 %v1974, %v1978
    %vm1980 = vweird.f32 %v1771
    %vm1981 = vweird.f32 %v1974
    %vm1982 = vmor %vm1980, %vm1981
    %v1983 = vsel %vm1982, %v1974, %v1979
    %v1984 = vrsqrt.pop %v1772
    %v1985 = vmul.f32 %v1984, %v1772
    %v1986 = vmul.f32 %v1985, %v1984
    %v1987 = vmul.f32 0.5, %v1986
    %v1988 = vsub.f32 1.5, %v1987
    %v1989 = vmul.f32 %v1984, %v1988
    %vm1990 = vweird.f32 %v1772
    %vm1991 = vweird.f32 %v1984
    %vm1992 = vmor %vm1990, %vm1991
    %v1993 = vsel %vm1992, %v1984, %v1989
    %v1994 = vrsqrt.pop %v1773
    %v1995 = vmul.f32 %v1994, %v1773
    %v1996 = vmul.f32 %v1995, %v1994
    %v1997 = vmul.f32 0.5, %v1996
    %v1998 = vsub.f32 1.5, %v1997
    %v1999 = vmul.f32 %v1994, %v1998
    %vm2000 = vweird.f32 %v1773
    %vm2001 = vweird.f32 %v1994
    %vm2002 = vmor %vm2000, %vm2001
    %v2003 = vsel %vm2002, %v1994, %v1999
    %v2004 = vrsqrt.pop %v1774
    %v2005 = vmul.f32 %v2004, %v1774
    %v2006 = vmul.f32 %v2005, %v2004
    %v2007 = vmul.f32 0.5, %v2006
    %v2008 = vsub.f32 1.5, %v2007
    %v2009 = vmul.f32 %v2004, %v2008
    %vm2010 = vweird.f32 %v1774
    %vm2011 = vweird.f32 %v2004
    %vm2012 = vmor %vm2010, %vm2011
    %v2013 = vsel %vm2012, %v2004, %v2009
    %v2014 = vrsqrt.pop %v1775
    %v2015 = vmul.f32 %v2014, %v1775
    %v2016 = vmul.f32 %v2015, %v2014
    %v2017 = vmul.f32 0.5, %v2016
    %v2018 = vsub.f32 1.5, %v2017
    %v2019 = vmul.f32 %v2014, %v2018
    %vm2020 = vweird.f32 %v1775
    %vm2021 = vweird.f32 %v2014
    %vm2022 = vmor %vm2020, %vm2021
    %v2023 = vsel %vm2022, %v2014, %v2019
    %v2024 = vrsqrt.pop %v1776
    %v2025 = vmul.f32 %v2024, %v1776
    %v2026 = vmul.f32 %v2025, %v2024
    %v2027 = vmul.f32 0.5, %v2026
    %v2028 = vsub.f32 1.5, %v2027
    %v2029 = vmul.f32 %v2024, %v2028
    %vm2030 = vweird.f32 %v1776
    %vm2031 = vweird.f32 %v2024
    %vm2032 = vmor %vm2030, %vm2031
    %v2033 = vsel %vm2032, %v2024, %v2029
    %v2034 = vrsqrt.pop %v1777
    %v2035 = vmul.f32 %v2034, %v1777
    %v2036 = vmul.f32 %v2035, %v2034
    %v2037 = vmul.f32 0.5, %v2036
    %v2038 = vsub.f32 1.5, %v2037
    %v2039 = vmul.f32 %v2034, %v2038
    %vm2040 = vweird.f32 %v1777
    %vm2041 = vweird.f32 %v2034
    %vm2042 = vmor %vm2040, %vm2041
    %v2043 = vsel %vm2042, %v2034, %v2039
    %v2044 = vrsqrt.pop %v1778
    %v2045 = vmul.f32 %v2044, %v1778
    %v2046 = vmul.f32 %v2045, %v2044
    %v2047 = vmul.f32 0.5, %v2046
    %v2048 = vsub.f32 1.5, %v2047
    %v2049 = vmul.f32 %v2044, %v2048
    %vm2050 = vweird.f32 %v1778
    %vm2051 = vweird.f32 %v2044
    %vm2052 = vmor %vm2050, %vm2051
    %v2053 = vsel %vm2052, %v2044, %v2049
    %v2054 = vrsqrt.pop %v1779
    %v2055 = vmul.f32 %v2054, %v1779
    %v2056 = vmul.f32 %v2055, %v2054
    %v2057 = vmul.f32 0.5, %v2056
    %v2058 = vsub.f32 1.5, %v2057
    %v2059 = vmul.f32 %v2054, %v2058
    %vm2060 = vweird.f32 %v1779
    %vm2061 = vweird.f32 %v2054
    %vm2062 = vmor %vm2060, %vm2061
    %v2063 = vsel %vm2062, %v2054, %v2059
    %v2064 = vrsqrt.pop %v1780
    %v2065 = vmul.f32 %v2064, %v1780
    %v2066 = vmul.f32 %v2065, %v2064
    %v2067 = vmul.f32 0.5, %v2066
    %v2068 = vsub.f32 1.5, %v2067
    %v2069 = vmul.f32 %v2064, %v2068
    %vm2070 = vweird.f32 %v1780
    %vm2071 = vweird.f32 %v2064
    %vm2072 = vmor %vm2070, %vm2071
    %v2073 = vsel %vm2072, %v2064, %v2069
    %v2074 = vrsqrt.pop %v1781
    %v2075 = vmul.f32 %v2074, %v1781
    %v2076 = vmul.f32 %v2075, %v2074
    %v2077 = vmul.f32 0.5, %v2076
    %v2078 = vsub.f32 1.5, %v2077
    %v2079 = vmul.f32 %v2074, %v2078
    %vm2080 = vweird.f32 %v1781
    %vm2081 = vweird.f32 %v2074
    %vm2082 = vmor %vm2080, %vm2081
    %v2083 = vsel %vm2082, %v2074, %v2079
    %v2084 = vrsqrt.pop %v1782
    %v2085 = vmul.f32 %v2084, %v1782
    %v2086 = vmul.f32 %v2085, %v2084
    %v2087 = vmul.f32 0.5, %v2086
    %v2088 = vsub.f32 1.5, %v2087
    %v2089 = vmul.f32 %v2084, %v2088
    %vm2090 = vweird.f32 %v1782
    %vm2091 = vweird.f32 %v2084
    %vm2092 = vmor %vm2090, %vm2091
    %v2093 = vsel %vm2092, %v2084, %v2089
    %v2094 = vrsqrt.pop %v1783
    %v2095 = vmul.f32 %v2094, %v1783
    %v2096 = vmul.f32 %v2095, %v2094
    %v2097 = vmul.f32 0.5, %v2096
    %v2098 = vsub.f32 1.5, %v2097
    %v2099 = vmul.f32 %v2094, %v2098
    %vm2100 = vweird.f32 %v1783
    %vm2101 = vweird.f32 %v2094
    %vm2102 = vmor %vm2100, %vm2101
    %v2103 = vsel %vm2102, %v2094, %v2099
    %v2104 = vmul.f32 %v1720, %v1793
    %v2105 = vmul.f32 %v1721, %v1803
    %v2106 = vmul.f32 %v1722, %v1813
    %v2107 = vmul.f32 %v1723, %v1823
    %v2108 = vmul.f32 %v1724, %v1833
    %v2109 = vmul.f32 %v1725, %v1843
    %v2110 = vmul.f32 %v1726, %v1853
    %v2111 = vmul.f32 %v1727, %v1863
    %v2112 = vmul.f32 %v1728, %v1873
    %v2113 = vmul.f32 %v1729, %v1883
    %v2114 = vmul.f32 %v1730, %v1893
    %v2115 = vmul.f32 %v1731, %v1903
    %v2116 = vmul.f32 %v1732, %v1913
    %v2117 = vmul.f32 %v1733, %v1923
    %v2118 = vmul.f32 %v1734, %v1933
    %v2119 = vmul.f32 %v1735, %v1943
    %v2120 = vmul.f32 %v1736, %v1953
    %v2121 = vmul.f32 %v1737, %v1963
    %v2122 = vmul.f32 %v1738, %v1973
    %v2123 = vmul.f32 %v1739, %v1983
    %v2124 = vmul.f32 %v1740, %v1993
    %v2125 = vmul.f32 %v1741, %v2003
    %v2126 = vmul.f32 %v1742, %v2013
    %v2127 = vmul.f32 %v1743, %v2023
    %v2128 = vmul.f32 %v1744, %v2033
    %v2129 = vmul.f32 %v1745, %v2043
    %v2130 = vmul.f32 %v1746, %v2053
    %v2131 = vmul.f32 %v1747, %v2063
    %v2132 = vmul.f32 %v1748, %v2073
    %v2133 = vmul.f32 %v1749, %v2083
    %v2134 = vmul.f32 %v1750, %v2093
    %v2135 = vmul.f32 %v1751, %v2103
    %v2136 = vperm.slane %v64, 1
    %v2137 = vmul.f32 %v2104, %v2136
    %v2138 = vmul.f32 %v2105, %v2136
    %v2139 = vmul.f32 %v2106, %v2136
    %v2140 = vmul.f32 %v2107, %v2136
    %v2141 = vmul.f32 %v2108, %v2136
    %v2142 = vmul.f32 %v2109, %v2136
    %v2143 = vmul.f32 %v2110, %v2136
    %v2144 = vmul.f32 %v2111, %v2136
    %v2145 = vmul.f32 %v2112, %v2136
    %v2146 = vmul.f32 %v2113, %v2136
    %v2147 = vmul.f32 %v2114, %v2136
    %v2148 = vmul.f32 %v2115, %v2136
    %v2149 = vmul.f32 %v2116, %v2136
    %v2150 = vmul.f32 %v2117, %v2136
    %v2151 = vmul.f32 %v2118, %v2136
    %v2152 = vmul.f32 %v2119, %v2136
    %v2153 = vmul.f32 %v2120, %v2136
    %v2154 = vmul.f32 %v2121, %v2136
    %v2155 = vmul.f32 %v2122, %v2136
    %v2156 = vmul.f32 %v2123, %v2136
    %v2157 = vmul.f32 %v2124, %v2136
    %v2158 = vmul.f32 %v2125, %v2136
    %v2159 = vmul.f32 %v2126, %v2136
    %v2160 = vmul.f32 %v2127, %v2136
    %v2161 = vmul.f32 %v2128, %v2136
    %v2162 = vmul.f32 %v2129, %v2136
    %v2163 = vmul.f32 %v2130, %v2136
    %v2164 = vmul.f32 %v2131, %v2136
    %v2165 = vmul.f32 %v2132, %v2136
    %v2166 = vmul.f32 %v2133, %v2136
    %v2167 = vmul.f32 %v2134, %v2136
    %v2168 = vmul.f32 %v2135, %v2136
    %v2169 = vperm.slane %v64, 2
    %v2170 = vadd.f32 %v2137, %v2169
    %v2171 = vadd.f32 %v2138, %v2169
    %v2172 = vadd.f32 %v2139, %v2169
    %v2173 = vadd.f32 %v2140, %v2169
    %v2174 = vadd.f32 %v2141, %v2169
    %v2175 = vadd.f32 %v2142, %v2169
    %v2176 = vadd.f32 %v2143, %v2169
    %v2177 = vadd.f32 %v2144, %v2169
    %v2178 = vadd.f32 %v2145, %v2169
    %v2179 = vadd.f32 %v2146, %v2169
    %v2180 = vadd.f32 %v2147, %v2169
    %v2181 = vadd.f32 %v2148, %v2169
    %v2182 = vadd.f32 %v2149, %v2169
    %v2183 = vadd.f32 %v2150, %v2169
    %v2184 = vadd.f32 %v2151, %v2169
    %v2185 = vadd.f32 %v2152, %v2169
    %v2186 = vadd.f32 %v2153, %v2169
    %v2187 = vadd.f32 %v2154, %v2169
    %v2188 = vadd.f32 %v2155, %v2169
    %v2189 = vadd.f32 %v2156, %v2169
    %v2190 = vadd.f32 %v2157, %v2169
    %v2191 = vadd.f32 %v2158, %v2169
    %v2192 = vadd.f32 %v2159, %v2169
    %v2193 = vadd.f32 %v2160, %v2169
    %v2194 = vadd.f32 %v2161, %v2169
    %v2195 = vadd.f32 %v2162, %v2169
    %v2196 = vadd.f32 %v2163, %v2169
    %v2197 = vadd.f32 %v2164, %v2169
    %v2198 = vadd.f32 %v2165, %v2169
    %v2199 = vadd.f32 %v2166, %v2169
    %v2200 = vadd.f32 %v2167, %v2169
    %v2201 = vadd.f32 %v2168, %v2169
    %v2202 = vmax.f32 %v2170, 0.0
    %v2203 = vmax.f32 %v2171, 0.0
    %v2204 = vmax.f32 %v2172, 0.0
    %v2205 = vmax.f32 %v2173, 0.0
    %v2206 = vmax.f32 %v2174, 0.0
    %v2207 = vmax.f32 %v2175, 0.0
    %v2208 = vmax.f32 %v2176, 0.0
    %v2209 = vmax.f32 %v2177, 0.0
    %v2210 = vmax.f32 %v2178, 0.0
    %v2211 = vmax.f32 %v2179, 0.0
    %v2212 = vmax.f32 %v2180, 0.0
    %v2213 = vmax.f32 %v2181, 0.0
    %v2214 = vmax.f32 %v2182, 0.0
    %v2215 = vmax.f32 %v2183, 0.0
    %v2216 = vmax.f32 %v2184, 0.0
    %v2217 = vmax.f32 %v2185, 0.0
    %v2218 = vmax.f32 %v2186, 0.0
    %v2219 = vmax.f32 %v2187, 0.0
    %v2220 = vmax.f32 %v2188, 0.0
    %v2221 = vmax.f32 %v2189, 0.0
    %v2222 = vmax.f32 %v2190, 0.0
    %v2223 = vmax.f32 %v2191, 0.0
    %v2224 = vmax.f32 %v2192, 0.0
    %v2225 = vmax.f32 %v2193, 0.0
    %v2226 = vmax.f32 %v2194, 0.0
    %v2227 = vmax.f32 %v2195, 0.0
    %v2228 = vmax.f32 %v2196, 0.0
    %v2229 = vmax.f32 %v2197, 0.0
    %v2230 = vmax.f32 %v2198, 0.0
    %v2231 = vmax.f32 %v2199, 0.0
    %v2232 = vmax.f32 %v2200, 0.0
    %v2233 = vmax.f32 %v2201, 0.0
    %v2234 = vpack.c.bf16 %v2203, %v2202
    %v2235 = vpack.c.bf16 %v2205, %v2204
    %v2236 = vpack.c.bf16 %v2207, %v2206
    %v2237 = vpack.c.bf16 %v2209, %v2208
    %v2238 = vpack.c.bf16 %v2211, %v2210
    %v2239 = vpack.c.bf16 %v2213, %v2212
    %v2240 = vpack.c.bf16 %v2215, %v2214
    %v2241 = vpack.c.bf16 %v2217, %v2216
    %v2242 = vpack.c.bf16 %v2219, %v2218
    %v2243 = vpack.c.bf16 %v2221, %v2220
    %v2244 = vpack.c.bf16 %v2223, %v2222
    %v2245 = vpack.c.bf16 %v2225, %v2224
    %v2246 = vpack.c.bf16 %v2227, %v2226
    %v2247 = vpack.c.bf16 %v2229, %v2228
    %v2248 = vpack.c.bf16 %v2231, %v2230
    %v2249 = vpack.c.bf16 %v2233, %v2232
    %v2250 = vld [vmem:[%s6] sm:$0xf]
    %v2251 = vld [vmem:[%s6 + $0x4] sm:$0xf]
    %v2252 = vld [vmem:[%s7] sm:$0x1]
    %v2254 = vperm.slane %v2252, 0
    %v2258 = vunpack.c.l.b16 %v2250
    %v2259 = vunpack.c.l.b16 %v2251
    %v2260 = vpack.c.b16 %v2259, %v2258
    %v2263 = vsel %vm1328, %v2234, 0
    %v2266 = vsel %vm1328, %v2235, 0
    %v2269 = vsel %vm1328, %v2236, 0
    %v2272 = vsel %vm1328, %v2237, 0
    %v2275 = vsel %vm1328, %v2238, 0
    %v2278 = vsel %vm1328, %v2239, 0
    %v2281 = vsel %vm1328, %v2240, 0
    %v2284 = vsel %vm1328, %v2241, 0
    %v2287 = vsel %vm1328, %v2242, 0
    %v2290 = vsel %vm1328, %v2243, 0
    %v2293 = vsel %vm1328, %v2244, 0
    %v2296 = vsel %vm1328, %v2245, 0
    %v2299 = vsel %vm1328, %v2246, 0
    %v2302 = vsel %vm1328, %v2247, 0
    %v2305 = vsel %vm1328, %v2248, 0
    %v2308 = vsel %vm1328, %v2249, 0
    %2310 = vmatpush.bf16.msra.mxu0 0
    %2311 = vmatpush.bf16.msra.mxu0 0
    %2312 = vmatpush.bf16.msra.mxu0 0
    %2313 = vmatpush.bf16.msra.mxu0 0
    %2314 = vmatpush.bf16.msra.mxu0 0
    %2315 = vmatpush.bf16.msra.mxu0 0
    %2316 = vmatpush.bf16.msra.mxu0 0
    %2317 = vmatpush.bf16.msra.mxu0 %v2260
    %2318 = vmatmul.bf16.gmra.mxu0 %v2263
    %v2319 = vpop.f32.mrf.mxu0
    %v2320 = vadd.f32 %v2254, %v2319
    %v2321 = vpop.f32.mrf.mxu0
    %v2322 = vadd.f32 %v2254, %v2321
    %2323 = vmatmul.bf16.gmra.mxu0 %v2266
    %v2324 = vpop.f32.mrf.mxu0
    %v2325 = vadd.f32 %v2254, %v2324
    %v2326 = vpop.f32.mrf.mxu0
    %v2327 = vadd.f32 %v2254, %v2326
    %2328 = vmatmul.bf16.gmra.mxu0 %v2269
    %v2329 = vpop.f32.mrf.mxu0
    %v2330 = vadd.f32 %v2254, %v2329
    %v2331 = vpop.f32.mrf.mxu0
    %v2332 = vadd.f32 %v2254, %v2331
    %2333 = vmatmul.bf16.gmra.mxu0 %v2272
    %v2334 = vpop.f32.mrf.mxu0
    %v2335 = vadd.f32 %v2254, %v2334
    %v2336 = vpop.f32.mrf.mxu0
    %v2337 = vadd.f32 %v2254, %v2336
    %2338 = vmatmul.bf16.gmra.mxu0 %v2275
    %v2339 = vpop.f32.mrf.mxu0
    %v2340 = vadd.f32 %v2254, %v2339
    %v2341 = vpop.f32.mrf.mxu0
    %v2342 = vadd.f32 %v2254, %v2341
    %2343 = vmatmul.bf16.gmra.mxu0 %v2278
    %v2344 = vpop.f32.mrf.mxu0
    %v2345 = vadd.f32 %v2254, %v2344
    %v2346 = vpop.f32.mrf.mxu0
    %v2347 = vadd.f32 %v2254, %v2346
    %2348 = vmatmul.bf16.gmra.mxu0 %v2281
    %v2349 = vpop.f32.mrf.mxu0
    %v2350 = vadd.f32 %v2254, %v2349
    %v2351 = vpop.f32.mrf.mxu0
    %v2352 = vadd.f32 %v2254, %v2351
    %2353 = vmatmul.bf16.gmra.mxu0 %v2284
    %v2354 = vpop.f32.mrf.mxu0
    %v2355 = vadd.f32 %v2254, %v2354
    %v2356 = vpop.f32.mrf.mxu0
    %v2357 = vadd.f32 %v2254, %v2356
    %2358 = vmatmul.bf16.gmra.mxu0 %v2287
    %v2359 = vpop.f32.mrf.mxu0
    %v2360 = vadd.f32 %v2254, %v2359
    %v2361 = vpop.f32.mrf.mxu0
    %v2362 = vadd.f32 %v2254, %v2361
    %2363 = vmatmul.bf16.gmra.mxu0 %v2290
    %v2364 = vpop.f32.mrf.mxu0
    %v2365 = vadd.f32 %v2254, %v2364
    %v2366 = vpop.f32.mrf.mxu0
    %v2367 = vadd.f32 %v2254, %v2366
    %2368 = vmatmul.bf16.gmra.mxu0 %v2293
    %v2369 = vpop.f32.mrf.mxu0
    %v2370 = vadd.f32 %v2254, %v2369
    %v2371 = vpop.f32.mrf.mxu0
    %v2372 = vadd.f32 %v2254, %v2371
    %2373 = vmatmul.bf16.gmra.mxu0 %v2296
    %v2374 = vpop.f32.mrf.mxu0
    %v2375 = vadd.f32 %v2254, %v2374
    %v2376 = vpop.f32.mrf.mxu0
    %v2377 = vadd.f32 %v2254, %v2376
    %2378 = vmatmul.bf16.gmra.mxu0 %v2299
    %v2379 = vpop.f32.mrf.mxu0
    %v2380 = vadd.f32 %v2254, %v2379
    %v2381 = vpop.f32.mrf.mxu0
    %v2382 = vadd.f32 %v2254, %v2381
    %2383 = vmatmul.bf16.gmra.mxu0 %v2302
    %v2384 = vpop.f32.mrf.mxu0
    %v2385 = vadd.f32 %v2254, %v2384
    %v2386 = vpop.f32.mrf.mxu0
    %v2387 = vadd.f32 %v2254, %v2386
    %2388 = vmatmul.bf16.gmra.mxu0 %v2305
    %v2389 = vpop.f32.mrf.mxu0
    %v2390 = vadd.f32 %v2254, %v2389
    %v2391 = vpop.f32.mrf.mxu0
    %v2392 = vadd.f32 %v2254, %v2391
    %2393 = vmatmul.bf16.gmra.mxu0 %v2308
    %v2394 = vpop.f32.mrf.mxu0
    %v2395 = vadd.f32 %v2254, %v2394
    %v2396 = vpop.f32.mrf.mxu0
    %v2397 = vadd.f32 %v2254, %v2396
    %2398 = vdwg.mxu0
    %v2399 = vld [vmem:[%s1] sm:$0xff]
    %v2400 = vld [vmem:[%s1 + $0x8] sm:$0xff]
    %v2401 = vld [vmem:[%s1 + $0x10] sm:$0xff]
    %v2402 = vld [vmem:[%s1 + $0x18] sm:$0xff]
    %v2403 = vld [vmem:[%s1 + $0x20] sm:$0xff]
    %v2404 = vld [vmem:[%s1 + $0x28] sm:$0xff]
    %v2405 = vld [vmem:[%s1 + $0x30] sm:$0xff]
    %v2406 = vld [vmem:[%s1 + $0x38] sm:$0xff]
    %v2407 = vld [vmem:[%s1 + $0x40] sm:$0xff]
    %v2408 = vld [vmem:[%s1 + $0x48] sm:$0xff]
    %v2409 = vld [vmem:[%s1 + $0x50] sm:$0xff]
    %v2410 = vld [vmem:[%s1 + $0x58] sm:$0xff]
    %v2411 = vld [vmem:[%s1 + $0x60] sm:$0xff]
    %v2412 = vld [vmem:[%s1 + $0x68] sm:$0xff]
    %v2413 = vld [vmem:[%s1 + $0x70] sm:$0xff]
    %v2414 = vld [vmem:[%s1 + $0x78] sm:$0xff]
    %v2415 = vld [vmem:[%s1 + $0x80] sm:$0xff]
    %v2416 = vld [vmem:[%s1 + $0x88] sm:$0xff]
    %v2417 = vld [vmem:[%s1 + $0x90] sm:$0xff]
    %v2418 = vld [vmem:[%s1 + $0x98] sm:$0xff]
    %v2419 = vld [vmem:[%s1 + $0xa0] sm:$0xff]
    %v2420 = vld [vmem:[%s1 + $0xa8] sm:$0xff]
    %v2421 = vld [vmem:[%s1 + $0xb0] sm:$0xff]
    %v2422 = vld [vmem:[%s1 + $0xb8] sm:$0xff]
    %v2423 = vld [vmem:[%s1 + $0xc0] sm:$0xff]
    %v2424 = vld [vmem:[%s1 + $0xc8] sm:$0xff]
    %v2425 = vld [vmem:[%s1 + $0xd0] sm:$0xff]
    %v2426 = vld [vmem:[%s1 + $0xd8] sm:$0xff]
    %v2427 = vld [vmem:[%s1 + $0xe0] sm:$0xff]
    %v2428 = vld [vmem:[%s1 + $0xe8] sm:$0xff]
    %v2429 = vld [vmem:[%s1 + $0xf0] sm:$0xff]
    %v2430 = vld [vmem:[%s1 + $0xf8] sm:$0xff]
    %v2431 = vadd.f32 %v2320, %v2399
    %v2432 = vadd.f32 %v2322, %v2400
    %v2433 = vadd.f32 %v2325, %v2401
    %v2434 = vadd.f32 %v2327, %v2402
    %v2435 = vadd.f32 %v2330, %v2403
    %v2436 = vadd.f32 %v2332, %v2404
    %v2437 = vadd.f32 %v2335, %v2405
    %v2438 = vadd.f32 %v2337, %v2406
    %v2439 = vadd.f32 %v2340, %v2407
    %v2440 = vadd.f32 %v2342, %v2408
    %v2441 = vadd.f32 %v2345, %v2409
    %v2442 = vadd.f32 %v2347, %v2410
    %v2443 = vadd.f32 %v2350, %v2411
    %v2444 = vadd.f32 %v2352, %v2412
    %v2445 = vadd.f32 %v2355, %v2413
    %v2446 = vadd.f32 %v2357, %v2414
    %v2447 = vadd.f32 %v2360, %v2415
    %v2448 = vadd.f32 %v2362, %v2416
    %v2449 = vadd.f32 %v2365, %v2417
    %v2450 = vadd.f32 %v2367, %v2418
    %v2451 = vadd.f32 %v2370, %v2419
    %v2452 = vadd.f32 %v2372, %v2420
    %v2453 = vadd.f32 %v2375, %v2421
    %v2454 = vadd.f32 %v2377, %v2422
    %v2455 = vadd.f32 %v2380, %v2423
    %v2456 = vadd.f32 %v2382, %v2424
    %v2457 = vadd.f32 %v2385, %v2425
    %v2458 = vadd.f32 %v2387, %v2426
    %v2459 = vadd.f32 %v2390, %v2427
    %v2460 = vadd.f32 %v2392, %v2428
    %v2461 = vadd.f32 %v2395, %v2429
    %v2462 = vadd.f32 %v2397, %v2430
    %v2463 = vlaneseq
    %v2464 = vand.u32 %v2463, 127
    %vm2465 = vcmask 39936
    %v2466 = vsel %vm2465, %v2431, -inf
    %2467 = vmax.xlane.f32.xlu0 %v2466
    %v2468 = vpop.xlane.xlu0 %2467
    %v2469 = vsel %vm2465, %v2432, -inf
    %2470 = vmax.xlane.f32.xlu0 %v2469
    %v2471 = vpop.xlane.xlu0 %2470
    %v2472 = vsel %vm2465, %v2433, -inf
    %2473 = vmax.xlane.f32.xlu0 %v2472
    %v2474 = vpop.xlane.xlu0 %2473
    %v2475 = vsel %vm2465, %v2434, -inf
    %2476 = vmax.xlane.f32.xlu0 %v2475
    %v2477 = vpop.xlane.xlu0 %2476
    %v2478 = vsel %vm2465, %v2435, -inf
    %2479 = vmax.xlane.f32.xlu0 %v2478
    %v2480 = vpop.xlane.xlu0 %2479
    %v2481 = vsel %vm2465, %v2436, -inf
    %2482 = vmax.xlane.f32.xlu0 %v2481
    %v2483 = vpop.xlane.xlu0 %2482
    %v2484 = vsel %vm2465, %v2437, -inf
    %2485 = vmax.xlane.f32.xlu0 %v2484
    %v2486 = vpop.xlane.xlu0 %2485
    %v2487 = vsel %vm2465, %v2438, -inf
    %2488 = vmax.xlane.f32.xlu0 %v2487
    %v2489 = vpop.xlane.xlu0 %2488
    %v2490 = vsel %vm2465, %v2439, -inf
    %2491 = vmax.xlane.f32.xlu0 %v2490
    %v2492 = vpop.xlane.xlu0 %2491
    %v2493 = vsel %vm2465, %v2440, -inf
    %2494 = vmax.xlane.f32.xlu0 %v2493
    %v2495 = vpop.xlane.xlu0 %2494
    %v2496 = vsel %vm2465, %v2441, -inf
    %2497 = vmax.xlane.f32.xlu0 %v2496
    %v2498 = vpop.xlane.xlu0 %2497
    %v2499 = vsel %vm2465, %v2442, -inf
    %2500 = vmax.xlane.f32.xlu0 %v2499
    %v2501 = vpop.xlane.xlu0 %2500
    %v2502 = vsel %vm2465, %v2443, -inf
    %2503 = vmax.xlane.f32.xlu0 %v2502
    %v2504 = vpop.xlane.xlu0 %2503
    %v2505 = vsel %vm2465, %v2444, -inf
    %2506 = vmax.xlane.f32.xlu0 %v2505
    %v2507 = vpop.xlane.xlu0 %2506
    %v2508 = vsel %vm2465, %v2445, -inf
    %2509 = vmax.xlane.f32.xlu0 %v2508
    %v2510 = vpop.xlane.xlu0 %2509
    %v2511 = vsel %vm2465, %v2446, -inf
    %2512 = vmax.xlane.f32.xlu0 %v2511
    %v2513 = vpop.xlane.xlu0 %2512
    %v2514 = vsel %vm2465, %v2447, -inf
    %2515 = vmax.xlane.f32.xlu0 %v2514
    %v2516 = vpop.xlane.xlu0 %2515
    %v2517 = vsel %vm2465, %v2448, -inf
    %2518 = vmax.xlane.f32.xlu0 %v2517
    %v2519 = vpop.xlane.xlu0 %2518
    %v2520 = vsel %vm2465, %v2449, -inf
    %2521 = vmax.xlane.f32.xlu0 %v2520
    %v2522 = vpop.xlane.xlu0 %2521
    %v2523 = vsel %vm2465, %v2450, -inf
    %2524 = vmax.xlane.f32.xlu0 %v2523
    %v2525 = vpop.xlane.xlu0 %2524
    %v2526 = vsel %vm2465, %v2451, -inf
    %2527 = vmax.xlane.f32.xlu0 %v2526
    %v2528 = vpop.xlane.xlu0 %2527
    %v2529 = vsel %vm2465, %v2452, -inf
    %2530 = vmax.xlane.f32.xlu0 %v2529
    %v2531 = vpop.xlane.xlu0 %2530
    %v2532 = vsel %vm2465, %v2453, -inf
    %2533 = vmax.xlane.f32.xlu0 %v2532
    %v2534 = vpop.xlane.xlu0 %2533
    %v2535 = vsel %vm2465, %v2454, -inf
    %2536 = vmax.xlane.f32.xlu0 %v2535
    %v2537 = vpop.xlane.xlu0 %2536
    %v2538 = vsel %vm2465, %v2455, -inf
    %2539 = vmax.xlane.f32.xlu0 %v2538
    %v2540 = vpop.xlane.xlu0 %2539
    %v2541 = vsel %vm2465, %v2456, -inf
    %2542 = vmax.xlane.f32.xlu0 %v2541
    %v2543 = vpop.xlane.xlu0 %2542
    %v2544 = vsel %vm2465, %v2457, -inf
    %2545 = vmax.xlane.f32.xlu0 %v2544
    %v2546 = vpop.xlane.xlu0 %2545
    %v2547 = vsel %vm2465, %v2458, -inf
    %2548 = vmax.xlane.f32.xlu0 %v2547
    %v2549 = vpop.xlane.xlu0 %2548
    %v2550 = vsel %vm2465, %v2459, -inf
    %2551 = vmax.xlane.f32.xlu0 %v2550
    %v2552 = vpop.xlane.xlu0 %2551
    %v2553 = vsel %vm2465, %v2460, -inf
    %2554 = vmax.xlane.f32.xlu0 %v2553
    %v2555 = vpop.xlane.xlu0 %2554
    %v2556 = vsel %vm2465, %v2461, -inf
    %2557 = vmax.xlane.f32.xlu0 %v2556
    %v2558 = vpop.xlane.xlu0 %2557
    %v2559 = vsel %vm2465, %v2462, -inf
    %2560 = vmax.xlane.f32.xlu0 %v2559
    %v2561 = vpop.xlane.xlu0 %2560
    %vm2562 = vcmp.eq.f32.partialorder %v2431, %v2468
    %vm2563 = vcmp.eq.f32.partialorder %v2432, %v2471
    %vm2564 = vcmp.eq.f32.partialorder %v2433, %v2474
    %vm2565 = vcmp.eq.f32.partialorder %v2434, %v2477
    %vm2566 = vcmp.eq.f32.partialorder %v2435, %v2480
    %vm2567 = vcmp.eq.f32.partialorder %v2436, %v2483
    %vm2568 = vcmp.eq.f32.partialorder %v2437, %v2486
    %vm2569 = vcmp.eq.f32.partialorder %v2438, %v2489
    %vm2570 = vcmp.eq.f32.partialorder %v2439, %v2492
    %vm2571 = vcmp.eq.f32.partialorder %v2440, %v2495
    %vm2572 = vcmp.eq.f32.partialorder %v2441, %v2498
    %vm2573 = vcmp.eq.f32.partialorder %v2442, %v2501
    %vm2574 = vcmp.eq.f32.partialorder %v2443, %v2504
    %vm2575 = vcmp.eq.f32.partialorder %v2444, %v2507
    %vm2576 = vcmp.eq.f32.partialorder %v2445, %v2510
    %vm2577 = vcmp.eq.f32.partialorder %v2446, %v2513
    %vm2578 = vcmp.eq.f32.partialorder %v2447, %v2516
    %vm2579 = vcmp.eq.f32.partialorder %v2448, %v2519
    %vm2580 = vcmp.eq.f32.partialorder %v2449, %v2522
    %vm2581 = vcmp.eq.f32.partialorder %v2450, %v2525
    %vm2582 = vcmp.eq.f32.partialorder %v2451, %v2528
    %vm2583 = vcmp.eq.f32.partialorder %v2452, %v2531
    %vm2584 = vcmp.eq.f32.partialorder %v2453, %v2534
    %vm2585 = vcmp.eq.f32.partialorder %v2454, %v2537
    %vm2586 = vcmp.eq.f32.partialorder %v2455, %v2540
    %vm2587 = vcmp.eq.f32.partialorder %v2456, %v2543
    %vm2588 = vcmp.eq.f32.partialorder %v2457, %v2546
    %vm2589 = vcmp.eq.f32.partialorder %v2458, %v2549
    %vm2590 = vcmp.eq.f32.partialorder %v2459, %v2552
    %vm2591 = vcmp.eq.f32.partialorder %v2460, %v2555
    %vm2592 = vcmp.eq.f32.partialorder %v2461, %v2558
    %vm2593 = vcmp.eq.f32.partialorder %v2462, %v2561
    %v2594 = vsel %vm2562, %v2464, 5
    %v2595 = vsel %vm2563, %v2464, 5
    %v2596 = vsel %vm2564, %v2464, 5
    %v2597 = vsel %vm2565, %v2464, 5
    %v2598 = vsel %vm2566, %v2464, 5
    %v2599 = vsel %vm2567, %v2464, 5
    %v2600 = vsel %vm2568, %v2464, 5
    %v2601 = vsel %vm2569, %v2464, 5
    %v2602 = vsel %vm2570, %v2464, 5
    %v2603 = vsel %vm2571, %v2464, 5
    %v2604 = vsel %vm2572, %v2464, 5
    %v2605 = vsel %vm2573, %v2464, 5
    %v2606 = vsel %vm2574, %v2464, 5
    %v2607 = vsel %vm2575, %v2464, 5
    %v2608 = vsel %vm2576, %v2464, 5
    %v2609 = vsel %vm2577, %v2464, 5
    %v2610 = vsel %vm2578, %v2464, 5
    %v2611 = vsel %vm2579, %v2464, 5
    %v2612 = vsel %vm2580, %v2464, 5
    %v2613 = vsel %vm2581, %v2464, 5
    %v2614 = vsel %vm2582, %v2464, 5
    %v2615 = vsel %vm2583, %v2464, 5
    %v2616 = vsel %vm2584, %v2464, 5
    %v2617 = vsel %vm2585, %v2464, 5
    %v2618 = vsel %vm2586, %v2464, 5
    %v2619 = vsel %vm2587, %v2464, 5
    %v2620 = vsel %vm2588, %v2464, 5
    %v2621 = vsel %vm2589, %v2464, 5
    %v2622 = vsel %vm2590, %v2464, 5
    %v2623 = vsel %vm2591, %v2464, 5
    %v2624 = vsel %vm2592, %v2464, 5
    %v2625 = vsel %vm2593, %v2464, 5
    %v2626 = vsel %vm2465, %v2594, 2147483647
    %v2627 = vand.u32 %v2626, 65535
    %v2628 = vshra.s32 %v2626, 16
    %v2629 = vcvt.s32.f32 %v2627
    %v2630 = vcvt.s32.f32 %v2628
    %2631 = vmin.xlane.f32.xlu0 %v2630
    %v2632 = vpop.xlane.xlu0 %2631
    %vm2633 = vcmp.eq.f32.partialorder %v2630, %v2632
    %v2634 = vsel %vm2633, %v2629, inf
    %2635 = vmin.xlane.f32.xlu0 %v2634
    %v2636 = vpop.xlane.xlu0 %2635
    %v2637 = vcvt.f32.s32 %v2636
    %v2638 = vcvt.f32.s32 %v2632
    %v2639 = vshll.u32 %v2638, 16
    %v2640 = vadd.s32 %v2639, %v2637
    %v2641 = vsel %vm2465, %v2595, 2147483647
    %v2642 = vand.u32 %v2641, 65535
    %v2643 = vshra.s32 %v2641, 16
    %v2644 = vcvt.s32.f32 %v2642
    %v2645 = vcvt.s32.f32 %v2643
    %2646 = vmin.xlane.f32.xlu0 %v2645
    %v2647 = vpop.xlane.xlu0 %2646
    %vm2648 = vcmp.eq.f32.partialorder %v2645, %v2647
    %v2649 = vsel %vm2648, %v2644, inf
    %2650 = vmin.xlane.f32.xlu0 %v2649
    %v2651 = vpop.xlane.xlu0 %2650
    %v2652 = vcvt.f32.s32 %v2651
    %v2653 = vcvt.f32.s32 %v2647
    %v2654 = vshll.u32 %v2653, 16
    %v2655 = vadd.s32 %v2654, %v2652
    %v2656 = vsel %vm2465, %v2596, 2147483647
    %v2657 = vand.u32 %v2656, 65535
    %v2658 = vshra.s32 %v2656, 16
    %v2659 = vcvt.s32.f32 %v2657
    %v2660 = vcvt.s32.f32 %v2658
    %2661 = vmin.xlane.f32.xlu0 %v2660
    %v2662 = vpop.xlane.xlu0 %2661
    %vm2663 = vcmp.eq.f32.partialorder %v2660, %v2662
    %v2664 = vsel %vm2663, %v2659, inf
    %2665 = vmin.xlane.f32.xlu0 %v2664
    %v2666 = vpop.xlane.xlu0 %2665
    %v2667 = vcvt.f32.s32 %v2666
    %v2668 = vcvt.f32.s32 %v2662
    %v2669 = vshll.u32 %v2668, 16
    %v2670 = vadd.s32 %v2669, %v2667
    %v2671 = vsel %vm2465, %v2597, 2147483647
    %v2672 = vand.u32 %v2671, 65535
    %v2673 = vshra.s32 %v2671, 16
    %v2674 = vcvt.s32.f32 %v2672
    %v2675 = vcvt.s32.f32 %v2673
    %2676 = vmin.xlane.f32.xlu0 %v2675
    %v2677 = vpop.xlane.xlu0 %2676
    %vm2678 = vcmp.eq.f32.partialorder %v2675, %v2677
    %v2679 = vsel %vm2678, %v2674, inf
    %2680 = vmin.xlane.f32.xlu0 %v2679
    %v2681 = vpop.xlane.xlu0 %2680
    %v2682 = vcvt.f32.s32 %v2681
    %v2683 = vcvt.f32.s32 %v2677
    %v2684 = vshll.u32 %v2683, 16
    %v2685 = vadd.s32 %v2684, %v2682
    %v2686 = vsel %vm2465, %v2598, 2147483647
    %v2687 = vand.u32 %v2686, 65535
    %v2688 = vshra.s32 %v2686, 16
    %v2689 = vcvt.s32.f32 %v2687
    %v2690 = vcvt.s32.f32 %v2688
    %2691 = vmin.xlane.f32.xlu0 %v2690
    %v2692 = vpop.xlane.xlu0 %2691
    %vm2693 = vcmp.eq.f32.partialorder %v2690, %v2692
    %v2694 = vsel %vm2693, %v2689, inf
    %2695 = vmin.xlane.f32.xlu0 %v2694
    %v2696 = vpop.xlane.xlu0 %2695
    %v2697 = vcvt.f32.s32 %v2696
    %v2698 = vcvt.f32.s32 %v2692
    %v2699 = vshll.u32 %v2698, 16
    %v2700 = vadd.s32 %v2699, %v2697
    %v2701 = vsel %vm2465, %v2599, 2147483647
    %v2702 = vand.u32 %v2701, 65535
    %v2703 = vshra.s32 %v2701, 16
    %v2704 = vcvt.s32.f32 %v2702
    %v2705 = vcvt.s32.f32 %v2703
    %2706 = vmin.xlane.f32.xlu0 %v2705
    %v2707 = vpop.xlane.xlu0 %2706
    %vm2708 = vcmp.eq.f32.partialorder %v2705, %v2707
    %v2709 = vsel %vm2708, %v2704, inf
    %2710 = vmin.xlane.f32.xlu0 %v2709
    %v2711 = vpop.xlane.xlu0 %2710
    %v2712 = vcvt.f32.s32 %v2711
    %v2713 = vcvt.f32.s32 %v2707
    %v2714 = vshll.u32 %v2713, 16
    %v2715 = vadd.s32 %v2714, %v2712
    %v2716 = vsel %vm2465, %v2600, 2147483647
    %v2717 = vand.u32 %v2716, 65535
    %v2718 = vshra.s32 %v2716, 16
    %v2719 = vcvt.s32.f32 %v2717
    %v2720 = vcvt.s32.f32 %v2718
    %2721 = vmin.xlane.f32.xlu0 %v2720
    %v2722 = vpop.xlane.xlu0 %2721
    %vm2723 = vcmp.eq.f32.partialorder %v2720, %v2722
    %v2724 = vsel %vm2723, %v2719, inf
    %2725 = vmin.xlane.f32.xlu0 %v2724
    %v2726 = vpop.xlane.xlu0 %2725
    %v2727 = vcvt.f32.s32 %v2726
    %v2728 = vcvt.f32.s32 %v2722
    %v2729 = vshll.u32 %v2728, 16
    %v2730 = vadd.s32 %v2729, %v2727
    %v2731 = vsel %vm2465, %v2601, 2147483647
    %v2732 = vand.u32 %v2731, 65535
    %v2733 = vshra.s32 %v2731, 16
    %v2734 = vcvt.s32.f32 %v2732
    %v2735 = vcvt.s32.f32 %v2733
    %2736 = vmin.xlane.f32.xlu0 %v2735
    %v2737 = vpop.xlane.xlu0 %2736
    %vm2738 = vcmp.eq.f32.partialorder %v2735, %v2737
    %v2739 = vsel %vm2738, %v2734, inf
    %2740 = vmin.xlane.f32.xlu0 %v2739
    %v2741 = vpop.xlane.xlu0 %2740
    %v2742 = vcvt.f32.s32 %v2741
    %v2743 = vcvt.f32.s32 %v2737
    %v2744 = vshll.u32 %v2743, 16
    %v2745 = vadd.s32 %v2744, %v2742
    %v2746 = vsel %vm2465, %v2602, 2147483647
    %v2747 = vand.u32 %v2746, 65535
    %v2748 = vshra.s32 %v2746, 16
    %v2749 = vcvt.s32.f32 %v2747
    %v2750 = vcvt.s32.f32 %v2748
    %2751 = vmin.xlane.f32.xlu0 %v2750
    %v2752 = vpop.xlane.xlu0 %2751
    %vm2753 = vcmp.eq.f32.partialorder %v2750, %v2752
    %v2754 = vsel %vm2753, %v2749, inf
    %2755 = vmin.xlane.f32.xlu0 %v2754
    %v2756 = vpop.xlane.xlu0 %2755
    %v2757 = vcvt.f32.s32 %v2756
    %v2758 = vcvt.f32.s32 %v2752
    %v2759 = vshll.u32 %v2758, 16
    %v2760 = vadd.s32 %v2759, %v2757
    %v2761 = vsel %vm2465, %v2603, 2147483647
    %v2762 = vand.u32 %v2761, 65535
    %v2763 = vshra.s32 %v2761, 16
    %v2764 = vcvt.s32.f32 %v2762
    %v2765 = vcvt.s32.f32 %v2763
    %2766 = vmin.xlane.f32.xlu0 %v2765
    %v2767 = vpop.xlane.xlu0 %2766
    %vm2768 = vcmp.eq.f32.partialorder %v2765, %v2767
    %v2769 = vsel %vm2768, %v2764, inf
    %2770 = vmin.xlane.f32.xlu0 %v2769
    %v2771 = vpop.xlane.xlu0 %2770
    %v2772 = vcvt.f32.s32 %v2771
    %v2773 = vcvt.f32.s32 %v2767
    %v2774 = vshll.u32 %v2773, 16
    %v2775 = vadd.s32 %v2774, %v2772
    %v2776 = vsel %vm2465, %v2604, 2147483647
    %v2777 = vand.u32 %v2776, 65535
    %v2778 = vshra.s32 %v2776, 16
    %v2779 = vcvt.s32.f32 %v2777
    %v2780 = vcvt.s32.f32 %v2778
    %2781 = vmin.xlane.f32.xlu0 %v2780
    %v2782 = vpop.xlane.xlu0 %2781
    %vm2783 = vcmp.eq.f32.partialorder %v2780, %v2782
    %v2784 = vsel %vm2783, %v2779, inf
    %2785 = vmin.xlane.f32.xlu0 %v2784
    %v2786 = vpop.xlane.xlu0 %2785
    %v2787 = vcvt.f32.s32 %v2786
    %v2788 = vcvt.f32.s32 %v2782
    %v2789 = vshll.u32 %v2788, 16
    %v2790 = vadd.s32 %v2789, %v2787
    %v2791 = vsel %vm2465, %v2605, 2147483647
    %v2792 = vand.u32 %v2791, 65535
    %v2793 = vshra.s32 %v2791, 16
    %v2794 = vcvt.s32.f32 %v2792
    %v2795 = vcvt.s32.f32 %v2793
    %2796 = vmin.xlane.f32.xlu0 %v2795
    %v2797 = vpop.xlane.xlu0 %2796
    %vm2798 = vcmp.eq.f32.partialorder %v2795, %v2797
    %v2799 = vsel %vm2798, %v2794, inf
    %2800 = vmin.xlane.f32.xlu0 %v2799
    %v2801 = vpop.xlane.xlu0 %2800
    %v2802 = vcvt.f32.s32 %v2801
    %v2803 = vcvt.f32.s32 %v2797
    %v2804 = vshll.u32 %v2803, 16
    %v2805 = vadd.s32 %v2804, %v2802
    %v2806 = vsel %vm2465, %v2606, 2147483647
    %v2807 = vand.u32 %v2806, 65535
    %v2808 = vshra.s32 %v2806, 16
    %v2809 = vcvt.s32.f32 %v2807
    %v2810 = vcvt.s32.f32 %v2808
    %2811 = vmin.xlane.f32.xlu0 %v2810
    %v2812 = vpop.xlane.xlu0 %2811
    %vm2813 = vcmp.eq.f32.partialorder %v2810, %v2812
    %v2814 = vsel %vm2813, %v2809, inf
    %2815 = vmin.xlane.f32.xlu0 %v2814
    %v2816 = vpop.xlane.xlu0 %2815
    %v2817 = vcvt.f32.s32 %v2816
    %v2818 = vcvt.f32.s32 %v2812
    %v2819 = vshll.u32 %v2818, 16
    %v2820 = vadd.s32 %v2819, %v2817
    %v2821 = vsel %vm2465, %v2607, 2147483647
    %v2822 = vand.u32 %v2821, 65535
    %v2823 = vshra.s32 %v2821, 16
    %v2824 = vcvt.s32.f32 %v2822
    %v2825 = vcvt.s32.f32 %v2823
    %2826 = vmin.xlane.f32.xlu0 %v2825
    %v2827 = vpop.xlane.xlu0 %2826
    %vm2828 = vcmp.eq.f32.partialorder %v2825, %v2827
    %v2829 = vsel %vm2828, %v2824, inf
    %2830 = vmin.xlane.f32.xlu0 %v2829
    %v2831 = vpop.xlane.xlu0 %2830
    %v2832 = vcvt.f32.s32 %v2831
    %v2833 = vcvt.f32.s32 %v2827
    %v2834 = vshll.u32 %v2833, 16
    %v2835 = vadd.s32 %v2834, %v2832
    %v2836 = vsel %vm2465, %v2608, 2147483647
    %v2837 = vand.u32 %v2836, 65535
    %v2838 = vshra.s32 %v2836, 16
    %v2839 = vcvt.s32.f32 %v2837
    %v2840 = vcvt.s32.f32 %v2838
    %2841 = vmin.xlane.f32.xlu0 %v2840
    %v2842 = vpop.xlane.xlu0 %2841
    %vm2843 = vcmp.eq.f32.partialorder %v2840, %v2842
    %v2844 = vsel %vm2843, %v2839, inf
    %2845 = vmin.xlane.f32.xlu0 %v2844
    %v2846 = vpop.xlane.xlu0 %2845
    %v2847 = vcvt.f32.s32 %v2846
    %v2848 = vcvt.f32.s32 %v2842
    %v2849 = vshll.u32 %v2848, 16
    %v2850 = vadd.s32 %v2849, %v2847
    %v2851 = vsel %vm2465, %v2609, 2147483647
    %v2852 = vand.u32 %v2851, 65535
    %v2853 = vshra.s32 %v2851, 16
    %v2854 = vcvt.s32.f32 %v2852
    %v2855 = vcvt.s32.f32 %v2853
    %2856 = vmin.xlane.f32.xlu0 %v2855
    %v2857 = vpop.xlane.xlu0 %2856
    %vm2858 = vcmp.eq.f32.partialorder %v2855, %v2857
    %v2859 = vsel %vm2858, %v2854, inf
    %2860 = vmin.xlane.f32.xlu0 %v2859
    %v2861 = vpop.xlane.xlu0 %2860
    %v2862 = vcvt.f32.s32 %v2861
    %v2863 = vcvt.f32.s32 %v2857
    %v2864 = vshll.u32 %v2863, 16
    %v2865 = vadd.s32 %v2864, %v2862
    %v2866 = vsel %vm2465, %v2610, 2147483647
    %v2867 = vand.u32 %v2866, 65535
    %v2868 = vshra.s32 %v2866, 16
    %v2869 = vcvt.s32.f32 %v2867
    %v2870 = vcvt.s32.f32 %v2868
    %2871 = vmin.xlane.f32.xlu0 %v2870
    %v2872 = vpop.xlane.xlu0 %2871
    %vm2873 = vcmp.eq.f32.partialorder %v2870, %v2872
    %v2874 = vsel %vm2873, %v2869, inf
    %2875 = vmin.xlane.f32.xlu0 %v2874
    %v2876 = vpop.xlane.xlu0 %2875
    %v2877 = vcvt.f32.s32 %v2876
    %v2878 = vcvt.f32.s32 %v2872
    %v2879 = vshll.u32 %v2878, 16
    %v2880 = vadd.s32 %v2879, %v2877
    %v2881 = vsel %vm2465, %v2611, 2147483647
    %v2882 = vand.u32 %v2881, 65535
    %v2883 = vshra.s32 %v2881, 16
    %v2884 = vcvt.s32.f32 %v2882
    %v2885 = vcvt.s32.f32 %v2883
    %2886 = vmin.xlane.f32.xlu0 %v2885
    %v2887 = vpop.xlane.xlu0 %2886
    %vm2888 = vcmp.eq.f32.partialorder %v2885, %v2887
    %v2889 = vsel %vm2888, %v2884, inf
    %2890 = vmin.xlane.f32.xlu0 %v2889
    %v2891 = vpop.xlane.xlu0 %2890
    %v2892 = vcvt.f32.s32 %v2891
    %v2893 = vcvt.f32.s32 %v2887
    %v2894 = vshll.u32 %v2893, 16
    %v2895 = vadd.s32 %v2894, %v2892
    %v2896 = vsel %vm2465, %v2612, 2147483647
    %v2897 = vand.u32 %v2896, 65535
    %v2898 = vshra.s32 %v2896, 16
    %v2899 = vcvt.s32.f32 %v2897
    %v2900 = vcvt.s32.f32 %v2898
    %2901 = vmin.xlane.f32.xlu0 %v2900
    %v2902 = vpop.xlane.xlu0 %2901
    %vm2903 = vcmp.eq.f32.partialorder %v2900, %v2902
    %v2904 = vsel %vm2903, %v2899, inf
    %2905 = vmin.xlane.f32.xlu0 %v2904
    %v2906 = vpop.xlane.xlu0 %2905
    %v2907 = vcvt.f32.s32 %v2906
    %v2908 = vcvt.f32.s32 %v2902
    %v2909 = vshll.u32 %v2908, 16
    %v2910 = vadd.s32 %v2909, %v2907
    %v2911 = vsel %vm2465, %v2613, 2147483647
    %v2912 = vand.u32 %v2911, 65535
    %v2913 = vshra.s32 %v2911, 16
    %v2914 = vcvt.s32.f32 %v2912
    %v2915 = vcvt.s32.f32 %v2913
    %2916 = vmin.xlane.f32.xlu0 %v2915
    %v2917 = vpop.xlane.xlu0 %2916
    %vm2918 = vcmp.eq.f32.partialorder %v2915, %v2917
    %v2919 = vsel %vm2918, %v2914, inf
    %2920 = vmin.xlane.f32.xlu0 %v2919
    %v2921 = vpop.xlane.xlu0 %2920
    %v2922 = vcvt.f32.s32 %v2921
    %v2923 = vcvt.f32.s32 %v2917
    %v2924 = vshll.u32 %v2923, 16
    %v2925 = vadd.s32 %v2924, %v2922
    %v2926 = vsel %vm2465, %v2614, 2147483647
    %v2927 = vand.u32 %v2926, 65535
    %v2928 = vshra.s32 %v2926, 16
    %v2929 = vcvt.s32.f32 %v2927
    %v2930 = vcvt.s32.f32 %v2928
    %2931 = vmin.xlane.f32.xlu0 %v2930
    %v2932 = vpop.xlane.xlu0 %2931
    %vm2933 = vcmp.eq.f32.partialorder %v2930, %v2932
    %v2934 = vsel %vm2933, %v2929, inf
    %2935 = vmin.xlane.f32.xlu0 %v2934
    %v2936 = vpop.xlane.xlu0 %2935
    %v2937 = vcvt.f32.s32 %v2936
    %v2938 = vcvt.f32.s32 %v2932
    %v2939 = vshll.u32 %v2938, 16
    %v2940 = vadd.s32 %v2939, %v2937
    %v2941 = vsel %vm2465, %v2615, 2147483647
    %v2942 = vand.u32 %v2941, 65535
    %v2943 = vshra.s32 %v2941, 16
    %v2944 = vcvt.s32.f32 %v2942
    %v2945 = vcvt.s32.f32 %v2943
    %2946 = vmin.xlane.f32.xlu0 %v2945
    %v2947 = vpop.xlane.xlu0 %2946
    %vm2948 = vcmp.eq.f32.partialorder %v2945, %v2947
    %v2949 = vsel %vm2948, %v2944, inf
    %2950 = vmin.xlane.f32.xlu0 %v2949
    %v2951 = vpop.xlane.xlu0 %2950
    %v2952 = vcvt.f32.s32 %v2951
    %v2953 = vcvt.f32.s32 %v2947
    %v2954 = vshll.u32 %v2953, 16
    %v2955 = vadd.s32 %v2954, %v2952
    %v2956 = vsel %vm2465, %v2616, 2147483647
    %v2957 = vand.u32 %v2956, 65535
    %v2958 = vshra.s32 %v2956, 16
    %v2959 = vcvt.s32.f32 %v2957
    %v2960 = vcvt.s32.f32 %v2958
    %2961 = vmin.xlane.f32.xlu0 %v2960
    %v2962 = vpop.xlane.xlu0 %2961
    %vm2963 = vcmp.eq.f32.partialorder %v2960, %v2962
    %v2964 = vsel %vm2963, %v2959, inf
    %2965 = vmin.xlane.f32.xlu0 %v2964
    %v2966 = vpop.xlane.xlu0 %2965
    %v2967 = vcvt.f32.s32 %v2966
    %v2968 = vcvt.f32.s32 %v2962
    %v2969 = vshll.u32 %v2968, 16
    %v2970 = vadd.s32 %v2969, %v2967
    %v2971 = vsel %vm2465, %v2617, 2147483647
    %v2972 = vand.u32 %v2971, 65535
    %v2973 = vshra.s32 %v2971, 16
    %v2974 = vcvt.s32.f32 %v2972
    %v2975 = vcvt.s32.f32 %v2973
    %2976 = vmin.xlane.f32.xlu0 %v2975
    %v2977 = vpop.xlane.xlu0 %2976
    %vm2978 = vcmp.eq.f32.partialorder %v2975, %v2977
    %v2979 = vsel %vm2978, %v2974, inf
    %2980 = vmin.xlane.f32.xlu0 %v2979
    %v2981 = vpop.xlane.xlu0 %2980
    %v2982 = vcvt.f32.s32 %v2981
    %v2983 = vcvt.f32.s32 %v2977
    %v2984 = vshll.u32 %v2983, 16
    %v2985 = vadd.s32 %v2984, %v2982
    %v2986 = vsel %vm2465, %v2618, 2147483647
    %v2987 = vand.u32 %v2986, 65535
    %v2988 = vshra.s32 %v2986, 16
    %v2989 = vcvt.s32.f32 %v2987
    %v2990 = vcvt.s32.f32 %v2988
    %2991 = vmin.xlane.f32.xlu0 %v2990
    %v2992 = vpop.xlane.xlu0 %2991
    %vm2993 = vcmp.eq.f32.partialorder %v2990, %v2992
    %v2994 = vsel %vm2993, %v2989, inf
    %2995 = vmin.xlane.f32.xlu0 %v2994
    %v2996 = vpop.xlane.xlu0 %2995
    %v2997 = vcvt.f32.s32 %v2996
    %v2998 = vcvt.f32.s32 %v2992
    %v2999 = vshll.u32 %v2998, 16
    %v3000 = vadd.s32 %v2999, %v2997
    %v3001 = vsel %vm2465, %v2619, 2147483647
    %v3002 = vand.u32 %v3001, 65535
    %v3003 = vshra.s32 %v3001, 16
    %v3004 = vcvt.s32.f32 %v3002
    %v3005 = vcvt.s32.f32 %v3003
    %3006 = vmin.xlane.f32.xlu0 %v3005
    %v3007 = vpop.xlane.xlu0 %3006
    %vm3008 = vcmp.eq.f32.partialorder %v3005, %v3007
    %v3009 = vsel %vm3008, %v3004, inf
    %3010 = vmin.xlane.f32.xlu0 %v3009
    %v3011 = vpop.xlane.xlu0 %3010
    %v3012 = vcvt.f32.s32 %v3011
    %v3013 = vcvt.f32.s32 %v3007
    %v3014 = vshll.u32 %v3013, 16
    %v3015 = vadd.s32 %v3014, %v3012
    %v3016 = vsel %vm2465, %v2620, 2147483647
    %v3017 = vand.u32 %v3016, 65535
    %v3018 = vshra.s32 %v3016, 16
    %v3019 = vcvt.s32.f32 %v3017
    %v3020 = vcvt.s32.f32 %v3018
    %3021 = vmin.xlane.f32.xlu0 %v3020
    %v3022 = vpop.xlane.xlu0 %3021
    %vm3023 = vcmp.eq.f32.partialorder %v3020, %v3022
    %v3024 = vsel %vm3023, %v3019, inf
    %3025 = vmin.xlane.f32.xlu0 %v3024
    %v3026 = vpop.xlane.xlu0 %3025
    %v3027 = vcvt.f32.s32 %v3026
    %v3028 = vcvt.f32.s32 %v3022
    %v3029 = vshll.u32 %v3028, 16
    %v3030 = vadd.s32 %v3029, %v3027
    %v3031 = vsel %vm2465, %v2621, 2147483647
    %v3032 = vand.u32 %v3031, 65535
    %v3033 = vshra.s32 %v3031, 16
    %v3034 = vcvt.s32.f32 %v3032
    %v3035 = vcvt.s32.f32 %v3033
    %3036 = vmin.xlane.f32.xlu0 %v3035
    %v3037 = vpop.xlane.xlu0 %3036
    %vm3038 = vcmp.eq.f32.partialorder %v3035, %v3037
    %v3039 = vsel %vm3038, %v3034, inf
    %3040 = vmin.xlane.f32.xlu0 %v3039
    %v3041 = vpop.xlane.xlu0 %3040
    %v3042 = vcvt.f32.s32 %v3041
    %v3043 = vcvt.f32.s32 %v3037
    %v3044 = vshll.u32 %v3043, 16
    %v3045 = vadd.s32 %v3044, %v3042
    %v3046 = vsel %vm2465, %v2622, 2147483647
    %v3047 = vand.u32 %v3046, 65535
    %v3048 = vshra.s32 %v3046, 16
    %v3049 = vcvt.s32.f32 %v3047
    %v3050 = vcvt.s32.f32 %v3048
    %3051 = vmin.xlane.f32.xlu0 %v3050
    %v3052 = vpop.xlane.xlu0 %3051
    %vm3053 = vcmp.eq.f32.partialorder %v3050, %v3052
    %v3054 = vsel %vm3053, %v3049, inf
    %3055 = vmin.xlane.f32.xlu0 %v3054
    %v3056 = vpop.xlane.xlu0 %3055
    %v3057 = vcvt.f32.s32 %v3056
    %v3058 = vcvt.f32.s32 %v3052
    %v3059 = vshll.u32 %v3058, 16
    %v3060 = vadd.s32 %v3059, %v3057
    %v3061 = vsel %vm2465, %v2623, 2147483647
    %v3062 = vand.u32 %v3061, 65535
    %v3063 = vshra.s32 %v3061, 16
    %v3064 = vcvt.s32.f32 %v3062
    %v3065 = vcvt.s32.f32 %v3063
    %3066 = vmin.xlane.f32.xlu0 %v3065
    %v3067 = vpop.xlane.xlu0 %3066
    %vm3068 = vcmp.eq.f32.partialorder %v3065, %v3067
    %v3069 = vsel %vm3068, %v3064, inf
    %3070 = vmin.xlane.f32.xlu0 %v3069
    %v3071 = vpop.xlane.xlu0 %3070
    %v3072 = vcvt.f32.s32 %v3071
    %v3073 = vcvt.f32.s32 %v3067
    %v3074 = vshll.u32 %v3073, 16
    %v3075 = vadd.s32 %v3074, %v3072
    %v3076 = vsel %vm2465, %v2624, 2147483647
    %v3077 = vand.u32 %v3076, 65535
    %v3078 = vshra.s32 %v3076, 16
    %v3079 = vcvt.s32.f32 %v3077
    %v3080 = vcvt.s32.f32 %v3078
    %3081 = vmin.xlane.f32.xlu0 %v3080
    %v3082 = vpop.xlane.xlu0 %3081
    %vm3083 = vcmp.eq.f32.partialorder %v3080, %v3082
    %v3084 = vsel %vm3083, %v3079, inf
    %3085 = vmin.xlane.f32.xlu0 %v3084
    %v3086 = vpop.xlane.xlu0 %3085
    %v3087 = vcvt.f32.s32 %v3086
    %v3088 = vcvt.f32.s32 %v3082
    %v3089 = vshll.u32 %v3088, 16
    %v3090 = vadd.s32 %v3089, %v3087
    %v3091 = vsel %vm2465, %v2625, 2147483647
    %v3092 = vand.u32 %v3091, 65535
    %v3093 = vshra.s32 %v3091, 16
    %v3094 = vcvt.s32.f32 %v3092
    %v3095 = vcvt.s32.f32 %v3093
    %3096 = vmin.xlane.f32.xlu0 %v3095
    %v3097 = vpop.xlane.xlu0 %3096
    %vm3098 = vcmp.eq.f32.partialorder %v3095, %v3097
    %v3099 = vsel %vm3098, %v3094, inf
    %3100 = vmin.xlane.f32.xlu0 %v3099
    %v3101 = vpop.xlane.xlu0 %3100
    %v3102 = vcvt.f32.s32 %v3101
    %v3103 = vcvt.f32.s32 %v3097
    %v3104 = vshll.u32 %v3103, 16
    %v3105 = vadd.s32 %v3104, %v3102
    %vm3106 = vcmp.eq.s32.totalorder %v2464, %v2640
    %vm3107 = vcmp.eq.s32.totalorder %v2464, %v2655
    %vm3108 = vcmp.eq.s32.totalorder %v2464, %v2670
    %vm3109 = vcmp.eq.s32.totalorder %v2464, %v2685
    %vm3110 = vcmp.eq.s32.totalorder %v2464, %v2700
    %vm3111 = vcmp.eq.s32.totalorder %v2464, %v2715
    %vm3112 = vcmp.eq.s32.totalorder %v2464, %v2730
    %vm3113 = vcmp.eq.s32.totalorder %v2464, %v2745
    %vm3114 = vcmp.eq.s32.totalorder %v2464, %v2760
    %vm3115 = vcmp.eq.s32.totalorder %v2464, %v2775
    %vm3116 = vcmp.eq.s32.totalorder %v2464, %v2790
    %vm3117 = vcmp.eq.s32.totalorder %v2464, %v2805
    %vm3118 = vcmp.eq.s32.totalorder %v2464, %v2820
    %vm3119 = vcmp.eq.s32.totalorder %v2464, %v2835
    %vm3120 = vcmp.eq.s32.totalorder %v2464, %v2850
    %vm3121 = vcmp.eq.s32.totalorder %v2464, %v2865
    %vm3122 = vcmp.eq.s32.totalorder %v2464, %v2880
    %vm3123 = vcmp.eq.s32.totalorder %v2464, %v2895
    %vm3124 = vcmp.eq.s32.totalorder %v2464, %v2910
    %vm3125 = vcmp.eq.s32.totalorder %v2464, %v2925
    %vm3126 = vcmp.eq.s32.totalorder %v2464, %v2940
    %vm3127 = vcmp.eq.s32.totalorder %v2464, %v2955
    %vm3128 = vcmp.eq.s32.totalorder %v2464, %v2970
    %vm3129 = vcmp.eq.s32.totalorder %v2464, %v2985
    %vm3130 = vcmp.eq.s32.totalorder %v2464, %v3000
    %vm3131 = vcmp.eq.s32.totalorder %v2464, %v3015
    %vm3132 = vcmp.eq.s32.totalorder %v2464, %v3030
    %vm3133 = vcmp.eq.s32.totalorder %v2464, %v3045
    %vm3134 = vcmp.eq.s32.totalorder %v2464, %v3060
    %vm3135 = vcmp.eq.s32.totalorder %v2464, %v3075
    %vm3136 = vcmp.eq.s32.totalorder %v2464, %v3090
    %vm3137 = vcmp.eq.s32.totalorder %v2464, %v3105
    %v3138 = vsel %vm3106, 1, 0
    %v3139 = vsel %vm3107, 1, 0
    %v3140 = vsel %vm3108, 1, 0
    %v3141 = vsel %vm3109, 1, 0
    %v3142 = vsel %vm3110, 1, 0
    %v3143 = vsel %vm3111, 1, 0
    %v3144 = vsel %vm3112, 1, 0
    %v3145 = vsel %vm3113, 1, 0
    %v3146 = vsel %vm3114, 1, 0
    %v3147 = vsel %vm3115, 1, 0
    %v3148 = vsel %vm3116, 1, 0
    %v3149 = vsel %vm3117, 1, 0
    %v3150 = vsel %vm3118, 1, 0
    %v3151 = vsel %vm3119, 1, 0
    %v3152 = vsel %vm3120, 1, 0
    %v3153 = vsel %vm3121, 1, 0
    %v3154 = vsel %vm3122, 1, 0
    %v3155 = vsel %vm3123, 1, 0
    %v3156 = vsel %vm3124, 1, 0
    %v3157 = vsel %vm3125, 1, 0
    %v3158 = vsel %vm3126, 1, 0
    %v3159 = vsel %vm3127, 1, 0
    %v3160 = vsel %vm3128, 1, 0
    %v3161 = vsel %vm3129, 1, 0
    %v3162 = vsel %vm3130, 1, 0
    %v3163 = vsel %vm3131, 1, 0
    %v3164 = vsel %vm3132, 1, 0
    %v3165 = vsel %vm3133, 1, 0
    %v3166 = vsel %vm3134, 1, 0
    %v3167 = vsel %vm3135, 1, 0
    %v3168 = vsel %vm3136, 1, 0
    %v3169 = vsel %vm3137, 1, 0
    %v3170 = vcvt.s32.f32 %v3138
    %v3171 = vcvt.s32.f32 %v3139
    %v3172 = vcvt.s32.f32 %v3140
    %v3173 = vcvt.s32.f32 %v3141
    %v3174 = vcvt.s32.f32 %v3142
    %v3175 = vcvt.s32.f32 %v3143
    %v3176 = vcvt.s32.f32 %v3144
    %v3177 = vcvt.s32.f32 %v3145
    %v3178 = vcvt.s32.f32 %v3146
    %v3179 = vcvt.s32.f32 %v3147
    %v3180 = vcvt.s32.f32 %v3148
    %v3181 = vcvt.s32.f32 %v3149
    %v3182 = vcvt.s32.f32 %v3150
    %v3183 = vcvt.s32.f32 %v3151
    %v3184 = vcvt.s32.f32 %v3152
    %v3185 = vcvt.s32.f32 %v3153
    %v3186 = vcvt.s32.f32 %v3154
    %v3187 = vcvt.s32.f32 %v3155
    %v3188 = vcvt.s32.f32 %v3156
    %v3189 = vcvt.s32.f32 %v3157
    %v3190 = vcvt.s32.f32 %v3158
    %v3191 = vcvt.s32.f32 %v3159
    %v3192 = vcvt.s32.f32 %v3160
    %v3193 = vcvt.s32.f32 %v3161
    %v3194 = vcvt.s32.f32 %v3162
    %v3195 = vcvt.s32.f32 %v3163
    %v3196 = vcvt.s32.f32 %v3164
    %v3197 = vcvt.s32.f32 %v3165
    %v3198 = vcvt.s32.f32 %v3166
    %v3199 = vcvt.s32.f32 %v3167
    %v3200 = vcvt.s32.f32 %v3168
    %v3201 = vcvt.s32.f32 %v3169
    %v3202 = vpack.c.bf16 %v3170, %v3170
    %v3203 = vpack.c.bf16 %v3171, %v3171
    %v3204 = vpack.c.bf16 %v3172, %v3172
    %v3205 = vpack.c.bf16 %v3173, %v3173
    %v3206 = vpack.c.bf16 %v3174, %v3174
    %v3207 = vpack.c.bf16 %v3175, %v3175
    %v3208 = vpack.c.bf16 %v3176, %v3176
    %v3209 = vpack.c.bf16 %v3177, %v3177
    %v3210 = vpack.c.bf16 %v3178, %v3178
    %v3211 = vpack.c.bf16 %v3179, %v3179
    %v3212 = vpack.c.bf16 %v3180, %v3180
    %v3213 = vpack.c.bf16 %v3181, %v3181
    %v3214 = vpack.c.bf16 %v3182, %v3182
    %v3215 = vpack.c.bf16 %v3183, %v3183
    %v3216 = vpack.c.bf16 %v3184, %v3184
    %v3217 = vpack.c.bf16 %v3185, %v3185
    %v3218 = vpack.c.bf16 %v3186, %v3186
    %v3219 = vpack.c.bf16 %v3187, %v3187
    %v3220 = vpack.c.bf16 %v3188, %v3188
    %v3221 = vpack.c.bf16 %v3189, %v3189
    %v3222 = vpack.c.bf16 %v3190, %v3190
    %v3223 = vpack.c.bf16 %v3191, %v3191
    %v3224 = vpack.c.bf16 %v3192, %v3192
    %v3225 = vpack.c.bf16 %v3193, %v3193
    %v3226 = vpack.c.bf16 %v3194, %v3194
    %v3227 = vpack.c.bf16 %v3195, %v3195
    %v3228 = vpack.c.bf16 %v3196, %v3196
    %v3229 = vpack.c.bf16 %v3197, %v3197
    %v3230 = vpack.c.bf16 %v3198, %v3198
    %v3231 = vpack.c.bf16 %v3199, %v3199
    %v3232 = vpack.c.bf16 %v3200, %v3200
    %v3233 = vpack.c.bf16 %v3201, %v3201
    %vm3234 = vcmp.eq.s32.totalorder %v2464, 127
    %v3235 = vcvt.s32.f32 %v2640
    %v3236 = vcvt.s32.f32 %v2655
    %v3237 = vcvt.s32.f32 %v2670
    %v3238 = vcvt.s32.f32 %v2685
    %v3239 = vcvt.s32.f32 %v2700
    %v3240 = vcvt.s32.f32 %v2715
    %v3241 = vcvt.s32.f32 %v2730
    %v3242 = vcvt.s32.f32 %v2745
    %v3243 = vcvt.s32.f32 %v2760
    %v3244 = vcvt.s32.f32 %v2775
    %v3245 = vcvt.s32.f32 %v2790
    %v3246 = vcvt.s32.f32 %v2805
    %v3247 = vcvt.s32.f32 %v2820
    %v3248 = vcvt.s32.f32 %v2835
    %v3249 = vcvt.s32.f32 %v2850
    %v3250 = vcvt.s32.f32 %v2865
    %v3251 = vcvt.s32.f32 %v2880
    %v3252 = vcvt.s32.f32 %v2895
    %v3253 = vcvt.s32.f32 %v2910
    %v3254 = vcvt.s32.f32 %v2925
    %v3255 = vcvt.s32.f32 %v2940
    %v3256 = vcvt.s32.f32 %v2955
    %v3257 = vcvt.s32.f32 %v2970
    %v3258 = vcvt.s32.f32 %v2985
    %v3259 = vcvt.s32.f32 %v3000
    %v3260 = vcvt.s32.f32 %v3015
    %v3261 = vcvt.s32.f32 %v3030
    %v3262 = vcvt.s32.f32 %v3045
    %v3263 = vcvt.s32.f32 %v3060
    %v3264 = vcvt.s32.f32 %v3075
    %v3265 = vcvt.s32.f32 %v3090
    %v3266 = vcvt.s32.f32 %v3105
    %v3267 = vpack.c.bf16 %v3235, %v3235
    %v3268 = vpack.c.bf16 %v3236, %v3236
    %v3269 = vpack.c.bf16 %v3237, %v3237
    %v3270 = vpack.c.bf16 %v3238, %v3238
    %v3271 = vpack.c.bf16 %v3239, %v3239
    %v3272 = vpack.c.bf16 %v3240, %v3240
    %v3273 = vpack.c.bf16 %v3241, %v3241
    %v3274 = vpack.c.bf16 %v3242, %v3242
    %v3275 = vpack.c.bf16 %v3243, %v3243
    %v3276 = vpack.c.bf16 %v3244, %v3244
    %v3277 = vpack.c.bf16 %v3245, %v3245
    %v3278 = vpack.c.bf16 %v3246, %v3246
    %v3279 = vpack.c.bf16 %v3247, %v3247
    %v3280 = vpack.c.bf16 %v3248, %v3248
    %v3281 = vpack.c.bf16 %v3249, %v3249
    %v3282 = vpack.c.bf16 %v3250, %v3250
    %v3283 = vpack.c.bf16 %v3251, %v3251
    %v3284 = vpack.c.bf16 %v3252, %v3252
    %v3285 = vpack.c.bf16 %v3253, %v3253
    %v3286 = vpack.c.bf16 %v3254, %v3254
    %v3287 = vpack.c.bf16 %v3255, %v3255
    %v3288 = vpack.c.bf16 %v3256, %v3256
    %v3289 = vpack.c.bf16 %v3257, %v3257
    %v3290 = vpack.c.bf16 %v3258, %v3258
    %v3291 = vpack.c.bf16 %v3259, %v3259
    %v3292 = vpack.c.bf16 %v3260, %v3260
    %v3293 = vpack.c.bf16 %v3261, %v3261
    %v3294 = vpack.c.bf16 %v3262, %v3262
    %v3295 = vpack.c.bf16 %v3263, %v3263
    %v3296 = vpack.c.bf16 %v3264, %v3264
    %v3297 = vpack.c.bf16 %v3265, %v3265
    %v3298 = vpack.c.bf16 %v3266, %v3266
    %vm3299 = vmpackc.low %vm3234, %vm3234
    %v3300 = vsel %vm3299, %v3267, %v3202
    %v3301 = vsel %vm3299, %v3268, %v3203
    %v3302 = vsel %vm3299, %v3269, %v3204
    %v3303 = vsel %vm3299, %v3270, %v3205
    %v3304 = vsel %vm3299, %v3271, %v3206
    %v3305 = vsel %vm3299, %v3272, %v3207
    %v3306 = vsel %vm3299, %v3273, %v3208
    %v3307 = vsel %vm3299, %v3274, %v3209
    %v3308 = vsel %vm3299, %v3275, %v3210
    %v3309 = vsel %vm3299, %v3276, %v3211
    %v3310 = vsel %vm3299, %v3277, %v3212
    %v3311 = vsel %vm3299, %v3278, %v3213
    %v3312 = vsel %vm3299, %v3279, %v3214
    %v3313 = vsel %vm3299, %v3280, %v3215
    %v3314 = vsel %vm3299, %v3281, %v3216
    %v3315 = vsel %vm3299, %v3282, %v3217
    %v3316 = vsel %vm3299, %v3283, %v3218
    %v3317 = vsel %vm3299, %v3284, %v3219
    %v3318 = vsel %vm3299, %v3285, %v3220
    %v3319 = vsel %vm3299, %v3286, %v3221
    %v3320 = vsel %vm3299, %v3287, %v3222
    %v3321 = vsel %vm3299, %v3288, %v3223
    %v3322 = vsel %vm3299, %v3289, %v3224
    %v3323 = vsel %vm3299, %v3290, %v3225
    %v3324 = vsel %vm3299, %v3291, %v3226
    %v3325 = vsel %vm3299, %v3292, %v3227
    %v3326 = vsel %vm3299, %v3293, %v3228
    %v3327 = vsel %vm3299, %v3294, %v3229
    %v3328 = vsel %vm3299, %v3295, %v3230
    %v3329 = vsel %vm3299, %v3296, %v3231
    %v3330 = vsel %vm3299, %v3297, %v3232
    %v3331 = vsel %vm3299, %v3298, %v3233
    %3332 = vst [vmem:[#allocation2] sm:$0xf] %v3300
    %3333 = vst [vmem:[#allocation2 + $0x4] sm:$0xf] %v3301
    %3334 = vst [vmem:[#allocation2 + $0x8] sm:$0xf] %v3302
    %3335 = vst [vmem:[#allocation2 + $0xc] sm:$0xf] %v3303
    %3336 = vst [vmem:[#allocation2 + $0x10] sm:$0xf] %v3304
    %3337 = vst [vmem:[#allocation2 + $0x14] sm:$0xf] %v3305
    %3338 = vst [vmem:[#allocation2 + $0x18] sm:$0xf] %v3306
    %3339 = vst [vmem:[#allocation2 + $0x1c] sm:$0xf] %v3307
    %3340 = vst [vmem:[#allocation2 + $0x20] sm:$0xf] %v3308
    %3341 = vst [vmem:[#allocation2 + $0x24] sm:$0xf] %v3309
    %3342 = vst [vmem:[#allocation2 + $0x28] sm:$0xf] %v3310
    %3343 = vst [vmem:[#allocation2 + $0x2c] sm:$0xf] %v3311
    %3344 = vst [vmem:[#allocation2 + $0x30] sm:$0xf] %v3312
    %3345 = vst [vmem:[#allocation2 + $0x34] sm:$0xf] %v3313
    %3346 = vst [vmem:[#allocation2 + $0x38] sm:$0xf] %v3314
    %3347 = vst [vmem:[#allocation2 + $0x3c] sm:$0xf] %v3315
    %3348 = vst [vmem:[#allocation2 + $0x40] sm:$0xf] %v3316
    %3349 = vst [vmem:[#allocation2 + $0x44] sm:$0xf] %v3317
    %3350 = vst [vmem:[#allocation2 + $0x48] sm:$0xf] %v3318
    %3351 = vst [vmem:[#allocation2 + $0x4c] sm:$0xf] %v3319
    %3352 = vst [vmem:[#allocation2 + $0x50] sm:$0xf] %v3320
    %3353 = vst [vmem:[#allocation2 + $0x54] sm:$0xf] %v3321
    %3354 = vst [vmem:[#allocation2 + $0x58] sm:$0xf] %v3322
    %3355 = vst [vmem:[#allocation2 + $0x5c] sm:$0xf] %v3323
    %3356 = vst [vmem:[#allocation2 + $0x60] sm:$0xf] %v3324
    %3357 = vst [vmem:[#allocation2 + $0x64] sm:$0xf] %v3325
    %3358 = vst [vmem:[#allocation2 + $0x68] sm:$0xf] %v3326
    %3359 = vst [vmem:[#allocation2 + $0x6c] sm:$0xf] %v3327
    %3360 = vst [vmem:[#allocation2 + $0x70] sm:$0xf] %v3328
    %3361 = vst [vmem:[#allocation2 + $0x74] sm:$0xf] %v3329
    %3362 = vst [vmem:[#allocation2 + $0x78] sm:$0xf] %v3330
    %3363 = vst [vmem:[#allocation2 + $0x7c] sm:$0xf] %v3331
    // Predicated region
    $region34: #{tpu_custom_call.1} parent=1 // pred_check
      _
    $region35: #{tpu_custom_call.1} parent=1 // pred_check_branch
      %3365 = sbr.rel (0) target = $region37
    $region36: #{tpu_custom_call.1} parent=1 // pred_region
      %3367 = vsyncadd [#allocation3], 0
      %s3368 = sshll.u32 [#allocation2], 4
      %s3369 = int_to_ptr.vmem [resolvable:$true] %s3368
      %s3370 = sshll.u32 %s8, 4
      %s3371 = int_to_ptr.hbm [resolvable:$true] %s3370
      %3376 = dma.vmem_to_hbm [thread:$0]  %s3369, 2048, %s3371, [#allocation3], 64, 64, 4
    $region37: #{tpu_custom_call.1} parent=1 // pred_fallthru
      _
    // Predicated region
    $region38: #{tpu_custom_call.1} parent=1 // pred_check
      _
    $region39: #{tpu_custom_call.1} parent=1 // pred_check_branch
      %3378 = sbr.rel (0) target = $region41
    $region40: #{tpu_custom_call.1} parent=1 // pred_region
      %3380 = dma.done [#allocation3], 2048
    $region41: #{tpu_custom_call.1} parent=1 // pred_fallthru
      _
    %3381 = vsyncpa [#allocation3], 1

</llo_original>
